<compile_context>
chip_gen: v7x
topology: tpu7x:2x2x1
jax: 0.10.0
libtpu: 0.0.40
codegen_flags: <defaults>
</compile_context>

<pallas_src>
import math
import functools

import jax
import jax.numpy as jnp
from jax import lax
from jax.experimental import pallas as pl
from jax.experimental.pallas import tpu as pltpu


_NEG_INF = -1e30  # finite "masked" value: avoids NaN if a row is fully masked


def _row_tile(m, cap=512):
    """Largest row tile <= cap that evenly divides m (keeps (8,128) rules happy)."""
    for t in (cap, 256, 128, 64, 32, 16, 8):
        if t <= m and m % t == 0:
            return t
    return m


# ----------------------------- in-kernel helpers -----------------------------

def _layernorm(x, g, b):
    # PyTorch nn.LayerNorm: eps=1e-5, biased variance
    mean = jnp.mean(x, axis=-1, keepdims=True)
    var = jnp.mean(jnp.square(x - mean), axis=-1, keepdims=True)
    return (x - mean) * lax.rsqrt(var + 1e-5) * g + b


def _erf(x):
    # Abramowitz & Stegun 7.1.26 rational approximation (float32-accurate).
    a1, a2, a3, a4, a5 = (0.254829592, -0.284496736, 1.421413741,
                          -1.453152027, 1.061405429)
    p = 0.3275911
    s = jnp.where(x >= 0.0, 1.0, -1.0)
    z = jnp.abs(x)
    t = pl.reciprocal(1.0 + p * z, approx=True)   # EUP slot, ~free
    poly = ((((a5 * t + a4) * t + a3) * t + a2) * t + a1) * t
    return s * (1.0 - poly * jnp.exp(-z * z))


def _gelu(x):
    return 0.5 * x * (1.0 + _erf(x * 0.7071067811865476))


def _sdpa_heads(q, k, v, bias, n_heads, e_q, e_kv):
    """Per-head attention on lane-packed q (T, E) and k/v columns of kv buffers."""
    dh = e_q // n_heads
    heads = []
    for i in range(n_heads):
        lo = i * dh
        qh = q[:, lo:lo + dh]
        kh = k[:, lo:lo + dh]
        vh = v[:, lo:lo + dh]
        s = lax.dot_general(qh.astype(jnp.bfloat16), kh.astype(jnp.bfloat16),
                            (((1,), (1,)), ((), ())),
                            preferred_element_type=jnp.float32) + bias
        m = jnp.max(s, axis=-1, keepdims=True)
        p = jnp.exp(s - m)
        p = p * pl.reciprocal(jnp.sum(p, axis=-1, keepdims=True), approx=True)
        heads.append(jnp.dot(p.astype(jnp.bfloat16), vh.astype(jnp.bfloat16),
                             preferred_element_type=jnp.float32))
    return jnp.concatenate(heads, axis=-1)


# ----------------------------- Pallas kernels -----------------------------

def _emb_kernel(x_ref, w_ref, b_ref, o_ref):
    o_ref[...] = (jnp.dot(x_ref[...].astype(jnp.bfloat16), w_ref[...],
                          preferred_element_type=jnp.float32) + b_ref[...])


def _self_attn_kernel(x_ref, g_ref, b_ref, wqkv_ref, bqkv_ref, wo_ref, bo_ref,
                      mask_ref, o_ref, *, n_heads):
    x = x_ref[0]                                        # (T, E) f32
    h = _layernorm(x, g_ref[...], b_ref[...])
    # fused QKV projection (scale folded into Wq/bq at prep time)
    qkv = (jnp.dot(h.astype(jnp.bfloat16), wqkv_ref[...],
                   preferred_element_type=jnp.float32) + bqkv_ref[...])
    e = x.shape[-1]
    q, k, v = qkv[:, :e], qkv[:, e:2 * e], qkv[:, 2 * e:]
    attn = _sdpa_heads(q, k, v, mask_ref[...], n_heads, e, e)
    out = (jnp.dot(attn.astype(jnp.bfloat16), wo_ref[...],
                   preferred_element_type=jnp.float32) + bo_ref[...])
    o_ref[0] = x + out                                  # fused residual add


def _cross_attn_kernel(x_ref, mem_ref, g_ref, b_ref, wq_ref, bq_ref,
                       wkv_ref, bkv_ref, wo_ref, bo_ref, kbias_ref, o_ref,
                       *, n_heads):
    x = x_ref[0]                                        # (T, E)
    mem = mem_ref[0]                                    # (S, E)
    h = _layernorm(x, g_ref[...], b_ref[...])
    q = (jnp.dot(h.astype(jnp.bfloat16), wq_ref[...],
                 preferred_element_type=jnp.float32) + bq_ref[...])
    kv = (jnp.dot(mem.astype(jnp.bfloat16), wkv_ref[...],
                  preferred_element_type=jnp.float32) + bkv_ref[...])
    e = x.shape[-1]
    k, v = kv[:, :e], kv[:, e:]
    attn = _sdpa_heads(q, k, v, kbias_ref[0], n_heads, e, e)
    out = (jnp.dot(attn.astype(jnp.bfloat16), wo_ref[...],
                   preferred_element_type=jnp.float32) + bo_ref[...])
    o_ref[0] = x + out                                  # fused residual add


def _ffn_kernel(x_ref, g_ref, b_ref, w1_ref, b1_ref, w2_ref, b2_ref, o_ref):
    x = x_ref[...]                                      # (bm, E)
    h = _layernorm(x, g_ref[...], b_ref[...])
    h1 = (jnp.dot(h.astype(jnp.bfloat16), w1_ref[...],
                  preferred_element_type=jnp.float32) + b1_ref[...])
    h1 = _gelu(h1)
    out = (jnp.dot(h1.astype(jnp.bfloat16), w2_ref[...],
                   preferred_element_type=jnp.float32) + b2_ref[...])
    o_ref[...] = x + out                                # fused residual add


# ----------------------------- pallas_call wrappers -----------------------------

_PARALLEL_1D = pltpu.CompilerParams(dimension_semantics=("parallel",))


def emb_block(x2d, w, b):
    """x2d: (M, emb_dim) f32, w: (emb_dim, E) bf16, b: (1, E) f32 -> (M, E) f32."""
    m, kdim = x2d.shape
    n = w.shape[1]
    bm = _row_tile(m)
    return pl.pallas_call(
        _emb_kernel,
        out_shape=jax.ShapeDtypeStruct((m, n), jnp.float32),
        grid=(m // bm,),
        in_specs=[pl.BlockSpec((bm, kdim), lambda i: (i, 0)),
                  pl.BlockSpec((kdim, n), lambda i: (0, 0)),     # resident weight
                  pl.BlockSpec((1, n), lambda i: (0, 0))],
        out_specs=pl.BlockSpec((bm, n), lambda i: (i, 0)),
        compiler_params=_PARALLEL_1D,
    )(x2d, w, b)


def self_attn_block(x, mask_bias, p, n_heads):
    """Fused LN1 + self-attention + out-proj + residual.  x: (B,T,E)."""
    bsz, t, e = x.shape
    kern = functools.partial(_self_attn_kernel, n_heads=n_heads)
    return pl.pallas_call(
        kern,
        out_shape=jax.ShapeDtypeStruct((bsz, t, e), jnp.float32),
        grid=(bsz,),
        in_specs=[pl.BlockSpec((1, t, e), lambda b: (b, 0, 0)),      # x
                  pl.BlockSpec((1, e), lambda b: (0, 0)),            # ln1 gamma
                  pl.BlockSpec((1, e), lambda b: (0, 0)),            # ln1 beta
                  pl.BlockSpec((e, 3 * e), lambda b: (0, 0)),        # Wqkv (bf16)
                  pl.BlockSpec((1, 3 * e), lambda b: (0, 0)),        # bqkv
                  pl.BlockSpec((e, e), lambda b: (0, 0)),            # Wo (bf16)
                  pl.BlockSpec((1, e), lambda b: (0, 0)),            # bo
                  pl.BlockSpec((t, t), lambda b: (0, 0))],           # (T,T) mask, untiled
        out_specs=pl.BlockSpec((1, t, e), lambda b: (b, 0, 0)),
        compiler_params=_PARALLEL_1D,
    )(x, p["ln1_g"], p["ln1_b"], p["wqkv"], p["bqkv"],
      p["self_wo"], p["self_bo"], mask_bias)


def cross_attn_block(x, memory, key_bias, p, n_heads):
    """Fused LN2 + cross-attention + out-proj + residual.  memory: (B,S,E)."""
    bsz, t, e = x.shape
    s = memory.shape[1]
    kern = functools.partial(_cross_attn_kernel, n_heads=n_heads)
    return pl.pallas_call(
        kern,
        out_shape=jax.ShapeDtypeStruct((bsz, t, e), jnp.float32),
        grid=(bsz,),
        in_specs=[pl.BlockSpec((1, t, e), lambda b: (b, 0, 0)),      # x
                  pl.BlockSpec((1, s, e), lambda b: (b, 0, 0)),      # memory
                  pl.BlockSpec((1, e), lambda b: (0, 0)),            # ln2 gamma
                  pl.BlockSpec((1, e), lambda b: (0, 0)),            # ln2 beta
                  pl.BlockSpec((e, e), lambda b: (0, 0)),            # Wq (bf16, scaled)
                  pl.BlockSpec((1, e), lambda b: (0, 0)),            # bq (scaled)
                  pl.BlockSpec((e, 2 * e), lambda b: (0, 0)),        # Wkv (bf16)
                  pl.BlockSpec((1, 2 * e), lambda b: (0, 0)),        # bkv
                  pl.BlockSpec((e, e), lambda b: (0, 0)),            # Wo (bf16)
                  pl.BlockSpec((1, e), lambda b: (0, 0)),            # bo
                  pl.BlockSpec((1, 1, s), lambda b: (b, 0, 0))],     # key-pad bias
        out_specs=pl.BlockSpec((1, t, e), lambda b: (b, 0, 0)),
        compiler_params=_PARALLEL_1D,
    )(x, memory, p["ln2_g"], p["ln2_b"], p["cross_wq"], p["cross_bq"],
      p["cross_wkv"], p["cross_bkv"], p["cross_wo"], p["cross_bo"], key_bias)


def ffn_block(x, p):
    """Fused LN3 + Linear + GELU + Linear + residual, row-tiled over B*T."""
    bsz, t, e = x.shape
    m = bsz * t
    f = p["w1"].shape[1]
    bm = _row_tile(m)
    x2 = x.reshape(m, e)
    out = pl.pallas_call(
        _ffn_kernel,
        out_shape=jax.ShapeDtypeStruct((m, e), jnp.float32),
        grid=(m // bm,),
        in_specs=[pl.BlockSpec((bm, e), lambda i: (i, 0)),
                  pl.BlockSpec((1, e), lambda i: (0, 0)),
                  pl.BlockSpec((1, e), lambda i: (0, 0)),
                  pl.BlockSpec((e, f), lambda i: (0, 0)),            # resident W1
                  pl.BlockSpec((1, f), lambda i: (0, 0)),
                  pl.BlockSpec((f, e), lambda i: (0, 0)),            # resident W2
                  pl.BlockSpec((1, e), lambda i: (0, 0))],
        out_specs=pl.BlockSpec((bm, e), lambda i: (i, 0)),
        compiler_params=_PARALLEL_1D,
    )(x2, p["ln3_g"], p["ln3_b"], p["w1"], p["b1"], p["w2"], p["b2"])
    return out.reshape(bsz, t, e)


# ------------------------ module composition (glue) ------------------------

def decoder_forward(params, x, memory, e_mask=None, d_mask=None, *, n_heads):
    bsz, t, emb_dim = x.shape
    s = memory.shape[1]
    e = params["emb_w"].shape[1]

    # emb_mapping = Linear + Dropout (Dropout is identity at inference)
    x = emb_block(x.reshape(bsz * t, emb_dim),
                  params["emb_w"], params["emb_b"]).reshape(bsz, t, e)

    # --- masks: small, untiled, finite (-1e30 instead of -inf -> no NaN rows) ---
    if d_mask is None:
        self_bias = jnp.zeros((t, t), jnp.float32)
    elif d_mask.dtype == jnp.bool_:
        self_bias = jnp.where(d_mask, _NEG_INF, 0.0).astype(jnp.float32)
    else:  # float additive tgt_mask (PyTorch convention)
        self_bias = jnp.maximum(d_mask.astype(jnp.float32), _NEG_INF)

    if e_mask is None:
        cross_bias = jnp.zeros((bsz, 1, s), jnp.float32)
    else:  # bool memory_key_padding_mask: True = padded key
        cross_bias = jnp.where(e_mask, _NEG_INF, 0.0).astype(jnp.float32)
        cross_bias = cross_bias.reshape(bsz, 1, s)

    for p in params["layers"]:
        x = self_attn_block(x, self_bias, p, n_heads)
        x = cross_attn_block(x, memory, cross_bias, p, n_heads)
        x = ffn_block(x, p)
    return x


# ------------------------------ parameters ------------------------------

def init_params(key, cfg):
    """PyTorch-layout f32 parameters (weights as [in, out])."""
    emb_dim, hidden = cfg["emb_dim"], cfg["hidden_dim"]
    pff, n_layers = cfg["pff_dim"], cfg["n_layers"]

    def dense(k, fan_in, fan_out):
        kw, kb = jax.random.split(k)
        bound = 1.0 / math.sqrt(fan_in)
        w = jax.random.uniform(kw, (fan_in, fan_out), jnp.float32, -bound, bound)
        b = jax.random.uniform(kb, (fan_out,), jnp.float32, -bound, bound)
        return w, b

    def attn_params(k):
        k1, k2, k3, k4 = jax.random.split(k, 4)
        wq, bq = dense(k1, hidden, hidden)
        wk, bk = dense(k2, hidden, hidden)
        wv, bv = dense(k3, hidden, hidden)
        wo, bo = dense(k4, hidden, hidden)
        return dict(wq=wq, bq=bq, wk=wk, bk=bk, wv=wv, bv=bv, wo=wo, bo=bo)

    k_emb, k_layers = jax.random.split(key)
    emb_w, emb_b = dense(k_emb, emb_dim, hidden)

    layers = []
    for lk in jax.random.split(k_layers, n_layers):
        ks = jax.random.split(lk, 4)
        w1, b1 = dense(ks[2], hidden, pff)
        w2, b2 = dense(ks[3], pff, hidden)
        ones = jnp.ones((hidden,), jnp.float32)
        zeros = jnp.zeros((hidden,), jnp.float32)
        layers.append(dict(
            self_attn=attn_params(ks[0]), cross_attn=attn_params(ks[1]),
            w1=w1, b1=b1, w2=w2, b2=b2,
            ln1_g=ones, ln1_b=zeros, ln2_g=ones, ln2_b=zeros,
            ln3_g=ones, ln3_b=zeros,
        ))
    return dict(emb_w=emb_w, emb_b=emb_b, layers=layers)


def prepare_params(raw, n_heads):
    """Fuse QKV / KV weights, fold 1/sqrt(Dh) into Q, cast weights to bf16."""
    hidden = raw["layers"][0]["ln1_g"].shape[0]
    scale = 1.0 / math.sqrt(hidden // n_heads)

    def w16(w):
        return w.astype(jnp.bfloat16)

    prep = dict(emb_w=w16(raw["emb_w"]), emb_b=raw["emb_b"].reshape(1, -1))
    layers = []
    for p in raw["layers"]:
        sa, ca = p["self_attn"], p["cross_attn"]
        wqkv = jnp.concatenate([sa["wq"] * scale, sa["wk"], sa["wv"]], axis=1)
        bqkv = jnp.concatenate([sa["bq"] * scale, sa["bk"], sa["bv"]]).reshape(1, -1)
        wkv = jnp.concatenate([ca["wk"], ca["wv"]], axis=1)
        bkv = jnp.concatenate([ca["bk"], ca["bv"]]).reshape(1, -1)
        layers.append(dict(
            ln1_g=p["ln1_g"].reshape(1, -1), ln1_b=p["ln1_b"].reshape(1, -1),
            wqkv=w16(wqkv), bqkv=bqkv,
            self_wo=w16(sa["wo"]), self_bo=sa["bo"].reshape(1, -1),
            ln2_g=p["ln2_g"].reshape(1, -1), ln2_b=p["ln2_b"].reshape(1, -1),
            cross_wq=w16(ca["wq"] * scale),
            cross_bq=(ca["bq"] * scale).reshape(1, -1),
            cross_wkv=w16(wkv), cross_bkv=bkv,
            cross_wo=w16(ca["wo"]), cross_bo=ca["bo"].reshape(1, -1),
            ln3_g=p["ln3_g"].reshape(1, -1), ln3_b=p["ln3_b"].reshape(1, -1),
            w1=w16(p["w1"]), b1=p["b1"].reshape(1, -1),
            w2=w16(p["w2"]), b2=p["b2"].reshape(1, -1),
        ))
    prep["layers"] = layers
    return prep


# --------------------------------- main ---------------------------------

if __name__ == "__main__":
    cfg = dict(emb_dim=16, hidden_dim=32, n_heads=4, pff_dim=64,
               n_layers=2, dropout_ratio=0.1)
    B, T, S = 2, 8, 12  # batch, target seq len, memory (source) seq len

    key = jax.random.PRNGKey(0)
    kx, km, kp = jax.random.split(key, 3)
    x = jax.random.normal(kx, (B, T, cfg["emb_dim"]), jnp.float32)
    memory = jax.random.normal(km, (B, S, cfg["hidden_dim"]), jnp.float32)
    params = prepare_params(init_params(kp, cfg), cfg["n_heads"])

    # causal tgt_mask (float additive, like generate_square_subsequent_mask)
    d_mask = jnp.where(jnp.triu(jnp.ones((T, T), bool), k=1),
                       -jnp.inf, 0.0).astype(jnp.float32)
    # memory_key_padding_mask: True = padded position (last 2 keys of batch 1 padded)
    e_mask = jnp.zeros((B, S), bool).at[1, S - 2:].set(True)

    fwd = jax.jit(functools.partial(decoder_forward, n_heads=cfg["n_heads"]))
    out = fwd(params, x, memory, e_mask, d_mask)
    out = jax.block_until_ready(out)

    assert out.shape == (B, T, cfg["hidden_dim"])
    assert bool(jnp.all(jnp.isfinite(out)))
    print("KERNEL_OK")
</pallas_src>

<mosaic_0001>
module attributes {stable_mosaic.version = 11 : i64} {
  func.func @_emb_kernel(%arg0: i32, %arg1: memref<16x16xf32, #tpu.memory_space<vmem>>, %arg2: memref<16x32xbf16, #tpu.memory_space<vmem>>, %arg3: memref<1x32xf32, #tpu.memory_space<vmem>>, %arg4: memref<16x32xf32, #tpu.memory_space<vmem>>) attributes {dimension_semantics = [#tpu.dimension_semantics<parallel>], iteration_bounds = array<i64: 1>, scalar_prefetch = 0 : i64, scratch_operands = 0 : i64, tpu.core_type = #tpu.core_type<tc>, window_params = [{transform_indices = @transform_0, window_bounds = array<i64: 16, 16>}, {pipeline_mode = #tpu.pipeline_mode<synchronous>, transform_indices = @transform_1, window_bounds = array<i64: 16, 32>}, {pipeline_mode = #tpu.pipeline_mode<synchronous>, transform_indices = @transform_2, window_bounds = array<i64: 1, 32>}, {transform_indices = @transform_3, window_bounds = array<i64: 16, 32>}]} {
    %c0 = arith.constant 0 : index
    %c0_0 = arith.constant 0 : index
    %0 = vector.load %arg1[%c0, %c0_0] : memref<16x16xf32, #tpu.memory_space<vmem>>, vector<16x16xf32>
    %1 = arith.truncf %0 : vector<16x16xf32> to vector<16x16xbf16>
    %c0_1 = arith.constant 0 : index
    %c0_2 = arith.constant 0 : index
    %2 = vector.load %arg2[%c0_1, %c0_2] : memref<16x32xbf16, #tpu.memory_space<vmem>>, vector<16x32xbf16>
    %cst = arith.constant dense<0.000000e+00> : vector<16x32xf32>
    %3 = tpu.matmul %1, %2, %cst {dimension_numbers = #tpu.dot_dimension_numbers<[1], [0], [0], [1], [0, 0, 1, 1], [], []>} : vector<16x16xbf16>, vector<16x32xbf16>, vector<16x32xf32> -> vector<16x32xf32>
    %c0_3 = arith.constant 0 : index
    %c0_4 = arith.constant 0 : index
    %4 = vector.load %arg3[%c0_3, %c0_4] : memref<1x32xf32, #tpu.memory_space<vmem>>, vector<1x32xf32>
    %5 = vector.broadcast %4 : vector<1x32xf32> to vector<16x32xf32>
    %6 = arith.addf %3, %5 : vector<16x32xf32>
    %c0_5 = arith.constant 0 : index
    %c0_6 = arith.constant 0 : index
    %7 = vector.load %arg4[%c0_5, %c0_6] : memref<16x32xf32, #tpu.memory_space<vmem>>, vector<16x32xf32>
    tpu.vector_store %arg4[%c0_5, %c0_6], %6 {strides = array<i32>} : memref<16x32xf32, #tpu.memory_space<vmem>>, vector<16x32xf32>,
    return
  }
  func.func @transform_0(%arg0: i32) -> (i32, i32) {
    %c0_i32 = arith.constant 0 : i32
    %c0_i32_0 = arith.constant 0 : i32
    return %arg0, %c0_i32 : i32, i32
  }
  func.func @transform_1(%arg0: i32) -> (i32, i32) {
    %c0_i32 = arith.constant 0 : i32
    %c0_i32_0 = arith.constant 0 : i32
    %c0_i32_1 = arith.constant 0 : i32
    return %c0_i32, %c0_i32_0 : i32, i32
  }
  func.func @transform_2(%arg0: i32) -> (i32, i32) {
    %c0_i32 = arith.constant 0 : i32
    %c0_i32_0 = arith.constant 0 : i32
    %c0_i32_1 = arith.constant 0 : i32
    return %c0_i32, %c0_i32_0 : i32, i32
  }
  func.func @transform_3(%arg0: i32) -> (i32, i32) {
    %c0_i32 = arith.constant 0 : i32
    %c0_i32_0 = arith.constant 0 : i32
    return %arg0, %c0_i32 : i32, i32
  }
}

module attributes {stable_mosaic.version = 11 : i64} {
  func.func @_cross_attn_kernel(%arg0: i32, %arg1: memref<1x8x32xf32, #tpu.memory_space<vmem>>, %arg2: memref<1x12x32xf32, #tpu.memory_space<vmem>>, %arg3: memref<1x32xf32, #tpu.memory_space<vmem>>, %arg4: memref<1x32xf32, #tpu.memory_space<vmem>>, %arg5: memref<32x32xbf16, #tpu.memory_space<vmem>>, %arg6: memref<1x32xf32, #tpu.memory_space<vmem>>, %arg7: memref<32x64xbf16, #tpu.memory_space<vmem>>, %arg8: memref<1x64xf32, #tpu.memory_space<vmem>>, %arg9: memref<32x32xbf16, #tpu.memory_space<vmem>>, %arg10: memref<1x32xf32, #tpu.memory_space<vmem>>, %arg11: memref<1x1x12xf32, #tpu.memory_space<vmem>>, %arg12: memref<1x8x32xf32, #tpu.memory_space<vmem>>) attributes {dimension_semantics = [#tpu.dimension_semantics<parallel>], iteration_bounds = array<i64: 2>, scalar_prefetch = 0 : i64, scratch_operands = 0 : i64, tpu.core_type = #tpu.core_type<tc>, window_params = [{transform_indices = @transform_0, window_bounds = array<i64: 1, 8, 32>}, {transform_indices = @transform_1, window_bounds = array<i64: 1, 12, 32>}, {pipeline_mode = #tpu.pipeline_mode<synchronous>, transform_indices = @transform_2, window_bounds = array<i64: 1, 32>}, {pipeline_mode = #tpu.pipeline_mode<synchronous>, transform_indices = @transform_3, window_bounds = array<i64: 1, 32>}, {pipeline_mode = #tpu.pipeline_mode<synchronous>, transform_indices = @transform_4, window_bounds = array<i64: 32, 32>}, {pipeline_mode = #tpu.pipeline_mode<synchronous>, transform_indices = @transform_5, window_bounds = array<i64: 1, 32>}, {pipeline_mode = #tpu.pipeline_mode<synchronous>, transform_indices = @transform_6, window_bounds = array<i64: 32, 64>}, {pipeline_mode = #tpu.pipeline_mode<synchronous>, transform_indices = @transform_7, window_bounds = array<i64: 1, 64>}, {pipeline_mode = #tpu.pipeline_mode<synchronous>, transform_indices = @transform_8, window_bounds = array<i64: 32, 32>}, {pipeline_mode = #tpu.pipeline_mode<synchronous>, transform_indices = @transform_9, window_bounds = array<i64: 1, 32>}, {transform_indices = @transform_10, window_bounds = array<i64: 1, 1, 12>}, {transform_indices = @transform_11, window_bounds = array<i64: 1, 8, 32>}]} {
    %c0 = arith.constant 0 : index
    %c0_0 = arith.constant 0 : index
    %c0_1 = arith.constant 0 : index
    %0 = vector.load %arg1[%c0, %c0_0, %c0_1] : memref<1x8x32xf32, #tpu.memory_space<vmem>>, vector<1x8x32xf32>
    %1 = vector.shape_cast %0 : vector<1x8x32xf32> to vector<8x32xf32>
    %c0_2 = arith.constant 0 : index
    %c0_3 = arith.constant 0 : index
    %c0_4 = arith.constant 0 : index
    %2 = vector.load %arg2[%c0_2, %c0_3, %c0_4] : memref<1x12x32xf32, #tpu.memory_space<vmem>>, vector<1x12x32xf32>
    %3 = vector.shape_cast %2 : vector<1x12x32xf32> to vector<12x32xf32>
    %c0_5 = arith.constant 0 : index
    %c0_6 = arith.constant 0 : index
    %4 = vector.load %arg3[%c0_5, %c0_6] : memref<1x32xf32, #tpu.memory_space<vmem>>, vector<1x32xf32>
    %c0_7 = arith.constant 0 : index
    %c0_8 = arith.constant 0 : index
    %5 = vector.load %arg4[%c0_7, %c0_8] : memref<1x32xf32, #tpu.memory_space<vmem>>, vector<1x32xf32>
    %cst = arith.constant dense<0.000000e+00> : vector<8xf32>
    %6 = vector.multi_reduction <add>, %1, %cst [1] : vector<8x32xf32> to vector<8xf32>
    %7 = vector.shape_cast %6 : vector<8xf32> to vector<8x1xf32>
    %cst_9 = arith.constant 3.200000e+01 : f32
    %8 = vector.broadcast %cst_9 : f32 to vector<8x1xf32>
    %9 = arith.divf %7, %8 : vector<8x1xf32>
    %10 = vector.broadcast %9 : vector<8x1xf32> to vector<8x32xf32>
    %11 = arith.subf %1, %10 : vector<8x32xf32>
    %12 = arith.mulf %11, %11 : vector<8x32xf32>
    %cst_10 = arith.constant dense<0.000000e+00> : vector<8xf32>
    %13 = vector.multi_reduction <add>, %12, %cst_10 [1] : vector<8x32xf32> to vector<8xf32>
    %14 = vector.shape_cast %13 : vector<8xf32> to vector<8x1xf32>
    %cst_11 = arith.constant 3.200000e+01 : f32
    %15 = vector.broadcast %cst_11 : f32 to vector<8x1xf32>
    %16 = arith.divf %14, %15 : vector<8x1xf32>
    %17 = vector.broadcast %9 : vector<8x1xf32> to vector<8x32xf32>
    %18 = arith.subf %1, %17 : vector<8x32xf32>
    %cst_12 = arith.constant 9.99999974E-6 : f32
    %19 = vector.broadcast %cst_12 : f32 to vector<8x1xf32>
    %20 = arith.addf %16, %19 : vector<8x1xf32>
    %21 = math.rsqrt %20 : vector<8x1xf32>
    %22 = vector.broadcast %21 : vector<8x1xf32> to vector<8x32xf32>
    %23 = arith.mulf %18, %22 : vector<8x32xf32>
    %24 = vector.broadcast %4 : vector<1x32xf32> to vector<8x32xf32>
    %25 = arith.mulf %23, %24 : vector<8x32xf32>
    %26 = vector.broadcast %5 : vector<1x32xf32> to vector<8x32xf32>
    %27 = arith.addf %25, %26 : vector<8x32xf32>
    %28 = arith.truncf %27 : vector<8x32xf32> to vector<8x32xbf16>
    %c0_13 = arith.constant 0 : index
    %c0_14 = arith.constant 0 : index
    %29 = vector.load %arg5[%c0_13, %c0_14] : memref<32x32xbf16, #tpu.memory_space<vmem>>, vector<32x32xbf16>
    %cst_15 = arith.constant dense<0.000000e+00> : vector<8x32xf32>
    %30 = tpu.matmul %28, %29, %cst_15 {dimension_numbers = #tpu.dot_dimension_numbers<[1], [0], [0], [1], [0, 0, 1, 1], [], []>} : vector<8x32xbf16>, vector<32x32xbf16>, vector<8x32xf32> -> vector<8x32xf32>
    %c0_16 = arith.constant 0 : index
    %c0_17 = arith.constant 0 : index
    %31 = vector.load %arg6[%c0_16, %c0_17] : memref<1x32xf32, #tpu.memory_space<vmem>>, vector<1x32xf32>
    %32 = vector.broadcast %31 : vector<1x32xf32> to vector<8x32xf32>
    %33 = arith.addf %30, %32 : vector<8x32xf32>
    %34 = arith.truncf %3 : vector<12x32xf32> to vector<12x32xbf16>
    %c0_18 = arith.constant 0 : index
    %c0_19 = arith.constant 0 : index
    %35 = vector.load %arg7[%c0_18, %c0_19] : memref<32x64xbf16, #tpu.memory_space<vmem>>, vector<32x64xbf16>
    %cst_20 = arith.constant dense<0.000000e+00> : vector<12x64xf32>
    %36 = tpu.matmul %34, %35, %cst_20 {dimension_numbers = #tpu.dot_dimension_numbers<[1], [0], [0], [1], [0, 0, 1, 1], [], []>} : vector<12x32xbf16>, vector<32x64xbf16>, vector<12x64xf32> -> vector<12x64xf32>
    %c0_21 = arith.constant 0 : index
    %c0_22 = arith.constant 0 : index
    %37 = vector.load %arg8[%c0_21, %c0_22] : memref<1x64xf32, #tpu.memory_space<vmem>>, vector<1x64xf32>
    %38 = vector.broadcast %37 : vector<1x64xf32> to vector<12x64xf32>
    %39 = arith.addf %36, %38 : vector<12x64xf32>
    %40 = vector.extract_strided_slice %39 {offsets = [0, 0], sizes = [12, 32], strides = [1, 1]} : vector<12x64xf32> to vector<12x32xf32>
    %41 = vector.extract_strided_slice %39 {offsets = [0, 32], sizes = [12, 32], strides = [1, 1]} : vector<12x64xf32> to vector<12x32xf32>
    %c0_23 = arith.constant 0 : index
    %c0_24 = arith.constant 0 : index
    %c0_25 = arith.constant 0 : index
    %42 = vector.load %arg11[%c0_23, %c0_24, %c0_25] : memref<1x1x12xf32, #tpu.memory_space<vmem>>, vector<1x1x12xf32>
    %43 = vector.shape_cast %42 : vector<1x1x12xf32> to vector<1x12xf32>
    %44 = vector.extract_strided_slice %33 {offsets = [0, 0], sizes = [8, 8], strides = [1, 1]} : vector<8x32xf32> to vector<8x8xf32>
    %45 = vector.extract_strided_slice %40 {offsets = [0, 0], sizes = [12, 8], strides = [1, 1]} : vector<12x32xf32> to vector<12x8xf32>
    %46 = vector.extract_strided_slice %41 {offsets = [0, 0], sizes = [12, 8], strides = [1, 1]} : vector<12x32xf32> to vector<12x8xf32>
    %47 = arith.truncf %44 : vector<8x8xf32> to vector<8x8xbf16>
    %48 = arith.truncf %45 : vector<12x8xf32> to vector<12x8xbf16>
    %cst_26 = arith.constant dense<0.000000e+00> : vector<8x12xf32>
    %49 = tpu.matmul %47, %48, %cst_26 {dimension_numbers = #tpu.dot_dimension_numbers<[1], [1], [0], [0], [0, 0, 1, 0], [], []>} : vector<8x8xbf16>, vector<12x8xbf16>, vector<8x12xf32> -> vector<8x12xf32>
    %50 = vector.broadcast %43 : vector<1x12xf32> to vector<8x12xf32>
    %51 = arith.addf %49, %50 : vector<8x12xf32>
    %cst_27 = arith.constant dense<0xFF800000> : vector<8xf32>
    %52 = vector.multi_reduction <maximumf>, %51, %cst_27 [1] : vector<8x12xf32> to vector<8xf32>
    %53 = vector.shape_cast %52 : vector<8xf32> to vector<8x1xf32>
    %54 = vector.broadcast %53 : vector<8x1xf32> to vector<8x12xf32>
    %55 = arith.subf %51, %54 : vector<8x12xf32>
    %56 = math.exp %55 : vector<8x12xf32>
    %cst_28 = arith.constant dense<0.000000e+00> : vector<8xf32>
    %57 = vector.multi_reduction <add>, %56, %cst_28 [1] : vector<8x12xf32> to vector<8xf32>
    %58 = vector.shape_cast %57 : vector<8xf32> to vector<8x1xf32>
    %59 = tpu.reciprocal %58 {approx = true} : vector<8x1xf32> -> vector<8x1xf32>
    %60 = vector.broadcast %59 : vector<8x1xf32> to vector<8x12xf32>
    %61 = arith.mulf %56, %60 : vector<8x12xf32>
    %62 = arith.truncf %61 : vector<8x12xf32> to vector<8x12xbf16>
    %63 = arith.truncf %46 : vector<12x8xf32> to vector<12x8xbf16>
    %cst_29 = arith.constant dense<0.000000e+00> : vector<8x8xf32>
    %64 = tpu.matmul %62, %63, %cst_29 {dimension_numbers = #tpu.dot_dimension_numbers<[1], [0], [0], [1], [0, 0, 1, 1], [], []>} : vector<8x12xbf16>, vector<12x8xbf16>, vector<8x8xf32> -> vector<8x8xf32>
    %65 = vector.extract_strided_slice %33 {offsets = [0, 8], sizes = [8, 8], strides = [1, 1]} : vector<8x32xf32> to vector<8x8xf32>
    %66 = vector.extract_strided_slice %40 {offsets = [0, 8], sizes = [12, 8], strides = [1, 1]} : vector<12x32xf32> to vector<12x8xf32>
    %67 = vector.extract_strided_slice %41 {offsets = [0, 8], sizes = [12, 8], strides = [1, 1]} : vector<12x32xf32> to vector<12x8xf32>
    %68 = arith.truncf %65 : vector<8x8xf32> to vector<8x8xbf16>
    %69 = arith.truncf %66 : vector<12x8xf32> to vector<12x8xbf16>
    %cst_30 = arith.constant dense<0.000000e+00> : vector<8x12xf32>
    %70 = tpu.matmul %68, %69, %cst_30 {dimension_numbers = #tpu.dot_dimension_numbers<[1], [1], [0], [0], [0, 0, 1, 0], [], []>} : vector<8x8xbf16>, vector<12x8xbf16>, vector<8x12xf32> -> vector<8x12xf32>
    %71 = vector.broadcast %43 : vector<1x12xf32> to vector<8x12xf32>
    %72 = arith.addf %70, %71 : vector<8x12xf32>
    %cst_31 = arith.constant dense<0xFF800000> : vector<8xf32>
    %73 = vector.multi_reduction <maximumf>, %72, %cst_31 [1] : vector<8x12xf32> to vector<8xf32>
    %74 = vector.shape_cast %73 : vector<8xf32> to vector<8x1xf32>
    %75 = vector.broadcast %74 : vector<8x1xf32> to vector<8x12xf32>
    %76 = arith.subf %72, %75 : vector<8x12xf32>
    %77 = math.exp %76 : vector<8x12xf32>
    %cst_32 = arith.constant dense<0.000000e+00> : vector<8xf32>
    %78 = vector.multi_reduction <add>, %77, %cst_32 [1] : vector<8x12xf32> to vector<8xf32>
    %79 = vector.shape_cast %78 : vector<8xf32> to vector<8x1xf32>
    %80 = tpu.reciprocal %79 {approx = true} : vector<8x1xf32> -> vector<8x1xf32>
    %81 = vector.broadcast %80 : vector<8x1xf32> to vector<8x12xf32>
    %82 = arith.mulf %77, %81 : vector<8x12xf32>
    %83 = arith.truncf %82 : vector<8x12xf32> to vector<8x12xbf16>
    %84 = arith.truncf %67 : vector<12x8xf32> to vector<12x8xbf16>
    %cst_33 = arith.constant dense<0.000000e+00> : vector<8x8xf32>
    %85 = tpu.matmul %83, %84, %cst_33 {dimension_numbers = #tpu.dot_dimension_numbers<[1], [0], [0], [1], [0, 0, 1, 1], [], []>} : vector<8x12xbf16>, vector<12x8xbf16>, vector<8x8xf32> -> vector<8x8xf32>
    %86 = vector.extract_strided_slice %33 {offsets = [0, 16], sizes = [8, 8], strides = [1, 1]} : vector<8x32xf32> to vector<8x8xf32>
    %87 = vector.extract_strided_slice %40 {offsets = [0, 16], sizes = [12, 8], strides = [1, 1]} : vector<12x32xf32> to vector<12x8xf32>
    %88 = vector.extract_strided_slice %41 {offsets = [0, 16], sizes = [12, 8], strides = [1, 1]} : vector<12x32xf32> to vector<12x8xf32>
    %89 = arith.truncf %86 : vector<8x8xf32> to vector<8x8xbf16>
    %90 = arith.truncf %87 : vector<12x8xf32> to vector<12x8xbf16>
    %cst_34 = arith.constant dense<0.000000e+00> : vector<8x12xf32>
    %91 = tpu.matmul %89, %90, %cst_34 {dimension_numbers = #tpu.dot_dimension_numbers<[1], [1], [0], [0], [0, 0, 1, 0], [], []>} : vector<8x8xbf16>, vector<12x8xbf16>, vector<8x12xf32> -> vector<8x12xf32>
    %92 = vector.broadcast %43 : vector<1x12xf32> to vector<8x12xf32>
    %93 = arith.addf %91, %92 : vector<8x12xf32>
    %cst_35 = arith.constant dense<0xFF800000> : vector<8xf32>
    %94 = vector.multi_reduction <maximumf>, %93, %cst_35 [1] : vector<8x12xf32> to vector<8xf32>
    %95 = vector.shape_cast %94 : vector<8xf32> to vector<8x1xf32>
    %96 = vector.broadcast %95 : vector<8x1xf32> to vector<8x12xf32>
    %97 = arith.subf %93, %96 : vector<8x12xf32>
    %98 = math.exp %97 : vector<8x12xf32>
    %cst_36 = arith.constant dense<0.000000e+00> : vector<8xf32>
    %99 = vector.multi_reduction <add>, %98, %cst_36 [1] : vector<8x12xf32> to vector<8xf32>
    %100 = vector.shape_cast %99 : vector<8xf32> to vector<8x1xf32>
    %101 = tpu.reciprocal %100 {approx = true} : vector<8x1xf32> -> vector<8x1xf32>
    %102 = vector.broadcast %101 : vector<8x1xf32> to vector<8x12xf32>
    %103 = arith.mulf %98, %102 : vector<8x12xf32>
    %104 = arith.truncf %103 : vector<8x12xf32> to vector<8x12xbf16>
    %105 = arith.truncf %88 : vector<12x8xf32> to vector<12x8xbf16>
    %cst_37 = arith.constant dense<0.000000e+00> : vector<8x8xf32>
    %106 = tpu.matmul %104, %105, %cst_37 {dimension_numbers = #tpu.dot_dimension_numbers<[1], [0], [0], [1], [0, 0, 1, 1], [], []>} : vector<8x12xbf16>, vector<12x8xbf16>, vector<8x8xf32> -> vector<8x8xf32>
    %107 = vector.extract_strided_slice %33 {offsets = [0, 24], sizes = [8, 8], strides = [1, 1]} : vector<8x32xf32> to vector<8x8xf32>
    %108 = vector.extract_strided_slice %40 {offsets = [0, 24], sizes = [12, 8], strides = [1, 1]} : vector<12x32xf32> to vector<12x8xf32>
    %109 = vector.extract_strided_slice %41 {offsets = [0, 24], sizes = [12, 8], strides = [1, 1]} : vector<12x32xf32> to vector<12x8xf32>
    %110 = arith.truncf %107 : vector<8x8xf32> to vector<8x8xbf16>
    %111 = arith.truncf %108 : vector<12x8xf32> to vector<12x8xbf16>
    %cst_38 = arith.constant dense<0.000000e+00> : vector<8x12xf32>
    %112 = tpu.matmul %110, %111, %cst_38 {dimension_numbers = #tpu.dot_dimension_numbers<[1], [1], [0], [0], [0, 0, 1, 0], [], []>} : vector<8x8xbf16>, vector<12x8xbf16>, vector<8x12xf32> -> vector<8x12xf32>
    %113 = vector.broadcast %43 : vector<1x12xf32> to vector<8x12xf32>
    %114 = arith.addf %112, %113 : vector<8x12xf32>
    %cst_39 = arith.constant dense<0xFF800000> : vector<8xf32>
    %115 = vector.multi_reduction <maximumf>, %114, %cst_39 [1] : vector<8x12xf32> to vector<8xf32>
    %116 = vector.shape_cast %115 : vector<8xf32> to vector<8x1xf32>
    %117 = vector.broadcast %116 : vector<8x1xf32> to vector<8x12xf32>
    %118 = arith.subf %114, %117 : vector<8x12xf32>
    %119 = math.exp %118 : vector<8x12xf32>
    %cst_40 = arith.constant dense<0.000000e+00> : vector<8xf32>
    %120 = vector.multi_reduction <add>, %119, %cst_40 [1] : vector<8x12xf32> to vector<8xf32>
    %121 = vector.shape_cast %120 : vector<8xf32> to vector<8x1xf32>
    %122 = tpu.reciprocal %121 {approx = true} : vector<8x1xf32> -> vector<8x1xf32>
    %123 = vector.broadcast %122 : vector<8x1xf32> to vector<8x12xf32>
    %124 = arith.mulf %119, %123 : vector<8x12xf32>
    %125 = arith.truncf %124 : vector<8x12xf32> to vector<8x12xbf16>
    %126 = arith.truncf %109 : vector<12x8xf32> to vector<12x8xbf16>
    %cst_41 = arith.constant dense<0.000000e+00> : vector<8x8xf32>
    %127 = tpu.matmul %125, %126, %cst_41 {dimension_numbers = #tpu.dot_dimension_numbers<[1], [0], [0], [1], [0, 0, 1, 1], [], []>} : vector<8x12xbf16>, vector<12x8xbf16>, vector<8x8xf32> -> vector<8x8xf32>
    %128 = tpu.concatenate %64, %85, %106, %127 in 1 : vector<8x8xf32>, vector<8x8xf32>, vector<8x8xf32>, vector<8x8xf32> -> vector<8x32xf32>
    %129 = arith.truncf %128 : vector<8x32xf32> to vector<8x32xbf16>
    %c0_42 = arith.constant 0 : index
    %c0_43 = arith.constant 0 : index
    %130 = vector.load %arg9[%c0_42, %c0_43] : memref<32x32xbf16, #tpu.memory_space<vmem>>, vector<32x32xbf16>
    %cst_44 = arith.constant dense<0.000000e+00> : vector<8x32xf32>
    %131 = tpu.matmul %129, %130, %cst_44 {dimension_numbers = #tpu.dot_dimension_numbers<[1], [0], [0], [1], [0, 0, 1, 1], [], []>} : vector<8x32xbf16>, vector<32x32xbf16>, vector<8x32xf32> -> vector<8x32xf32>
    %c0_45 = arith.constant 0 : index
    %c0_46 = arith.constant 0 : index
    %132 = vector.load %arg10[%c0_45, %c0_46] : memref<1x32xf32, #tpu.memory_space<vmem>>, vector<1x32xf32>
    %133 = vector.broadcast %132 : vector<1x32xf32> to vector<8x32xf32>
    %134 = arith.addf %131, %133 : vector<8x32xf32>
    %135 = arith.addf %1, %134 : vector<8x32xf32>
    %c0_47 = arith.constant 0 : index
    %c0_48 = arith.constant 0 : index
    %c0_49 = arith.constant 0 : index
    %136 = vector.load %arg12[%c0_47, %c0_48, %c0_49] : memref<1x8x32xf32, #tpu.memory_space<vmem>>, vector<1x8x32xf32>
    %137 = vector.shape_cast %136 : vector<1x8x32xf32> to vector<8x32xf32>
    %138 = vector.shape_cast %135 : vector<8x32xf32> to vector<1x8x32xf32>
    tpu.vector_store %arg12[%c0_47, %c0_48, %c0_49], %138 {strides = array<i32>} : memref<1x8x32xf32, #tpu.memory_space<vmem>>, vector<1x8x32xf32>,
    return
  }
  func.func @transform_0(%arg0: i32) -> (i32, i32, i32) {
    %c0_i32 = arith.constant 0 : i32
    %c0_i32_0 = arith.constant 0 : i32
    %c0_i32_1 = arith.constant 0 : i32
    return %arg0, %c0_i32, %c0_i32_0 : i32, i32, i32
  }
  func.func @transform_1(%arg0: i32) -> (i32, i32, i32) {
    %c0_i32 = arith.constant 0 : i32
    %c0_i32_0 = arith.constant 0 : i32
    %c0_i32_1 = arith.constant 0 : i32
    return %arg0, %c0_i32, %c0_i32_0 : i32, i32, i32
  }
  func.func @transform_2(%arg0: i32) -> (i32, i32) {
    %c0_i32 = arith.constant 0 : i32
    %c0_i32_0 = arith.constant 0 : i32
    %c0_i32_1 = arith.constant 0 : i32
    return %c0_i32, %c0_i32_0 : i32, i32
  }
  func.func @transform_3(%arg0: i32) -> (i32, i32) {
    %c0_i32 = arith.constant 0 : i32
    %c0_i32_0 = arith.constant 0 : i32
    %c0_i32_1 = arith.constant 0 : i32
    return %c0_i32, %c0_i32_0 : i32, i32
  }
  func.func @transform_4(%arg0: i32) -> (i32, i32) {
    %c0_i32 = arith.constant 0 : i32
    %c0_i32_0 = arith.constant 0 : i32
    %c0_i32_1 = arith.constant 0 : i32
    return %c0_i32, %c0_i32_0 : i32, i32
  }
  func.func @transform_5(%arg0: i32) -> (i32, i32) {
    %c0_i32 = arith.constant 0 : i32
    %c0_i32_0 = arith.constant 0 : i32
    %c0_i32_1 = arith.constant 0 : i32
    return %c0_i32, %c0_i32_0 : i32, i32
  }
  func.func @transform_6(%arg0: i32) -> (i32, i32) {
    %c0_i32 = arith.constant 0 : i32
    %c0_i32_0 = arith.constant 0 : i32
    %c0_i32_1 = arith.constant 0 : i32
    return %c0_i32, %c0_i32_0 : i32, i32
  }
  func.func @transform_7(%arg0: i32) -> (i32, i32) {
    %c0_i32 = arith.constant 0 : i32
    %c0_i32_0 = arith.constant 0 : i32
    %c0_i32_1 = arith.constant 0 : i32
    return %c0_i32, %c0_i32_0 : i32, i32
  }
  func.func @transform_8(%arg0: i32) -> (i32, i32) {
    %c0_i32 = arith.constant 0 : i32
    %c0_i32_0 = arith.constant 0 : i32
    %c0_i32_1 = arith.constant 0 : i32
    return %c0_i32, %c0_i32_0 : i32, i32
  }
  func.func @transform_9(%arg0: i32) -> (i32, i32) {
    %c0_i32 = arith.constant 0 : i32
    %c0_i32_0 = arith.constant 0 : i32
    %c0_i32_1 = arith.constant 0 : i32
    return %c0_i32, %c0_i32_0 : i32, i32
  }
  func.func @transform_10(%arg0: i32) -> (i32, i32, i32) {
    %c0_i32 = arith.constant 0 : i32
    %c0_i32_0 = arith.constant 0 : i32
    %c0_i32_1 = arith.constant 0 : i32
    return %arg0, %c0_i32, %c0_i32_0 : i32, i32, i32
  }
  func.func @transform_11(%arg0: i32) -> (i32, i32, i32) {
    %c0_i32 = arith.constant 0 : i32
    %c0_i32_0 = arith.constant 0 : i32
    %c0_i32_1 = arith.constant 0 : i32
    return %arg0, %c0_i32, %c0_i32_0 : i32, i32, i32
  }
}

module attributes {stable_mosaic.version = 11 : i64} {
  func.func @_self_attn_kernel(%arg0: i32, %arg1: memref<1x8x32xf32, #tpu.memory_space<vmem>>, %arg2: memref<1x32xf32, #tpu.memory_space<vmem>>, %arg3: memref<1x32xf32, #tpu.memory_space<vmem>>, %arg4: memref<32x96xbf16, #tpu.memory_space<vmem>>, %arg5: memref<1x96xf32, #tpu.memory_space<vmem>>, %arg6: memref<32x32xbf16, #tpu.memory_space<vmem>>, %arg7: memref<1x32xf32, #tpu.memory_space<vmem>>, %arg8: memref<8x8xf32, #tpu.memory_space<vmem>>, %arg9: memref<1x8x32xf32, #tpu.memory_space<vmem>>) attributes {dimension_semantics = [#tpu.dimension_semantics<parallel>], iteration_bounds = array<i64: 2>, scalar_prefetch = 0 : i64, scratch_operands = 0 : i64, tpu.core_type = #tpu.core_type<tc>, window_params = [{transform_indices = @transform_0, window_bounds = array<i64: 1, 8, 32>}, {pipeline_mode = #tpu.pipeline_mode<synchronous>, transform_indices = @transform_1, window_bounds = array<i64: 1, 32>}, {pipeline_mode = #tpu.pipeline_mode<synchronous>, transform_indices = @transform_2, window_bounds = array<i64: 1, 32>}, {pipeline_mode = #tpu.pipeline_mode<synchronous>, transform_indices = @transform_3, window_bounds = array<i64: 32, 96>}, {pipeline_mode = #tpu.pipeline_mode<synchronous>, transform_indices = @transform_4, window_bounds = array<i64: 1, 96>}, {pipeline_mode = #tpu.pipeline_mode<synchronous>, transform_indices = @transform_5, window_bounds = array<i64: 32, 32>}, {pipeline_mode = #tpu.pipeline_mode<synchronous>, transform_indices = @transform_6, window_bounds = array<i64: 1, 32>}, {pipeline_mode = #tpu.pipeline_mode<synchronous>, transform_indices = @transform_7, window_bounds = array<i64: 8, 8>}, {transform_indices = @transform_8, window_bounds = array<i64: 1, 8, 32>}]} {
    %c0 = arith.constant 0 : index
    %c0_0 = arith.constant 0 : index
    %c0_1 = arith.constant 0 : index
    %0 = vector.load %arg1[%c0, %c0_0, %c0_1] : memref<1x8x32xf32, #tpu.memory_space<vmem>>, vector<1x8x32xf32>
    %1 = vector.shape_cast %0 : vector<1x8x32xf32> to vector<8x32xf32>
    %c0_2 = arith.constant 0 : index
    %c0_3 = arith.constant 0 : index
    %2 = vector.load %arg2[%c0_2, %c0_3] : memref<1x32xf32, #tpu.memory_space<vmem>>, vector<1x32xf32>
    %c0_4 = arith.constant 0 : index
    %c0_5 = arith.constant 0 : index
    %3 = vector.load %arg3[%c0_4, %c0_5] : memref<1x32xf32, #tpu.memory_space<vmem>>, vector<1x32xf32>
    %cst = arith.constant dense<0.000000e+00> : vector<8xf32>
    %4 = vector.multi_reduction <add>, %1, %cst [1] : vector<8x32xf32> to vector<8xf32>
    %5 = vector.shape_cast %4 : vector<8xf32> to vector<8x1xf32>
    %cst_6 = arith.constant 3.200000e+01 : f32
    %6 = vector.broadcast %cst_6 : f32 to vector<8x1xf32>
    %7 = arith.divf %5, %6 : vector<8x1xf32>
    %8 = vector.broadcast %7 : vector<8x1xf32> to vector<8x32xf32>
    %9 = arith.subf %1, %8 : vector<8x32xf32>
    %10 = arith.mulf %9, %9 : vector<8x32xf32>
    %cst_7 = arith.constant dense<0.000000e+00> : vector<8xf32>
    %11 = vector.multi_reduction <add>, %10, %cst_7 [1] : vector<8x32xf32> to vector<8xf32>
    %12 = vector.shape_cast %11 : vector<8xf32> to vector<8x1xf32>
    %cst_8 = arith.constant 3.200000e+01 : f32
    %13 = vector.broadcast %cst_8 : f32 to vector<8x1xf32>
    %14 = arith.divf %12, %13 : vector<8x1xf32>
    %15 = vector.broadcast %7 : vector<8x1xf32> to vector<8x32xf32>
    %16 = arith.subf %1, %15 : vector<8x32xf32>
    %cst_9 = arith.constant 9.99999974E-6 : f32
    %17 = vector.broadcast %cst_9 : f32 to vector<8x1xf32>
    %18 = arith.addf %14, %17 : vector<8x1xf32>
    %19 = math.rsqrt %18 : vector<8x1xf32>
    %20 = vector.broadcast %19 : vector<8x1xf32> to vector<8x32xf32>
    %21 = arith.mulf %16, %20 : vector<8x32xf32>
    %22 = vector.broadcast %2 : vector<1x32xf32> to vector<8x32xf32>
    %23 = arith.mulf %21, %22 : vector<8x32xf32>
    %24 = vector.broadcast %3 : vector<1x32xf32> to vector<8x32xf32>
    %25 = arith.addf %23, %24 : vector<8x32xf32>
    %26 = arith.truncf %25 : vector<8x32xf32> to vector<8x32xbf16>
    %c0_10 = arith.constant 0 : index
    %c0_11 = arith.constant 0 : index
    %27 = vector.load %arg4[%c0_10, %c0_11] : memref<32x96xbf16, #tpu.memory_space<vmem>>, vector<32x96xbf16>
    %cst_12 = arith.constant dense<0.000000e+00> : vector<8x96xf32>
    %28 = tpu.matmul %26, %27, %cst_12 {dimension_numbers = #tpu.dot_dimension_numbers<[1], [0], [0], [1], [0, 0, 1, 1], [], []>} : vector<8x32xbf16>, vector<32x96xbf16>, vector<8x96xf32> -> vector<8x96xf32>
    %c0_13 = arith.constant 0 : index
    %c0_14 = arith.constant 0 : index
    %29 = vector.load %arg5[%c0_13, %c0_14] : memref<1x96xf32, #tpu.memory_space<vmem>>, vector<1x96xf32>
    %30 = vector.broadcast %29 : vector<1x96xf32> to vector<8x96xf32>
    %31 = arith.addf %28, %30 : vector<8x96xf32>
    %32 = vector.extract_strided_slice %31 {offsets = [0, 0], sizes = [8, 32], strides = [1, 1]} : vector<8x96xf32> to vector<8x32xf32>
    %33 = vector.extract_strided_slice %31 {offsets = [0, 32], sizes = [8, 32], strides = [1, 1]} : vector<8x96xf32> to vector<8x32xf32>
    %34 = vector.extract_strided_slice %31 {offsets = [0, 64], sizes = [8, 32], strides = [1, 1]} : vector<8x96xf32> to vector<8x32xf32>
    %c0_15 = arith.constant 0 : index
    %c0_16 = arith.constant 0 : index
    %35 = vector.load %arg8[%c0_15, %c0_16] : memref<8x8xf32, #tpu.memory_space<vmem>>, vector<8x8xf32>
    %36 = vector.extract_strided_slice %32 {offsets = [0, 0], sizes = [8, 8], strides = [1, 1]} : vector<8x32xf32> to vector<8x8xf32>
    %37 = vector.extract_strided_slice %33 {offsets = [0, 0], sizes = [8, 8], strides = [1, 1]} : vector<8x32xf32> to vector<8x8xf32>
    %38 = vector.extract_strided_slice %34 {offsets = [0, 0], sizes = [8, 8], strides = [1, 1]} : vector<8x32xf32> to vector<8x8xf32>
    %39 = arith.truncf %36 : vector<8x8xf32> to vector<8x8xbf16>
    %40 = arith.truncf %37 : vector<8x8xf32> to vector<8x8xbf16>
    %cst_17 = arith.constant dense<0.000000e+00> : vector<8x8xf32>
    %41 = tpu.matmul %39, %40, %cst_17 {dimension_numbers = #tpu.dot_dimension_numbers<[1], [1], [0], [0], [0, 0, 1, 0], [], []>} : vector<8x8xbf16>, vector<8x8xbf16>, vector<8x8xf32> -> vector<8x8xf32>
    %42 = arith.addf %41, %35 : vector<8x8xf32>
    %cst_18 = arith.constant dense<0xFF800000> : vector<8xf32>
    %43 = vector.multi_reduction <maximumf>, %42, %cst_18 [1] : vector<8x8xf32> to vector<8xf32>
    %44 = vector.shape_cast %43 : vector<8xf32> to vector<8x1xf32>
    %45 = vector.broadcast %44 : vector<8x1xf32> to vector<8x8xf32>
    %46 = arith.subf %42, %45 : vector<8x8xf32>
    %47 = math.exp %46 : vector<8x8xf32>
    %cst_19 = arith.constant dense<0.000000e+00> : vector<8xf32>
    %48 = vector.multi_reduction <add>, %47, %cst_19 [1] : vector<8x8xf32> to vector<8xf32>
    %49 = vector.shape_cast %48 : vector<8xf32> to vector<8x1xf32>
    %50 = tpu.reciprocal %49 {approx = true} : vector<8x1xf32> -> vector<8x1xf32>
    %51 = vector.broadcast %50 : vector<8x1xf32> to vector<8x8xf32>
    %52 = arith.mulf %47, %51 : vector<8x8xf32>
    %53 = arith.truncf %52 : vector<8x8xf32> to vector<8x8xbf16>
    %54 = arith.truncf %38 : vector<8x8xf32> to vector<8x8xbf16>
    %cst_20 = arith.constant dense<0.000000e+00> : vector<8x8xf32>
    %55 = tpu.matmul %53, %54, %cst_20 {dimension_numbers = #tpu.dot_dimension_numbers<[1], [0], [0], [1], [0, 0, 1, 1], [], []>} : vector<8x8xbf16>, vector<8x8xbf16>, vector<8x8xf32> -> vector<8x8xf32>
    %56 = vector.extract_strided_slice %32 {offsets = [0, 8], sizes = [8, 8], strides = [1, 1]} : vector<8x32xf32> to vector<8x8xf32>
    %57 = vector.extract_strided_slice %33 {offsets = [0, 8], sizes = [8, 8], strides = [1, 1]} : vector<8x32xf32> to vector<8x8xf32>
    %58 = vector.extract_strided_slice %34 {offsets = [0, 8], sizes = [8, 8], strides = [1, 1]} : vector<8x32xf32> to vector<8x8xf32>
    %59 = arith.truncf %56 : vector<8x8xf32> to vector<8x8xbf16>
    %60 = arith.truncf %57 : vector<8x8xf32> to vector<8x8xbf16>
    %cst_21 = arith.constant dense<0.000000e+00> : vector<8x8xf32>
    %61 = tpu.matmul %59, %60, %cst_21 {dimension_numbers = #tpu.dot_dimension_numbers<[1], [1], [0], [0], [0, 0, 1, 0], [], []>} : vector<8x8xbf16>, vector<8x8xbf16>, vector<8x8xf32> -> vector<8x8xf32>
    %62 = arith.addf %61, %35 : vector<8x8xf32>
    %cst_22 = arith.constant dense<0xFF800000> : vector<8xf32>
    %63 = vector.multi_reduction <maximumf>, %62, %cst_22 [1] : vector<8x8xf32> to vector<8xf32>
    %64 = vector.shape_cast %63 : vector<8xf32> to vector<8x1xf32>
    %65 = vector.broadcast %64 : vector<8x1xf32> to vector<8x8xf32>
    %66 = arith.subf %62, %65 : vector<8x8xf32>
    %67 = math.exp %66 : vector<8x8xf32>
    %cst_23 = arith.constant dense<0.000000e+00> : vector<8xf32>
    %68 = vector.multi_reduction <add>, %67, %cst_23 [1] : vector<8x8xf32> to vector<8xf32>
    %69 = vector.shape_cast %68 : vector<8xf32> to vector<8x1xf32>
    %70 = tpu.reciprocal %69 {approx = true} : vector<8x1xf32> -> vector<8x1xf32>
    %71 = vector.broadcast %70 : vector<8x1xf32> to vector<8x8xf32>
    %72 = arith.mulf %67, %71 : vector<8x8xf32>
    %73 = arith.truncf %72 : vector<8x8xf32> to vector<8x8xbf16>
    %74 = arith.truncf %58 : vector<8x8xf32> to vector<8x8xbf16>
    %cst_24 = arith.constant dense<0.000000e+00> : vector<8x8xf32>
    %75 = tpu.matmul %73, %74, %cst_24 {dimension_numbers = #tpu.dot_dimension_numbers<[1], [0], [0], [1], [0, 0, 1, 1], [], []>} : vector<8x8xbf16>, vector<8x8xbf16>, vector<8x8xf32> -> vector<8x8xf32>
    %76 = vector.extract_strided_slice %32 {offsets = [0, 16], sizes = [8, 8], strides = [1, 1]} : vector<8x32xf32> to vector<8x8xf32>
    %77 = vector.extract_strided_slice %33 {offsets = [0, 16], sizes = [8, 8], strides = [1, 1]} : vector<8x32xf32> to vector<8x8xf32>
    %78 = vector.extract_strided_slice %34 {offsets = [0, 16], sizes = [8, 8], strides = [1, 1]} : vector<8x32xf32> to vector<8x8xf32>
    %79 = arith.truncf %76 : vector<8x8xf32> to vector<8x8xbf16>
    %80 = arith.truncf %77 : vector<8x8xf32> to vector<8x8xbf16>
    %cst_25 = arith.constant dense<0.000000e+00> : vector<8x8xf32>
    %81 = tpu.matmul %79, %80, %cst_25 {dimension_numbers = #tpu.dot_dimension_numbers<[1], [1], [0], [0], [0, 0, 1, 0], [], []>} : vector<8x8xbf16>, vector<8x8xbf16>, vector<8x8xf32> -> vector<8x8xf32>
    %82 = arith.addf %81, %35 : vector<8x8xf32>
    %cst_26 = arith.constant dense<0xFF800000> : vector<8xf32>
    %83 = vector.multi_reduction <maximumf>, %82, %cst_26 [1] : vector<8x8xf32> to vector<8xf32>
    %84 = vector.shape_cast %83 : vector<8xf32> to vector<8x1xf32>
    %85 = vector.broadcast %84 : vector<8x1xf32> to vector<8x8xf32>
    %86 = arith.subf %82, %85 : vector<8x8xf32>
    %87 = math.exp %86 : vector<8x8xf32>
    %cst_27 = arith.constant dense<0.000000e+00> : vector<8xf32>
    %88 = vector.multi_reduction <add>, %87, %cst_27 [1] : vector<8x8xf32> to vector<8xf32>
    %89 = vector.shape_cast %88 : vector<8xf32> to vector<8x1xf32>
    %90 = tpu.reciprocal %89 {approx = true} : vector<8x1xf32> -> vector<8x1xf32>
    %91 = vector.broadcast %90 : vector<8x1xf32> to vector<8x8xf32>
    %92 = arith.mulf %87, %91 : vector<8x8xf32>
    %93 = arith.truncf %92 : vector<8x8xf32> to vector<8x8xbf16>
    %94 = arith.truncf %78 : vector<8x8xf32> to vector<8x8xbf16>
    %cst_28 = arith.constant dense<0.000000e+00> : vector<8x8xf32>
    %95 = tpu.matmul %93, %94, %cst_28 {dimension_numbers = #tpu.dot_dimension_numbers<[1], [0], [0], [1], [0, 0, 1, 1], [], []>} : vector<8x8xbf16>, vector<8x8xbf16>, vector<8x8xf32> -> vector<8x8xf32>
    %96 = vector.extract_strided_slice %32 {offsets = [0, 24], sizes = [8, 8], strides = [1, 1]} : vector<8x32xf32> to vector<8x8xf32>
    %97 = vector.extract_strided_slice %33 {offsets = [0, 24], sizes = [8, 8], strides = [1, 1]} : vector<8x32xf32> to vector<8x8xf32>
    %98 = vector.extract_strided_slice %34 {offsets = [0, 24], sizes = [8, 8], strides = [1, 1]} : vector<8x32xf32> to vector<8x8xf32>
    %99 = arith.truncf %96 : vector<8x8xf32> to vector<8x8xbf16>
    %100 = arith.truncf %97 : vector<8x8xf32> to vector<8x8xbf16>
    %cst_29 = arith.constant dense<0.000000e+00> : vector<8x8xf32>
    %101 = tpu.matmul %99, %100, %cst_29 {dimension_numbers = #tpu.dot_dimension_numbers<[1], [1], [0], [0], [0, 0, 1, 0], [], []>} : vector<8x8xbf16>, vector<8x8xbf16>, vector<8x8xf32> -> vector<8x8xf32>
    %102 = arith.addf %101, %35 : vector<8x8xf32>
    %cst_30 = arith.constant dense<0xFF800000> : vector<8xf32>
    %103 = vector.multi_reduction <maximumf>, %102, %cst_30 [1] : vector<8x8xf32> to vector<8xf32>
    %104 = vector.shape_cast %103 : vector<8xf32> to vector<8x1xf32>
    %105 = vector.broadcast %104 : vector<8x1xf32> to vector<8x8xf32>
    %106 = arith.subf %102, %105 : vector<8x8xf32>
    %107 = math.exp %106 : vector<8x8xf32>
    %cst_31 = arith.constant dense<0.000000e+00> : vector<8xf32>
    %108 = vector.multi_reduction <add>, %107, %cst_31 [1] : vector<8x8xf32> to vector<8xf32>
    %109 = vector.shape_cast %108 : vector<8xf32> to vector<8x1xf32>
    %110 = tpu.reciprocal %109 {approx = true} : vector<8x1xf32> -> vector<8x1xf32>
    %111 = vector.broadcast %110 : vector<8x1xf32> to vector<8x8xf32>
    %112 = arith.mulf %107, %111 : vector<8x8xf32>
    %113 = arith.truncf %112 : vector<8x8xf32> to vector<8x8xbf16>
    %114 = arith.truncf %98 : vector<8x8xf32> to vector<8x8xbf16>
    %cst_32 = arith.constant dense<0.000000e+00> : vector<8x8xf32>
    %115 = tpu.matmul %113, %114, %cst_32 {dimension_numbers = #tpu.dot_dimension_numbers<[1], [0], [0], [1], [0, 0, 1, 1], [], []>} : vector<8x8xbf16>, vector<8x8xbf16>, vector<8x8xf32> -> vector<8x8xf32>
    %116 = tpu.concatenate %55, %75, %95, %115 in 1 : vector<8x8xf32>, vector<8x8xf32>, vector<8x8xf32>, vector<8x8xf32> -> vector<8x32xf32>
    %117 = arith.truncf %116 : vector<8x32xf32> to vector<8x32xbf16>
    %c0_33 = arith.constant 0 : index
    %c0_34 = arith.constant 0 : index
    %118 = vector.load %arg6[%c0_33, %c0_34] : memref<32x32xbf16, #tpu.memory_space<vmem>>, vector<32x32xbf16>
    %cst_35 = arith.constant dense<0.000000e+00> : vector<8x32xf32>
    %119 = tpu.matmul %117, %118, %cst_35 {dimension_numbers = #tpu.dot_dimension_numbers<[1], [0], [0], [1], [0, 0, 1, 1], [], []>} : vector<8x32xbf16>, vector<32x32xbf16>, vector<8x32xf32> -> vector<8x32xf32>
    %c0_36 = arith.constant 0 : index
    %c0_37 = arith.constant 0 : index
    %120 = vector.load %arg7[%c0_36, %c0_37] : memref<1x32xf32, #tpu.memory_space<vmem>>, vector<1x32xf32>
    %121 = vector.broadcast %120 : vector<1x32xf32> to vector<8x32xf32>
    %122 = arith.addf %119, %121 : vector<8x32xf32>
    %123 = arith.addf %1, %122 : vector<8x32xf32>
    %c0_38 = arith.constant 0 : index
    %c0_39 = arith.constant 0 : index
    %c0_40 = arith.constant 0 : index
    %124 = vector.load %arg9[%c0_38, %c0_39, %c0_40] : memref<1x8x32xf32, #tpu.memory_space<vmem>>, vector<1x8x32xf32>
    %125 = vector.shape_cast %124 : vector<1x8x32xf32> to vector<8x32xf32>
    %126 = vector.shape_cast %123 : vector<8x32xf32> to vector<1x8x32xf32>
    tpu.vector_store %arg9[%c0_38, %c0_39, %c0_40], %126 {strides = array<i32>} : memref<1x8x32xf32, #tpu.memory_space<vmem>>, vector<1x8x32xf32>,
    return
  }
  func.func @transform_0(%arg0: i32) -> (i32, i32, i32) {
    %c0_i32 = arith.constant 0 : i32
    %c0_i32_0 = arith.constant 0 : i32
    %c0_i32_1 = arith.constant 0 : i32
    return %arg0, %c0_i32, %c0_i32_0 : i32, i32, i32
  }
  func.func @transform_1(%arg0: i32) -> (i32, i32) {
    %c0_i32 = arith.constant 0 : i32
    %c0_i32_0 = arith.constant 0 : i32
    %c0_i32_1 = arith.constant 0 : i32
    return %c0_i32, %c0_i32_0 : i32, i32
  }
  func.func @transform_2(%arg0: i32) -> (i32, i32) {
    %c0_i32 = arith.constant 0 : i32
    %c0_i32_0 = arith.constant 0 : i32
    %c0_i32_1 = arith.constant 0 : i32
    return %c0_i32, %c0_i32_0 : i32, i32
  }
  func.func @transform_3(%arg0: i32) -> (i32, i32) {
    %c0_i32 = arith.constant 0 : i32
    %c0_i32_0 = arith.constant 0 : i32
    %c0_i32_1 = arith.constant 0 : i32
    return %c0_i32, %c0_i32_0 : i32, i32
  }
  func.func @transform_4(%arg0: i32) -> (i32, i32) {
    %c0_i32 = arith.constant 0 : i32
    %c0_i32_0 = arith.constant 0 : i32
    %c0_i32_1 = arith.constant 0 : i32
    return %c0_i32, %c0_i32_0 : i32, i32
  }
  func.func @transform_5(%arg0: i32) -> (i32, i32) {
    %c0_i32 = arith.constant 0 : i32
    %c0_i32_0 = arith.constant 0 : i32
    %c0_i32_1 = arith.constant 0 : i32
    return %c0_i32, %c0_i32_0 : i32, i32
  }
  func.func @transform_6(%arg0: i32) -> (i32, i32) {
    %c0_i32 = arith.constant 0 : i32
    %c0_i32_0 = arith.constant 0 : i32
    %c0_i32_1 = arith.constant 0 : i32
    return %c0_i32, %c0_i32_0 : i32, i32
  }
  func.func @transform_7(%arg0: i32) -> (i32, i32) {
    %c0_i32 = arith.constant 0 : i32
    %c0_i32_0 = arith.constant 0 : i32
    %c0_i32_1 = arith.constant 0 : i32
    return %c0_i32, %c0_i32_0 : i32, i32
  }
  func.func @transform_8(%arg0: i32) -> (i32, i32, i32) {
    %c0_i32 = arith.constant 0 : i32
    %c0_i32_0 = arith.constant 0 : i32
    %c0_i32_1 = arith.constant 0 : i32
    return %arg0, %c0_i32, %c0_i32_0 : i32, i32, i32
  }
}

module attributes {stable_mosaic.version = 11 : i64} {
  func.func @_ffn_kernel(%arg0: i32, %arg1: memref<16x32xf32, #tpu.memory_space<vmem>>, %arg2: memref<1x32xf32, #tpu.memory_space<vmem>>, %arg3: memref<1x32xf32, #tpu.memory_space<vmem>>, %arg4: memref<32x64xbf16, #tpu.memory_space<vmem>>, %arg5: memref<1x64xf32, #tpu.memory_space<vmem>>, %arg6: memref<64x32xbf16, #tpu.memory_space<vmem>>, %arg7: memref<1x32xf32, #tpu.memory_space<vmem>>, %arg8: memref<16x32xf32, #tpu.memory_space<vmem>>) attributes {dimension_semantics = [#tpu.dimension_semantics<parallel>], iteration_bounds = array<i64: 1>, scalar_prefetch = 0 : i64, scratch_operands = 0 : i64, tpu.core_type = #tpu.core_type<tc>, window_params = [{transform_indices = @transform_0, window_bounds = array<i64: 16, 32>}, {pipeline_mode = #tpu.pipeline_mode<synchronous>, transform_indices = @transform_1, window_bounds = array<i64: 1, 32>}, {pipeline_mode = #tpu.pipeline_mode<synchronous>, transform_indices = @transform_2, window_bounds = array<i64: 1, 32>}, {pipeline_mode = #tpu.pipeline_mode<synchronous>, transform_indices = @transform_3, window_bounds = array<i64: 32, 64>}, {pipeline_mode = #tpu.pipeline_mode<synchronous>, transform_indices = @transform_4, window_bounds = array<i64: 1, 64>}, {pipeline_mode = #tpu.pipeline_mode<synchronous>, transform_indices = @transform_5, window_bounds = array<i64: 64, 32>}, {pipeline_mode = #tpu.pipeline_mode<synchronous>, transform_indices = @transform_6, window_bounds = array<i64: 1, 32>}, {transform_indices = @transform_7, window_bounds = array<i64: 16, 32>}]} {
    %c0 = arith.constant 0 : index
    %c0_0 = arith.constant 0 : index
    %0 = vector.load %arg1[%c0, %c0_0] : memref<16x32xf32, #tpu.memory_space<vmem>>, vector<16x32xf32>
    %c0_1 = arith.constant 0 : index
    %c0_2 = arith.constant 0 : index
    %1 = vector.load %arg2[%c0_1, %c0_2] : memref<1x32xf32, #tpu.memory_space<vmem>>, vector<1x32xf32>
    %c0_3 = arith.constant 0 : index
    %c0_4 = arith.constant 0 : index
    %2 = vector.load %arg3[%c0_3, %c0_4] : memref<1x32xf32, #tpu.memory_space<vmem>>, vector<1x32xf32>
    %cst = arith.constant dense<0.000000e+00> : vector<16xf32>
    %3 = vector.multi_reduction <add>, %0, %cst [1] : vector<16x32xf32> to vector<16xf32>
    %4 = vector.shape_cast %3 : vector<16xf32> to vector<16x1xf32>
    %cst_5 = arith.constant 3.200000e+01 : f32
    %5 = vector.broadcast %cst_5 : f32 to vector<16x1xf32>
    %6 = arith.divf %4, %5 : vector<16x1xf32>
    %7 = vector.broadcast %6 : vector<16x1xf32> to vector<16x32xf32>
    %8 = arith.subf %0, %7 : vector<16x32xf32>
    %9 = arith.mulf %8, %8 : vector<16x32xf32>
    %cst_6 = arith.constant dense<0.000000e+00> : vector<16xf32>
    %10 = vector.multi_reduction <add>, %9, %cst_6 [1] : vector<16x32xf32> to vector<16xf32>
    %11 = vector.shape_cast %10 : vector<16xf32> to vector<16x1xf32>
    %cst_7 = arith.constant 3.200000e+01 : f32
    %12 = vector.broadcast %cst_7 : f32 to vector<16x1xf32>
    %13 = arith.divf %11, %12 : vector<16x1xf32>
    %14 = vector.broadcast %6 : vector<16x1xf32> to vector<16x32xf32>
    %15 = arith.subf %0, %14 : vector<16x32xf32>
    %cst_8 = arith.constant 9.99999974E-6 : f32
    %16 = vector.broadcast %cst_8 : f32 to vector<16x1xf32>
    %17 = arith.addf %13, %16 : vector<16x1xf32>
    %18 = math.rsqrt %17 : vector<16x1xf32>
    %19 = vector.broadcast %18 : vector<16x1xf32> to vector<16x32xf32>
    %20 = arith.mulf %15, %19 : vector<16x32xf32>
    %21 = vector.broadcast %1 : vector<1x32xf32> to vector<16x32xf32>
    %22 = arith.mulf %20, %21 : vector<16x32xf32>
    %23 = vector.broadcast %2 : vector<1x32xf32> to vector<16x32xf32>
    %24 = arith.addf %22, %23 : vector<16x32xf32>
    %25 = arith.truncf %24 : vector<16x32xf32> to vector<16x32xbf16>
    %c0_9 = arith.constant 0 : index
    %c0_10 = arith.constant 0 : index
    %26 = vector.load %arg4[%c0_9, %c0_10] : memref<32x64xbf16, #tpu.memory_space<vmem>>, vector<32x64xbf16>
    %cst_11 = arith.constant dense<0.000000e+00> : vector<16x64xf32>
    %27 = tpu.matmul %25, %26, %cst_11 {dimension_numbers = #tpu.dot_dimension_numbers<[1], [0], [0], [1], [0, 0, 1, 1], [], []>} : vector<16x32xbf16>, vector<32x64xbf16>, vector<16x64xf32> -> vector<16x64xf32>
    %c0_12 = arith.constant 0 : index
    %c0_13 = arith.constant 0 : index
    %28 = vector.load %arg5[%c0_12, %c0_13] : memref<1x64xf32, #tpu.memory_space<vmem>>, vector<1x64xf32>
    %29 = vector.broadcast %28 : vector<1x64xf32> to vector<16x64xf32>
    %30 = arith.addf %27, %29 : vector<16x64xf32>
    %cst_14 = arith.constant 5.000000e-01 : f32
    %31 = vector.broadcast %cst_14 : f32 to vector<16x64xf32>
    %32 = arith.mulf %31, %30 : vector<16x64xf32>
    %cst_15 = arith.constant 0.707106769 : f32
    %33 = vector.broadcast %cst_15 : f32 to vector<16x64xf32>
    %34 = arith.mulf %30, %33 : vector<16x64xf32>
    %cst_16 = arith.constant 0.000000e+00 : f32
    %35 = vector.broadcast %cst_16 : f32 to vector<16x64xf32>
    %36 = arith.cmpf oge, %34, %35 : vector<16x64xf32>
    %cst_17 = arith.constant 1.000000e+00 : f32
    %cst_18 = arith.constant -1.000000e+00 : f32
    %37 = vector.broadcast %cst_17 : f32 to vector<16x64xf32>
    %38 = vector.broadcast %cst_18 : f32 to vector<16x64xf32>
    %39 = arith.select %36, %37, %38 : vector<16x64xi1>, vector<16x64xf32>
    %40 = math.absf %34 : vector<16x64xf32>
    %cst_19 = arith.constant 0.327591091 : f32
    %41 = vector.broadcast %cst_19 : f32 to vector<16x64xf32>
    %42 = arith.mulf %41, %40 : vector<16x64xf32>
    %cst_20 = arith.constant 1.000000e+00 : f32
    %43 = vector.broadcast %cst_20 : f32 to vector<16x64xf32>
    %44 = arith.addf %43, %42 : vector<16x64xf32>
    %45 = tpu.reciprocal %44 {approx = true} : vector<16x64xf32> -> vector<16x64xf32>
    %cst_21 = arith.constant 1.06140542 : f32
    %46 = vector.broadcast %cst_21 : f32 to vector<16x64xf32>
    %47 = arith.mulf %46, %45 : vector<16x64xf32>
    %cst_22 = arith.constant -1.45315206 : f32
    %48 = vector.broadcast %cst_22 : f32 to vector<16x64xf32>
    %49 = arith.addf %47, %48 : vector<16x64xf32>
    %50 = arith.mulf %49, %45 : vector<16x64xf32>
    %cst_23 = arith.constant 1.42141378 : f32
    %51 = vector.broadcast %cst_23 : f32 to vector<16x64xf32>
    %52 = arith.addf %50, %51 : vector<16x64xf32>
    %53 = arith.mulf %52, %45 : vector<16x64xf32>
    %cst_24 = arith.constant -0.284496725 : f32
    %54 = vector.broadcast %cst_24 : f32 to vector<16x64xf32>
    %55 = arith.addf %53, %54 : vector<16x64xf32>
    %56 = arith.mulf %55, %45 : vector<16x64xf32>
    %cst_25 = arith.constant 0.254829586 : f32
    %57 = vector.broadcast %cst_25 : f32 to vector<16x64xf32>
    %58 = arith.addf %56, %57 : vector<16x64xf32>
    %59 = arith.mulf %58, %45 : vector<16x64xf32>
    %cst_26 = arith.constant 0.000000e+00 : f32
    %60 = vector.broadcast %cst_26 : f32 to vector<16x64xf32>
    %61 = arith.subf %60, %40 : vector<16x64xf32>
    %62 = arith.mulf %61, %40 : vector<16x64xf32>
    %63 = math.exp %62 : vector<16x64xf32>
    %64 = arith.mulf %59, %63 : vector<16x64xf32>
    %cst_27 = arith.constant 1.000000e+00 : f32
    %65 = vector.broadcast %cst_27 : f32 to vector<16x64xf32>
    %66 = arith.subf %65, %64 : vector<16x64xf32>
    %67 = arith.mulf %39, %66 : vector<16x64xf32>
    %cst_28 = arith.constant 1.000000e+00 : f32
    %68 = vector.broadcast %cst_28 : f32 to vector<16x64xf32>
    %69 = arith.addf %68, %67 : vector<16x64xf32>
    %70 = arith.mulf %32, %69 : vector<16x64xf32>
    %71 = arith.truncf %70 : vector<16x64xf32> to vector<16x64xbf16>
    %c0_29 = arith.constant 0 : index
    %c0_30 = arith.constant 0 : index
    %72 = vector.load %arg6[%c0_29, %c0_30] : memref<64x32xbf16, #tpu.memory_space<vmem>>, vector<64x32xbf16>
    %cst_31 = arith.constant dense<0.000000e+00> : vector<16x32xf32>
    %73 = tpu.matmul %71, %72, %cst_31 {dimension_numbers = #tpu.dot_dimension_numbers<[1], [0], [0], [1], [0, 0, 1, 1], [], []>} : vector<16x64xbf16>, vector<64x32xbf16>, vector<16x32xf32> -> vector<16x32xf32>
    %c0_32 = arith.constant 0 : index
    %c0_33 = arith.constant 0 : index
    %74 = vector.load %arg7[%c0_32, %c0_33] : memref<1x32xf32, #tpu.memory_space<vmem>>, vector<1x32xf32>
    %75 = vector.broadcast %74 : vector<1x32xf32> to vector<16x32xf32>
    %76 = arith.addf %73, %75 : vector<16x32xf32>
    %77 = arith.addf %0, %76 : vector<16x32xf32>
    %c0_34 = arith.constant 0 : index
    %c0_35 = arith.constant 0 : index
    %78 = vector.load %arg8[%c0_34, %c0_35] : memref<16x32xf32, #tpu.memory_space<vmem>>, vector<16x32xf32>
    tpu.vector_store %arg8[%c0_34, %c0_35], %77 {strides = array<i32>} : memref<16x32xf32, #tpu.memory_space<vmem>>, vector<16x32xf32>,
    return
  }
  func.func @transform_0(%arg0: i32) -> (i32, i32) {
    %c0_i32 = arith.constant 0 : i32
    %c0_i32_0 = arith.constant 0 : i32
    return %arg0, %c0_i32 : i32, i32
  }
  func.func @transform_1(%arg0: i32) -> (i32, i32) {
    %c0_i32 = arith.constant 0 : i32
    %c0_i32_0 = arith.constant 0 : i32
    %c0_i32_1 = arith.constant 0 : i32
    return %c0_i32, %c0_i32_0 : i32, i32
  }
  func.func @transform_2(%arg0: i32) -> (i32, i32) {
    %c0_i32 = arith.constant 0 : i32
    %c0_i32_0 = arith.constant 0 : i32
    %c0_i32_1 = arith.constant 0 : i32
    return %c0_i32, %c0_i32_0 : i32, i32
  }
  func.func @transform_3(%arg0: i32) -> (i32, i32) {
    %c0_i32 = arith.constant 0 : i32
    %c0_i32_0 = arith.constant 0 : i32
    %c0_i32_1 = arith.constant 0 : i32
    return %c0_i32, %c0_i32_0 : i32, i32
  }
  func.func @transform_4(%arg0: i32) -> (i32, i32) {
    %c0_i32 = arith.constant 0 : i32
    %c0_i32_0 = arith.constant 0 : i32
    %c0_i32_1 = arith.constant 0 : i32
    return %c0_i32, %c0_i32_0 : i32, i32
  }
  func.func @transform_5(%arg0: i32) -> (i32, i32) {
    %c0_i32 = arith.constant 0 : i32
    %c0_i32_0 = arith.constant 0 : i32
    %c0_i32_1 = arith.constant 0 : i32
    return %c0_i32, %c0_i32_0 : i32, i32
  }
  func.func @transform_6(%arg0: i32) -> (i32, i32) {
    %c0_i32 = arith.constant 0 : i32
    %c0_i32_0 = arith.constant 0 : i32
    %c0_i32_1 = arith.constant 0 : i32
    return %c0_i32, %c0_i32_0 : i32, i32
  }
  func.func @transform_7(%arg0: i32) -> (i32, i32) {
    %c0_i32 = arith.constant 0 : i32
    %c0_i32_0 = arith.constant 0 : i32
    return %arg0, %c0_i32 : i32, i32
  }
}

module attributes {stable_mosaic.version = 11 : i64} {
  func.func @_ffn_kernel(%arg0: i32, %arg1: memref<16x32xf32, #tpu.memory_space<vmem>>, %arg2: memref<1x32xf32, #tpu.memory_space<vmem>>, %arg3: memref<1x32xf32, #tpu.memory_space<vmem>>, %arg4: memref<32x64xbf16, #tpu.memory_space<vmem>>, %arg5: memref<1x64xf32, #tpu.memory_space<vmem>>, %arg6: memref<64x32xbf16, #tpu.memory_space<vmem>>, %arg7: memref<1x32xf32, #tpu.memory_space<vmem>>, %arg8: memref<16x32xf32, #tpu.memory_space<vmem>>) attributes {dimension_semantics = [#tpu.dimension_semantics<parallel>], iteration_bounds = array<i64: 1>, scalar_prefetch = 0 : i64, scratch_operands = 0 : i64, tpu.core_type = #tpu.core_type<tc>, window_params = [{transform_indices = @transform_0, window_bounds = array<i64: 16, 32>}, {pipeline_mode = #tpu.pipeline_mode<synchronous>, transform_indices = @transform_1, window_bounds = array<i64: 1, 32>}, {pipeline_mode = #tpu.pipeline_mode<synchronous>, transform_indices = @transform_2, window_bounds = array<i64: 1, 32>}, {pipeline_mode = #tpu.pipeline_mode<synchronous>, transform_indices = @transform_3, window_bounds = array<i64: 32, 64>}, {pipeline_mode = #tpu.pipeline_mode<synchronous>, transform_indices = @transform_4, window_bounds = array<i64: 1, 64>}, {pipeline_mode = #tpu.pipeline_mode<synchronous>, transform_indices = @transform_5, window_bounds = array<i64: 64, 32>}, {pipeline_mode = #tpu.pipeline_mode<synchronous>, transform_indices = @transform_6, window_bounds = array<i64: 1, 32>}, {transform_indices = @transform_7, window_bounds = array<i64: 16, 32>}]} {
    %c0 = arith.constant 0 : index
    %c0_0 = arith.constant 0 : index
    %0 = vector.load %arg1[%c0, %c0_0] : memref<16x32xf32, #tpu.memory_space<vmem>>, vector<16x32xf32>
    %c0_1 = arith.constant 0 : index
    %c0_2 = arith.constant 0 : index
    %1 = vector.load %arg2[%c0_1, %c0_2] : memref<1x32xf32, #tpu.memory_space<vmem>>, vector<1x32xf32>
    %c0_3 = arith.constant 0 : index
    %c0_4 = arith.constant 0 : index
    %2 = vector.load %arg3[%c0_3, %c0_4] : memref<1x32xf32, #tpu.memory_space<vmem>>, vector<1x32xf32>
    %cst = arith.constant dense<0.000000e+00> : vector<16xf32>
    %3 = vector.multi_reduction <add>, %0, %cst [1] : vector<16x32xf32> to vector<16xf32>
    %4 = vector.shape_cast %3 : vector<16xf32> to vector<16x1xf32>
    %cst_5 = arith.constant 3.200000e+01 : f32
    %5 = vector.broadcast %cst_5 : f32 to vector<16x1xf32>
    %6 = arith.divf %4, %5 : vector<16x1xf32>
    %7 = vector.broadcast %6 : vector<16x1xf32> to vector<16x32xf32>
    %8 = arith.subf %0, %7 : vector<16x32xf32>
    %9 = arith.mulf %8, %8 : vector<16x32xf32>
    %cst_6 = arith.constant dense<0.000000e+00> : vector<16xf32>
    %10 = vector.multi_reduction <add>, %9, %cst_6 [1] : vector<16x32xf32> to vector<16xf32>
    %11 = vector.shape_cast %10 : vector<16xf32> to vector<16x1xf32>
    %cst_7 = arith.constant 3.200000e+01 : f32
    %12 = vector.broadcast %cst_7 : f32 to vector<16x1xf32>
    %13 = arith.divf %11, %12 : vector<16x1xf32>
    %14 = vector.broadcast %6 : vector<16x1xf32> to vector<16x32xf32>
    %15 = arith.subf %0, %14 : vector<16x32xf32>
    %cst_8 = arith.constant 9.99999974E-6 : f32
    %16 = vector.broadcast %cst_8 : f32 to vector<16x1xf32>
    %17 = arith.addf %13, %16 : vector<16x1xf32>
    %18 = math.rsqrt %17 : vector<16x1xf32>
    %19 = vector.broadcast %18 : vector<16x1xf32> to vector<16x32xf32>
    %20 = arith.mulf %15, %19 : vector<16x32xf32>
    %21 = vector.broadcast %1 : vector<1x32xf32> to vector<16x32xf32>
    %22 = arith.mulf %20, %21 : vector<16x32xf32>
    %23 = vector.broadcast %2 : vector<1x32xf32> to vector<16x32xf32>
    %24 = arith.addf %22, %23 : vector<16x32xf32>
    %25 = arith.truncf %24 : vector<16x32xf32> to vector<16x32xbf16>
    %c0_9 = arith.constant 0 : index
    %c0_10 = arith.constant 0 : index
    %26 = vector.load %arg4[%c0_9, %c0_10] : memref<32x64xbf16, #tpu.memory_space<vmem>>, vector<32x64xbf16>
    %cst_11 = arith.constant dense<0.000000e+00> : vector<16x64xf32>
    %27 = tpu.matmul %25, %26, %cst_11 {dimension_numbers = #tpu.dot_dimension_numbers<[1], [0], [0], [1], [0, 0, 1, 1], [], []>} : vector<16x32xbf16>, vector<32x64xbf16>, vector<16x64xf32> -> vector<16x64xf32>
    %c0_12 = arith.constant 0 : index
    %c0_13 = arith.constant 0 : index
    %28 = vector.load %arg5[%c0_12, %c0_13] : memref<1x64xf32, #tpu.memory_space<vmem>>, vector<1x64xf32>
    %29 = vector.broadcast %28 : vector<1x64xf32> to vector<16x64xf32>
    %30 = arith.addf %27, %29 : vector<16x64xf32>
    %cst_14 = arith.constant 5.000000e-01 : f32
    %31 = vector.broadcast %cst_14 : f32 to vector<16x64xf32>
    %32 = arith.mulf %31, %30 : vector<16x64xf32>
    %cst_15 = arith.constant 0.707106769 : f32
    %33 = vector.broadcast %cst_15 : f32 to vector<16x64xf32>
    %34 = arith.mulf %30, %33 : vector<16x64xf32>
    %cst_16 = arith.constant 0.000000e+00 : f32
    %35 = vector.broadcast %cst_16 : f32 to vector<16x64xf32>
    %36 = arith.cmpf oge, %34, %35 : vector<16x64xf32>
    %cst_17 = arith.constant 1.000000e+00 : f32
    %cst_18 = arith.constant -1.000000e+00 : f32
    %37 = vector.broadcast %cst_17 : f32 to vector<16x64xf32>
    %38 = vector.broadcast %cst_18 : f32 to vector<16x64xf32>
    %39 = arith.select %36, %37, %38 : vector<16x64xi1>, vector<16x64xf32>
    %40 = math.absf %34 : vector<16x64xf32>
    %cst_19 = arith.constant 0.327591091 : f32
    %41 = vector.broadcast %cst_19 : f32 to vector<16x64xf32>
    %42 = arith.mulf %41, %40 : vector<16x64xf32>
    %cst_20 = arith.constant 1.000000e+00 : f32
    %43 = vector.broadcast %cst_20 : f32 to vector<16x64xf32>
    %44 = arith.addf %43, %42 : vector<16x64xf32>
    %45 = tpu.reciprocal %44 {approx = true} : vector<16x64xf32> -> vector<16x64xf32>
    %cst_21 = arith.constant 1.06140542 : f32
    %46 = vector.broadcast %cst_21 : f32 to vector<16x64xf32>
    %47 = arith.mulf %46, %45 : vector<16x64xf32>
    %cst_22 = arith.constant -1.45315206 : f32
    %48 = vector.broadcast %cst_22 : f32 to vector<16x64xf32>
    %49 = arith.addf %47, %48 : vector<16x64xf32>
    %50 = arith.mulf %49, %45 : vector<16x64xf32>
    %cst_23 = arith.constant 1.42141378 : f32
    %51 = vector.broadcast %cst_23 : f32 to vector<16x64xf32>
    %52 = arith.addf %50, %51 : vector<16x64xf32>
    %53 = arith.mulf %52, %45 : vector<16x64xf32>
    %cst_24 = arith.constant -0.284496725 : f32
    %54 = vector.broadcast %cst_24 : f32 to vector<16x64xf32>
    %55 = arith.addf %53, %54 : vector<16x64xf32>
    %56 = arith.mulf %55, %45 : vector<16x64xf32>
    %cst_25 = arith.constant 0.254829586 : f32
    %57 = vector.broadcast %cst_25 : f32 to vector<16x64xf32>
    %58 = arith.addf %56, %57 : vector<16x64xf32>
    %59 = arith.mulf %58, %45 : vector<16x64xf32>
    %cst_26 = arith.constant 0.000000e+00 : f32
    %60 = vector.broadcast %cst_26 : f32 to vector<16x64xf32>
    %61 = arith.subf %60, %40 : vector<16x64xf32>
    %62 = arith.mulf %61, %40 : vector<16x64xf32>
    %63 = math.exp %62 : vector<16x64xf32>
    %64 = arith.mulf %59, %63 : vector<16x64xf32>
    %cst_27 = arith.constant 1.000000e+00 : f32
    %65 = vector.broadcast %cst_27 : f32 to vector<16x64xf32>
    %66 = arith.subf %65, %64 : vector<16x64xf32>
    %67 = arith.mulf %39, %66 : vector<16x64xf32>
    %cst_28 = arith.constant 1.000000e+00 : f32
    %68 = vector.broadcast %cst_28 : f32 to vector<16x64xf32>
    %69 = arith.addf %68, %67 : vector<16x64xf32>
    %70 = arith.mulf %32, %69 : vector<16x64xf32>
    %71 = arith.truncf %70 : vector<16x64xf32> to vector<16x64xbf16>
    %c0_29 = arith.constant 0 : index
    %c0_30 = arith.constant 0 : index
    %72 = vector.load %arg6[%c0_29, %c0_30] : memref<64x32xbf16, #tpu.memory_space<vmem>>, vector<64x32xbf16>
    %cst_31 = arith.constant dense<0.000000e+00> : vector<16x32xf32>
    %73 = tpu.matmul %71, %72, %cst_31 {dimension_numbers = #tpu.dot_dimension_numbers<[1], [0], [0], [1], [0, 0, 1, 1], [], []>} : vector<16x64xbf16>, vector<64x32xbf16>, vector<16x32xf32> -> vector<16x32xf32>
    %c0_32 = arith.constant 0 : index
    %c0_33 = arith.constant 0 : index
    %74 = vector.load %arg7[%c0_32, %c0_33] : memref<1x32xf32, #tpu.memory_space<vmem>>, vector<1x32xf32>
    %75 = vector.broadcast %74 : vector<1x32xf32> to vector<16x32xf32>
    %76 = arith.addf %73, %75 : vector<16x32xf32>
    %77 = arith.addf %0, %76 : vector<16x32xf32>
    %c0_34 = arith.constant 0 : index
    %c0_35 = arith.constant 0 : index
    %78 = vector.load %arg8[%c0_34, %c0_35] : memref<16x32xf32, #tpu.memory_space<vmem>>, vector<16x32xf32>
    tpu.vector_store %arg8[%c0_34, %c0_35], %77 {strides = array<i32>} : memref<16x32xf32, #tpu.memory_space<vmem>>, vector<16x32xf32>,
    return
  }
  func.func @transform_0(%arg0: i32) -> (i32, i32) {
    %c0_i32 = arith.constant 0 : i32
    %c0_i32_0 = arith.constant 0 : i32
    return %arg0, %c0_i32 : i32, i32
  }
  func.func @transform_1(%arg0: i32) -> (i32, i32) {
    %c0_i32 = arith.constant 0 : i32
    %c0_i32_0 = arith.constant 0 : i32
    %c0_i32_1 = arith.constant 0 : i32
    return %c0_i32, %c0_i32_0 : i32, i32
  }
  func.func @transform_2(%arg0: i32) -> (i32, i32) {
    %c0_i32 = arith.constant 0 : i32
    %c0_i32_0 = arith.constant 0 : i32
    %c0_i32_1 = arith.constant 0 : i32
    return %c0_i32, %c0_i32_0 : i32, i32
  }
  func.func @transform_3(%arg0: i32) -> (i32, i32) {
    %c0_i32 = arith.constant 0 : i32
    %c0_i32_0 = arith.constant 0 : i32
    %c0_i32_1 = arith.constant 0 : i32
    return %c0_i32, %c0_i32_0 : i32, i32
  }
  func.func @transform_4(%arg0: i32) -> (i32, i32) {
    %c0_i32 = arith.constant 0 : i32
    %c0_i32_0 = arith.constant 0 : i32
    %c0_i32_1 = arith.constant 0 : i32
    return %c0_i32, %c0_i32_0 : i32, i32
  }
  func.func @transform_5(%arg0: i32) -> (i32, i32) {
    %c0_i32 = arith.constant 0 : i32
    %c0_i32_0 = arith.constant 0 : i32
    %c0_i32_1 = arith.constant 0 : i32
    return %c0_i32, %c0_i32_0 : i32, i32
  }
  func.func @transform_6(%arg0: i32) -> (i32, i32) {
    %c0_i32 = arith.constant 0 : i32
    %c0_i32_0 = arith.constant 0 : i32
    %c0_i32_1 = arith.constant 0 : i32
    return %c0_i32, %c0_i32_0 : i32, i32
  }
  func.func @transform_7(%arg0: i32) -> (i32, i32) {
    %c0_i32 = arith.constant 0 : i32
    %c0_i32_0 = arith.constant 0 : i32
    return %arg0, %c0_i32 : i32, i32
  }
}

</mosaic_0001>

<llo_original>
// kernel: decoder_forward.7
$region0: #{decoder_forward.7}
  #allocation0 [shape = 'u32[]', space=smem, size = 0x4, offset = 0x4, fixed_abs, tag = 'smem constant byte address 0x4 - core index']
  #allocation1 [shape = 'u32[144,128]{1,0:T(1,128)}', space=vmem, size = 0x12000, scoped, tag = 'internal scratch']
  %s0 = inlined_call_operand.vmem [shape: f32[16,16], index: 0, kind: input, shape index: {}]
  %s1 = inlined_call_operand.vmem [shape: bf16[16,32], index: 1, kind: input, shape index: {}]
  %s2 = inlined_call_operand.vmem [shape: f32[1,32], index: 2, kind: input, shape index: {}]
  %s3 = inlined_call_operand.vmem [shape: f32[16,32], index: 3, kind: output, shape index: {}]
  %s4 = sld [smem:[#allocation0]]
  $region22: #{decoder_forward.7} parent=0
    _
  %s6 = ssub.s32 1, %s4
  %s7 = scalar_select 0, %s6, %s4
  // Predicated region
  $region2: #{decoder_forward.7} parent=0 // pred_check
    _
  $region3: #{decoder_forward.7} parent=0 // pred_check_branch
    %9 = sbr.rel (0) target = $region5
  $region4: #{decoder_forward.7} parent=0 // pred_region
    _
  $region5: #{decoder_forward.7} parent=0 // pred_fallthru
    _
  // Predicated region
  $region6: #{decoder_forward.7} parent=0 // pred_check
    _
  $region7: #{decoder_forward.7} parent=0 // pred_check_branch
    %11 = sbr.rel (0) target = $region9
  $region8: #{decoder_forward.7} parent=0 // pred_region
    _
  $region9: #{decoder_forward.7} parent=0 // pred_fallthru
    _
  // Predicated region
  $region10: #{decoder_forward.7} parent=0 // pred_check
    _
  $region11: #{decoder_forward.7} parent=0 // pred_check_branch
    %13 = sbr.rel (0) target = $region13
  $region12: #{decoder_forward.7} parent=0 // pred_region
    _
  $region13: #{decoder_forward.7} parent=0 // pred_fallthru
    _
  %v15 = vld [vmem:[%s0] sm:$0xff]
  %v16 = vld [vmem:[%s0 + $0x8] sm:$0xff]
  %v17 = vpack.c.bf16 %v16, %v15
  %v18 = vld [vmem:[%s1] sm:$0xf]
  %v19 = vld [vmem:[%s1 + $0x4] sm:$0xf]
  %v20 = vld [vmem:[%s2] sm:$0x1]
  %v22 = vlaneseq
  %v23 = vshrl.u32 %v22, 7
  %v24 = vsub.s32 0, %v23
  %v25 = vrot.slane %v20, %v24
  %v29 = vunpack.c.l.b16 %v18
  %v30 = vunpack.c.l.b16 %v19
  %v31 = vpack.c.b16 %v30, %v29
  %vm33 = vcmask 130048
  %v35 = vsel %vm33, %v17, 0
  %37 = vmatprep.subr.bf16.mxu0 0
  %38 = vmatpush1.bf16.msra.mxu0 %v31
  %39 = vmatprep.subr.bf16.mxu0 0
  %40 = vmatpush1.bf16.msra.mxu0 0
  %41 = vmatprep.subr.bf16.mxu0 0
  %42 = vmatpush1.bf16.msra.mxu0 0
  %43 = vmatprep.subr.bf16.mxu0 0
  %44 = vmatpush1.bf16.msra.mxu0 0
  %45 = vmatprep.subr.bf16.mxu0 0
  %46 = vmatpush1.bf16.msra.mxu0 0
  %47 = vmatprep.subr.bf16.mxu0 0
  %48 = vmatpush1.bf16.msra.mxu0 0
  %49 = vmatprep.subr.bf16.mxu0 0
  %50 = vmatpush1.bf16.msra.mxu0 0
  %51 = vmatprep.subr.bf16.mxu0 0
  %52 = vmatpush1.bf16.msra.mxu0 0
  %53 = vmatprep.subr.bf16.mxu0 0
  %54 = vmatpush1.bf16.msra.mxu0 0
  %55 = vmatprep.subr.bf16.mxu0 0
  %56 = vmatpush1.bf16.msra.mxu0 0
  %57 = vmatprep.subr.bf16.mxu0 0
  %58 = vmatpush1.bf16.msra.mxu0 0
  %59 = vmatprep.subr.bf16.mxu0 0
  %60 = vmatpush1.bf16.msra.mxu0 0
  %61 = vmatprep.subr.bf16.mxu0 0
  %62 = vmatpush1.bf16.msra.mxu0 0
  %63 = vmatprep.subr.bf16.mxu0 0
  %64 = vmatpush1.bf16.msra.mxu0 0
  %65 = vmatprep.subr.bf16.mxu0 0
  %66 = vmatpush1.bf16.msra.mxu0 0
  %67 = vmatprep.subr.bf16.mxu0 0
  %68 = vmatpush1.bf16.msra.mxu0 0
  %69 = vmatprep.mubr.bf16.mxu0 0
  %70 = vmatmul.mubr.bf16.gmra.mrb[0].mxu0 %v35
  %v71 = vpop.f32.mrb[0].mxu0
  %v72 = vadd.f32 %v25, %v71
  %v73 = vpop.f32.mrb[0].mxu0
  %v74 = vpop.f32.mrb[0].mxu0
  %v75 = vadd.f32 %v25, %v74
  %v76 = vpop.f32.mrb[0].mxu0
  %77 = vdwg.mxu0
  %vm78 = vcmask 261120
  %79 = vst.msk [vmem:[%s3] sm:$0xff] %vm78, %v72
  %80 = vst.msk [vmem:[%s3 + $0x8] sm:$0xff] %vm78, %v75
  // Predicated region
  $region14: #{decoder_forward.7} parent=0 // pred_check
    _
  $region15: #{decoder_forward.7} parent=0 // pred_check_branch
    %82 = sbr.rel (0) target = $region17
  $region16: #{decoder_forward.7} parent=0 // pred_region
    _
  $region17: #{decoder_forward.7} parent=0 // pred_fallthru
    _
  // Predicated region
  $region18: #{decoder_forward.7} parent=0 // pred_check
    _
  $region19: #{decoder_forward.7} parent=0 // pred_check_branch
    %84 = sbr.rel (0) target = $region21
  $region20: #{decoder_forward.7} parent=0 // pred_region
    _
  $region21: #{decoder_forward.7} parent=0 // pred_fallthru
    _

// kernel: decoder_forward.9
$region0: #{decoder_forward.9}
  #allocation0 [shape = 'u32[]', space=smem, size = 0x4, offset = 0x4, fixed_abs, tag = 'smem constant byte address 0x4 - core index']
  #allocation1 [shape = 'u32[144,128]{1,0:T(1,128)}', space=vmem, size = 0x12000, scoped, tag = 'internal scratch']
  %s0 = inlined_call_operand.vmem [shape: f32[2,8,32], index: 0, kind: input, shape index: {}]
  %s1 = inlined_call_operand.vmem [shape: f32[2,12,32], index: 1, kind: input, shape index: {}]
  %s2 = inlined_call_operand.vmem [shape: f32[1,32], index: 2, kind: input, shape index: {}]
  %s3 = inlined_call_operand.vmem [shape: f32[1,32], index: 3, kind: input, shape index: {}]
  %s4 = inlined_call_operand.vmem [shape: bf16[32,32], index: 4, kind: input, shape index: {}]
  %s5 = inlined_call_operand.vmem [shape: f32[1,32], index: 5, kind: input, shape index: {}]
  %s6 = inlined_call_operand.vmem [shape: bf16[32,64], index: 6, kind: input, shape index: {}]
  %s7 = inlined_call_operand.vmem [shape: f32[1,64], index: 7, kind: input, shape index: {}]
  %s8 = inlined_call_operand.vmem [shape: bf16[32,32], index: 8, kind: input, shape index: {}]
  %s9 = inlined_call_operand.vmem [shape: f32[1,32], index: 9, kind: input, shape index: {}]
  %s10 = inlined_call_operand.vmem [shape: f32[2,1,12], index: 10, kind: input, shape index: {}]
  %s11 = inlined_call_operand.vmem [shape: f32[2,8,32], index: 11, kind: output, shape index: {}]
  %s12 = sld [smem:[#allocation0]]
  $region77: #{decoder_forward.9} parent=0
    _
  %s14 = ssub.s32 1, %s12
  %s15 = scalar_select 0, %s14, %s12
  loop: start=0, step=1, limit=4
  $region2: #{decoder_forward.9} parent=0 // loop_pre_header
    _
  $region3: #{decoder_forward.9} parent=0 // loop_header
    %s17 = sphi 0, %s21
    %p18 = scmp.ge.s32.totalorder %s17, 4
    %s27 = sphi 0, %s29
    %s30 = sphi 0, %s27
    %s31 = sphi 0, %s30
    %s47 = sphi 0, %s31
    %s53 = sphi 0, %s55
    %s56 = sphi 0, %s53
    %s57 = sphi 0, %s56
    %s73 = sphi 0, %s57
    %s77 = sphi 0, %s77
    %s79 = sphi 0, %s77
    %s80 = sphi 0, %s79
    %s94 = sphi 0, %s80
    %s98 = sphi 0, %s98
    %s100 = sphi 0, %s98
    %s101 = sphi 0, %s100
    %s115 = sphi 0, %s101
    %s119 = sphi 0, %s119
    %s121 = sphi 0, %s119
    %s122 = sphi 0, %s121
    %s136 = sphi 0, %s122
    %s140 = sphi 0, %s140
    %s142 = sphi 0, %s140
    %s143 = sphi 0, %s142
    %s157 = sphi 0, %s143
    %s161 = sphi 0, %s161
    %s163 = sphi 0, %s161
    %s164 = sphi 0, %s163
    %s178 = sphi 0, %s164
    %s182 = sphi 0, %s182
    %s184 = sphi 0, %s182
    %s185 = sphi 0, %s184
    %s199 = sphi 0, %s185
    %s203 = sphi 0, %s203
    %s205 = sphi 0, %s203
    %s206 = sphi 0, %s205
    %s220 = sphi 0, %s206
    %s224 = sphi 0, %s224
    %s226 = sphi 0, %s224
    %s227 = sphi 0, %s226
    %s241 = sphi 0, %s227
    %s247 = sphi 0, %s249
    %s250 = sphi 0, %s247
    %s251 = sphi 0, %s250
    %s267 = sphi 0, %s251
    %s273 = sphi 0, %s275
    %s276 = sphi 0, %s273
    %s277 = sphi 0, %s276
    %s293 = sphi 0, %s277
  $region4: #{decoder_forward.9} parent=0 // loop_header_branch
    %20 = sbr.rel (%p18) target = $region8
  $region5: #{decoder_forward.9} parent=0 // loop_body
    %s22 = ssub.s32 %s17, 1
    %s23 = ssub.s32 %s17, 2
    %s24 = sadd.s32 %s17, 1
    %s25 = ssub.s32 %s17, %s24
    %p26 = scmp.eq.s32.totalorder %s25, 0
    %s28 = sadd.s32 %s27, 1
    %s29 = scalar_select %p26, %s27, %s28
    %p32 = pneg %p26
    %p33 = scmp.eq.s32.totalorder %s17, 1
    %p34 = por %p32, %p33
    %p35 = scmp.ne.s32.totalorder %s27, %s30
    %p36 = scmp.eq.s32.totalorder %s17, 0
    %p37 = por %p35, %p36
    %p38 = scmp.ne.s32.totalorder %s27, %s30
    %p39 = scmp.eq.s32.totalorder %s22, 1
    %p40 = por %p38, %p39
    %p41 = scmp.ne.s32.totalorder %s30, %s31
    %p42 = scmp.eq.s32.totalorder %s22, 0
    %p43 = por %p41, %p42
    %p44 = scmp.ne.s32.totalorder %s30, %s31
    %p45 = scmp.eq.s32.totalorder %s23, 1
    %p46 = por %p44, %p45
    %p48 = scmp.ne.s32.totalorder %s31, %s47
    %p49 = scmp.eq.s32.totalorder %s23, 0
    %p50 = por %p48, %p49
    %s51 = ssub.s32 %s17, %s24
    %p52 = scmp.eq.s32.totalorder %s51, 0
    %s54 = sadd.s32 %s53, 1
    %s55 = scalar_select %p52, %s53, %s54
    %p58 = pneg %p52
    %p59 = scmp.eq.s32.totalorder %s17, 1
    %p60 = por %p58, %p59
    %p61 = scmp.ne.s32.totalorder %s53, %s56
    %p62 = scmp.eq.s32.totalorder %s17, 0
    %p63 = por %p61, %p62
    %p64 = scmp.ne.s32.totalorder %s53, %s56
    %p65 = scmp.eq.s32.totalorder %s22, 1
    %p66 = por %p64, %p65
    %p67 = scmp.ne.s32.totalorder %s56, %s57
    %p68 = scmp.eq.s32.totalorder %s22, 0
    %p69 = por %p67, %p68
    %p70 = scmp.ne.s32.totalorder %s56, %s57
    %p71 = scmp.eq.s32.totalorder %s23, 1
    %p72 = por %p70, %p71
    %p74 = scmp.ne.s32.totalorder %s57, %s73
    %p75 = scmp.eq.s32.totalorder %s23, 0
    %p76 = por %p74, %p75
    %s78 = sadd.s32 %s77, 1
    %p81 = scmp.eq.s32.totalorder %s17, 1
    %p82 = scmp.ne.s32.totalorder %s77, %s79
    %p83 = scmp.eq.s32.totalorder %s17, 0
    %p84 = por %p82, %p83
    %p85 = scmp.ne.s32.totalorder %s77, %s79
    %p86 = scmp.eq.s32.totalorder %s22, 1
    %p87 = por %p85, %p86
    %p88 = scmp.ne.s32.totalorder %s79, %s80
    %p89 = scmp.eq.s32.totalorder %s22, 0
    %p90 = por %p88, %p89
    %p91 = scmp.ne.s32.totalorder %s79, %s80
    %p92 = scmp.eq.s32.totalorder %s23, 1
    %p93 = por %p91, %p92
    %p95 = scmp.ne.s32.totalorder %s80, %s94
    %p96 = scmp.eq.s32.totalorder %s23, 0
    %p97 = por %p95, %p96
    %s99 = sadd.s32 %s98, 1
    %p102 = scmp.eq.s32.totalorder %s17, 1
    %p103 = scmp.ne.s32.totalorder %s98, %s100
    %p104 = scmp.eq.s32.totalorder %s17, 0
    %p105 = por %p103, %p104
    %p106 = scmp.ne.s32.totalorder %s98, %s100
    %p107 = scmp.eq.s32.totalorder %s22, 1
    %p108 = por %p106, %p107
    %p109 = scmp.ne.s32.totalorder %s100, %s101
    %p110 = scmp.eq.s32.totalorder %s22, 0
    %p111 = por %p109, %p110
    %p112 = scmp.ne.s32.totalorder %s100, %s101
    %p113 = scmp.eq.s32.totalorder %s23, 1
    %p114 = por %p112, %p113
    %p116 = scmp.ne.s32.totalorder %s101, %s115
    %p117 = scmp.eq.s32.totalorder %s23, 0
    %p118 = por %p116, %p117
    %s120 = sadd.s32 %s119, 1
    %p123 = scmp.eq.s32.totalorder %s17, 1
    %p124 = scmp.ne.s32.totalorder %s119, %s121
    %p125 = scmp.eq.s32.totalorder %s17, 0
    %p126 = por %p124, %p125
    %p127 = scmp.ne.s32.totalorder %s119, %s121
    %p128 = scmp.eq.s32.totalorder %s22, 1
    %p129 = por %p127, %p128
    %p130 = scmp.ne.s32.totalorder %s121, %s122
    %p131 = scmp.eq.s32.totalorder %s22, 0
    %p132 = por %p130, %p131
    %p133 = scmp.ne.s32.totalorder %s121, %s122
    %p134 = scmp.eq.s32.totalorder %s23, 1
    %p135 = por %p133, %p134
    %p137 = scmp.ne.s32.totalorder %s122, %s136
    %p138 = scmp.eq.s32.totalorder %s23, 0
    %p139 = por %p137, %p138
    %s141 = sadd.s32 %s140, 1
    %p144 = scmp.eq.s32.totalorder %s17, 1
    %p145 = scmp.ne.s32.totalorder %s140, %s142
    %p146 = scmp.eq.s32.totalorder %s17, 0
    %p147 = por %p145, %p146
    %p148 = scmp.ne.s32.totalorder %s140, %s142
    %p149 = scmp.eq.s32.totalorder %s22, 1
    %p150 = por %p148, %p149
    %p151 = scmp.ne.s32.totalorder %s142, %s143
    %p152 = scmp.eq.s32.totalorder %s22, 0
    %p153 = por %p151, %p152
    %p154 = scmp.ne.s32.totalorder %s142, %s143
    %p155 = scmp.eq.s32.totalorder %s23, 1
    %p156 = por %p154, %p155
    %p158 = scmp.ne.s32.totalorder %s143, %s157
    %p159 = scmp.eq.s32.totalorder %s23, 0
    %p160 = por %p158, %p159
    %s162 = sadd.s32 %s161, 1
    %p165 = scmp.eq.s32.totalorder %s17, 1
    %p166 = scmp.ne.s32.totalorder %s161, %s163
    %p167 = scmp.eq.s32.totalorder %s17, 0
    %p168 = por %p166, %p167
    %p169 = scmp.ne.s32.totalorder %s161, %s163
    %p170 = scmp.eq.s32.totalorder %s22, 1
    %p171 = por %p169, %p170
    %p172 = scmp.ne.s32.totalorder %s163, %s164
    %p173 = scmp.eq.s32.totalorder %s22, 0
    %p174 = por %p172, %p173
    %p175 = scmp.ne.s32.totalorder %s163, %s164
    %p176 = scmp.eq.s32.totalorder %s23, 1
    %p177 = por %p175, %p176
    %p179 = scmp.ne.s32.totalorder %s164, %s178
    %p180 = scmp.eq.s32.totalorder %s23, 0
    %p181 = por %p179, %p180
    %s183 = sadd.s32 %s182, 1
    %p186 = scmp.eq.s32.totalorder %s17, 1
    %p187 = scmp.ne.s32.totalorder %s182, %s184
    %p188 = scmp.eq.s32.totalorder %s17, 0
    %p189 = por %p187, %p188
    %p190 = scmp.ne.s32.totalorder %s182, %s184
    %p191 = scmp.eq.s32.totalorder %s22, 1
    %p192 = por %p190, %p191
    %p193 = scmp.ne.s32.totalorder %s184, %s185
    %p194 = scmp.eq.s32.totalorder %s22, 0
    %p195 = por %p193, %p194
    %p196 = scmp.ne.s32.totalorder %s184, %s185
    %p197 = scmp.eq.s32.totalorder %s23, 1
    %p198 = por %p196, %p197
    %p200 = scmp.ne.s32.totalorder %s185, %s199
    %p201 = scmp.eq.s32.totalorder %s23, 0
    %p202 = por %p200, %p201
    %s204 = sadd.s32 %s203, 1
    %p207 = scmp.eq.s32.totalorder %s17, 1
    %p208 = scmp.ne.s32.totalorder %s203, %s205
    %p209 = scmp.eq.s32.totalorder %s17, 0
    %p210 = por %p208, %p209
    %p211 = scmp.ne.s32.totalorder %s203, %s205
    %p212 = scmp.eq.s32.totalorder %s22, 1
    %p213 = por %p211, %p212
    %p214 = scmp.ne.s32.totalorder %s205, %s206
    %p215 = scmp.eq.s32.totalorder %s22, 0
    %p216 = por %p214, %p215
    %p217 = scmp.ne.s32.totalorder %s205, %s206
    %p218 = scmp.eq.s32.totalorder %s23, 1
    %p219 = por %p217, %p218
    %p221 = scmp.ne.s32.totalorder %s206, %s220
    %p222 = scmp.eq.s32.totalorder %s23, 0
    %p223 = por %p221, %p222
    %s225 = sadd.s32 %s224, 1
    %p228 = scmp.eq.s32.totalorder %s17, 1
    %p229 = scmp.ne.s32.totalorder %s224, %s226
    %p230 = scmp.eq.s32.totalorder %s17, 0
    %p231 = por %p229, %p230
    %p232 = scmp.ne.s32.totalorder %s224, %s226
    %p233 = scmp.eq.s32.totalorder %s22, 1
    %p234 = por %p232, %p233
    %p235 = scmp.ne.s32.totalorder %s226, %s227
    %p236 = scmp.eq.s32.totalorder %s22, 0
    %p237 = por %p235, %p236
    %p238 = scmp.ne.s32.totalorder %s226, %s227
    %p239 = scmp.eq.s32.totalorder %s23, 1
    %p240 = por %p238, %p239
    %p242 = scmp.ne.s32.totalorder %s227, %s241
    %p243 = scmp.eq.s32.totalorder %s23, 0
    %p244 = por %p242, %p243
    %s245 = ssub.s32 %s17, %s24
    %p246 = scmp.eq.s32.totalorder %s245, 0
    %s248 = sadd.s32 %s247, 1
    %s249 = scalar_select %p246, %s247, %s248
    %p252 = pneg %p246
    %p253 = scmp.eq.s32.totalorder %s17, 1
    %p254 = por %p252, %p253
    %p255 = scmp.ne.s32.totalorder %s247, %s250
    %p256 = scmp.eq.s32.totalorder %s17, 0
    %p257 = por %p255, %p256
    %p258 = scmp.ne.s32.totalorder %s247, %s250
    %p259 = scmp.eq.s32.totalorder %s22, 1
    %p260 = por %p258, %p259
    %p261 = scmp.ne.s32.totalorder %s250, %s251
    %p262 = scmp.eq.s32.totalorder %s22, 0
    %p263 = por %p261, %p262
    %p264 = scmp.ne.s32.totalorder %s250, %s251
    %p265 = scmp.eq.s32.totalorder %s23, 1
    %p266 = por %p264, %p265
    %p268 = scmp.ne.s32.totalorder %s251, %s267
    %p269 = scmp.eq.s32.totalorder %s23, 0
    %p270 = por %p268, %p269
    %s271 = ssub.s32 %s17, %s24
    %p272 = scmp.eq.s32.totalorder %s271, 0
    %s274 = sadd.s32 %s273, 1
    %s275 = scalar_select %p272, %s273, %s274
    %p278 = pneg %p272
    %p279 = scmp.eq.s32.totalorder %s17, 1
    %p280 = por %p278, %p279
    %p281 = scmp.ne.s32.totalorder %s273, %s276
    %p282 = scmp.eq.s32.totalorder %s17, 0
    %p283 = por %p281, %p282
    %p284 = scmp.ne.s32.totalorder %s273, %s276
    %p285 = scmp.eq.s32.totalorder %s22, 1
    %p286 = por %p284, %p285
    %p287 = scmp.ne.s32.totalorder %s276, %s277
    %p288 = scmp.eq.s32.totalorder %s22, 0
    %p289 = por %p287, %p288
    %p290 = scmp.ne.s32.totalorder %s276, %s277
    %p291 = scmp.eq.s32.totalorder %s23, 1
    %p292 = por %p290, %p291
    %p294 = scmp.ne.s32.totalorder %s277, %s293
    %p295 = scmp.eq.s32.totalorder %s23, 0
    %p296 = por %p294, %p295
    %p297 = scmp.le.s32.totalorder 1, %s17
    %p298 = scmp.lt.s32.totalorder %s17, 3
    %p299 = pnand %p297, %p298
    %p300 = pneg %p299
    // Predicated region
    $region9: #{decoder_forward.9} parent=5 // pred_check
      _
    $region10: #{decoder_forward.9} parent=5 // pred_check_branch
      %302 = sbr.rel (%p299) target = $region12
    $region11: #{decoder_forward.9} parent=5 // pred_region
      %s303 = ssub.s32 %s17, 1
      // Predicated region
      $region13: #{decoder_forward.9} parent=11 // pred_check
        %p304 = pneg %p90
      $region14: #{decoder_forward.9} parent=11 // pred_check_branch
        %306 = sbr.rel (%p304) target = $region16
      $region15: #{decoder_forward.9} parent=11 // pred_region
        _
      $region16: #{decoder_forward.9} parent=11 // pred_fallthru
        _
      // Predicated region
      $region17: #{decoder_forward.9} parent=11 // pred_check
        %p307 = pneg %p111
      $region18: #{decoder_forward.9} parent=11 // pred_check_branch
        %309 = sbr.rel (%p307) target = $region20
      $region19: #{decoder_forward.9} parent=11 // pred_region
        _
      $region20: #{decoder_forward.9} parent=11 // pred_fallthru
        _
      // Predicated region
      $region21: #{decoder_forward.9} parent=11 // pred_check
        %p310 = pneg %p132
      $region22: #{decoder_forward.9} parent=11 // pred_check_branch
        %312 = sbr.rel (%p310) target = $region24
      $region23: #{decoder_forward.9} parent=11 // pred_region
        _
      $region24: #{decoder_forward.9} parent=11 // pred_fallthru
        _
      // Predicated region
      $region25: #{decoder_forward.9} parent=11 // pred_check
        %p313 = pneg %p153
      $region26: #{decoder_forward.9} parent=11 // pred_check_branch
        %315 = sbr.rel (%p313) target = $region28
      $region27: #{decoder_forward.9} parent=11 // pred_region
        _
      $region28: #{decoder_forward.9} parent=11 // pred_fallthru
        _
      // Predicated region
      $region29: #{decoder_forward.9} parent=11 // pred_check
        %p316 = pneg %p174
      $region30: #{decoder_forward.9} parent=11 // pred_check_branch
        %318 = sbr.rel (%p316) target = $region32
      $region31: #{decoder_forward.9} parent=11 // pred_region
        _
      $region32: #{decoder_forward.9} parent=11 // pred_fallthru
        _
      // Predicated region
      $region33: #{decoder_forward.9} parent=11 // pred_check
        %p319 = pneg %p195
      $region34: #{decoder_forward.9} parent=11 // pred_check_branch
        %321 = sbr.rel (%p319) target = $region36
      $region35: #{decoder_forward.9} parent=11 // pred_region
        _
      $region36: #{decoder_forward.9} parent=11 // pred_fallthru
        _
      // Predicated region
      $region37: #{decoder_forward.9} parent=11 // pred_check
        %p322 = pneg %p216
      $region38: #{decoder_forward.9} parent=11 // pred_check_branch
        %324 = sbr.rel (%p322) target = $region40
      $region39: #{decoder_forward.9} parent=11 // pred_region
        _
      $region40: #{decoder_forward.9} parent=11 // pred_fallthru
        _
      // Predicated region
      $region41: #{decoder_forward.9} parent=11 // pred_check
        %p325 = pneg %p237
      $region42: #{decoder_forward.9} parent=11 // pred_check_branch
        %327 = sbr.rel (%p325) target = $region44
      $region43: #{decoder_forward.9} parent=11 // pred_region
        _
      $region44: #{decoder_forward.9} parent=11 // pred_fallthru
        _
    $region12: #{decoder_forward.9} parent=5 // pred_fallthru
      _
    %p328 = scmp.lt.s32.totalorder %s17, 2
    // Predicated region
    $region45: #{decoder_forward.9} parent=5 // pred_check
      %p329 = pneg %p328
    $region46: #{decoder_forward.9} parent=5 // pred_check_branch
      %331 = sbr.rel (%p329) target = $region48
    $region47: #{decoder_forward.9} parent=5 // pred_region
      // Predicated region
      $region49: #{decoder_forward.9} parent=47 // pred_check
        %p332 = pneg %p37
      $region50: #{decoder_forward.9} parent=47 // pred_check_branch
        %334 = sbr.rel (%p332) target = $region52
      $region51: #{decoder_forward.9} parent=47 // pred_region
        %p335 = scmp.lt.s32.totalorder %s17, 1
        %s336 = scalar_select %p335, %s17, 1
        %s337 = smul.addr %s336, 8
        %s338 = scalar_lea.vmem %s0, %s337
      $region52: #{decoder_forward.9} parent=47 // pred_fallthru
        _
      // Predicated region
      $region53: #{decoder_forward.9} parent=47 // pred_check
        %p339 = pneg %p63
      $region54: #{decoder_forward.9} parent=47 // pred_check_branch
        %341 = sbr.rel (%p339) target = $region56
      $region55: #{decoder_forward.9} parent=47 // pred_region
        %p342 = scmp.lt.s32.totalorder %s17, 1
        %s343 = scalar_select %p342, %s17, 1
        %s344 = smul.addr %s343, 2
        %s345 = smul.addr %s344, 8
        %s346 = scalar_lea.vmem %s1, %s345
      $region56: #{decoder_forward.9} parent=47 // pred_fallthru
        _
      // Predicated region
      $region57: #{decoder_forward.9} parent=47 // pred_check
        %p347 = pneg %p257
      $region58: #{decoder_forward.9} parent=47 // pred_check_branch
        %349 = sbr.rel (%p347) target = $region60
      $region59: #{decoder_forward.9} parent=47 // pred_region
        %p350 = scmp.lt.s32.totalorder %s17, 1
        %s351 = scalar_select %p350, %s17, 1
        %s352 = scalar_lea.vmem %s10, %s351
      $region60: #{decoder_forward.9} parent=47 // pred_fallthru
        _
    $region48: #{decoder_forward.9} parent=5 // pred_fallthru
      _
    %p353 = scmp.le.s32.totalorder 1, %s17
    %p354 = scmp.lt.s32.totalorder %s17, 3
    %p355 = pnand %p353, %p354
    %p356 = pneg %p355
    // Predicated region
    $region61: #{decoder_forward.9} parent=5 // pred_check
      _
    $region62: #{decoder_forward.9} parent=5 // pred_check_branch
      %358 = sbr.rel (%p355) target = $region64
    $region63: #{decoder_forward.9} parent=5 // pred_region
      %s359 = ssub.s32 %s17, 1
      %p360 = scmp.lt.s32.totalorder %s22, 1
      %s361 = scalar_select %p360, %s22, 1
      %s362 = smul.addr %s361, 8
      %s363 = scalar_lea.vmem %s0, %s362
      %p364 = pneg %p43
      %p365 = pneg %p40
      %p366 = scmp.lt.s32.totalorder %s22, 1
      %s367 = scalar_select %p366, %s22, 1
      %s368 = smul.addr %s367, 2
      %s369 = smul.addr %s368, 8
      %s370 = scalar_lea.vmem %s1, %s369
      %p371 = pneg %p69
      %p372 = pneg %p66
      %p373 = pneg %p90
      %p374 = pneg %p87
      %p375 = pneg %p111
      %p376 = pneg %p108
      %p377 = pneg %p132
      %p378 = pneg %p129
      %p379 = pneg %p153
      %p380 = pneg %p150
      %p381 = pneg %p174
      %p382 = pneg %p171
      %p383 = pneg %p195
      %p384 = pneg %p192
      %p385 = pneg %p216
      %p386 = pneg %p213
      %p387 = pneg %p237
      %p388 = pneg %p234
      %p389 = scmp.lt.s32.totalorder %s22, 1
      %s390 = scalar_select %p389, %s22, 1
      %s391 = scalar_lea.vmem %s10, %s390
      %p392 = pneg %p263
      %p393 = pneg %p260
      %p394 = pneg %p289
      %p395 = pneg %p286
      %p396 = scmp.lt.s32.totalorder %s22, 1
      %s397 = scalar_select %p396, %s22, 1
      %s398 = smul.addr %s397, 8
      %s399 = scalar_lea.vmem %s11, %s398
      %p400 = scmp.lt.s32.totalorder %s22, 1
      %s401 = scalar_select %p400, %s22, 1
      %s402 = smul.addr %s401, 8
      %s403 = scalar_lea.vmem %s0, %s402
      %p404 = scmp.lt.s32.totalorder %s22, 1
      %s405 = scalar_select %p404, %s22, 1
      %s406 = smul.addr %s405, 2
      %s407 = smul.addr %s406, 8
      %s408 = scalar_lea.vmem %s1, %s407
      %p409 = scmp.lt.s32.totalorder %s22, 1
      %s410 = scalar_select %p409, %s22, 1
      %s411 = scalar_lea.vmem %s10, %s410
      %p412 = scmp.lt.s32.totalorder %s22, 1
      %s413 = scalar_select %p412, %s22, 1
      %s414 = smul.addr %s413, 8
      %s415 = scalar_lea.vmem %s11, %s414
      %v417 = vld [vmem:[%s403] sm:$0xff]
      %v418 = vld [vmem:[%s408] sm:$0xff]
      %v419 = vld [vmem:[%s408 + $0x8] sm:$0xf]
      %v420 = vld [vmem:[%s2] sm:$0x1]
      %v421 = vld [vmem:[%s3] sm:$0x1]
      %vm422 = vcmask 261120
      %v423 = vsel %vm422, %v417, 0.0
      %424 = vadd.xlane.f32.xlu0 %v423
      %v425 = vpop.xlane.xlu0 %424
      %v426 = vrcp.pop 32.0
      %v427 = vmul.f32 %v425, %v426
      %v428 = vsub.f32 %v417, %v427
      %v429 = vmul.f32 %v428, %v428
      %v430 = vsel %vm422, %v429, 0.0
      %431 = vadd.xlane.f32.xlu0 %v430
      %v432 = vpop.xlane.xlu0 %431
      %v433 = vmul.f32 %v432, %v426
      %v434 = vadd.f32 %v433, 1e-05
      %v435 = vrsqrt.pop %v434
      %v436 = vmul.f32 %v428, %v435
      %v438 = vlaneseq
      %v439 = vshrl.u32 %v438, 7
      %v440 = vsub.s32 0, %v439
      %v441 = vrot.slane %v420, %v440
      %v443 = vmul.f32 %v436, %v441
      %v445 = vlaneseq
      %v446 = vshrl.u32 %v445, 7
      %v447 = vsub.s32 0, %v446
      %v448 = vrot.slane %v421, %v447
      %v450 = vadd.f32 %v443, %v448
      %v451 = vpack.c.bf16 %v450, %v450
      %v452 = vld [vmem:[%s4] sm:$0xf]
      %v453 = vld [vmem:[%s4 + $0x4] sm:$0xf]
      %v454 = vld [vmem:[%s4 + $0x8] sm:$0xf]
      %v455 = vld [vmem:[%s4 + $0xc] sm:$0xf]
      %v456 = vld [vmem:[%s5] sm:$0x1]
      %v458 = vlaneseq
      %v459 = vshrl.u32 %v458, 7
      %v460 = vsub.s32 0, %v459
      %v461 = vrot.slane %v456, %v460
      %v467 = vunpack.c.l.b16 %v452
      %v468 = vunpack.c.l.b16 %v453
      %v469 = vunpack.c.l.b16 %v454
      %v470 = vunpack.c.l.b16 %v455
      %v471 = vpack.c.b16 %v468, %v467
      %v472 = vpack.c.b16 %v470, %v469
      %v476 = vsel %vm422, %v451, 0
      %478 = vmatprep.subr.bf16.mxu0 0
      %479 = vmatpush1.bf16.msra.mxu0 %v471
      %480 = vmatprep.subr.bf16.mxu0 0
      %481 = vmatpush1.bf16.msra.mxu0 %v472
      %482 = vmatprep.subr.bf16.mxu0 0
      %483 = vmatpush1.bf16.msra.mxu0 0
      %484 = vmatprep.subr.bf16.mxu0 0
      %485 = vmatpush1.bf16.msra.mxu0 0
      %486 = vmatprep.subr.bf16.mxu0 0
      %487 = vmatpush1.bf16.msra.mxu0 0
      %488 = vmatprep.subr.bf16.mxu0 0
      %489 = vmatpush1.bf16.msra.mxu0 0
      %490 = vmatprep.subr.bf16.mxu0 0
      %491 = vmatpush1.bf16.msra.mxu0 0
      %492 = vmatprep.subr.bf16.mxu0 0
      %493 = vmatpush1.bf16.msra.mxu0 0
      %494 = vmatprep.subr.bf16.mxu0 0
      %495 = vmatpush1.bf16.msra.mxu0 0
      %496 = vmatprep.subr.bf16.mxu0 0
      %497 = vmatpush1.bf16.msra.mxu0 0
      %498 = vmatprep.subr.bf16.mxu0 0
      %499 = vmatpush1.bf16.msra.mxu0 0
      %500 = vmatprep.subr.bf16.mxu0 0
      %501 = vmatpush1.bf16.msra.mxu0 0
      %502 = vmatprep.subr.bf16.mxu0 0
      %503 = vmatpush1.bf16.msra.mxu0 0
      %504 = vmatprep.subr.bf16.mxu0 0
      %505 = vmatpush1.bf16.msra.mxu0 0
      %506 = vmatprep.subr.bf16.mxu0 0
      %507 = vmatpush1.bf16.msra.mxu0 0
      %508 = vmatprep.subr.bf16.mxu0 0
      %509 = vmatpush1.bf16.msra.mxu0 0
      %510 = vmatprep.mubr.bf16.mxu0 0
      %511 = vmatmul.mubr.bf16.gmra.mrb[0].mxu0 %v476
      %v512 = vpop.f32.mrb[0].mxu0
      %v513 = vadd.f32 %v461, %v512
      %v514 = vpop.f32.mrb[0].mxu0
      %v515 = vpop.f32.mrb[0].mxu0
      %v516 = vpop.f32.mrb[0].mxu0
      %517 = vdwg.mxu0
      %v518 = vpack.c.bf16 %v419, %v418
      %v519 = vld [vmem:[%s6] sm:$0xf]
      %v520 = vld [vmem:[%s6 + $0x4] sm:$0xf]
      %v521 = vld [vmem:[%s6 + $0x8] sm:$0xf]
      %v522 = vld [vmem:[%s6 + $0xc] sm:$0xf]
      %v523 = vld [vmem:[%s7] sm:$0x1]
      %v525 = vlaneseq
      %v526 = vshrl.u32 %v525, 7
      %v527 = vsub.s32 0, %v526
      %v528 = vrot.slane %v523, %v527
      %v534 = vunpack.c.l.b16 %v519
      %v535 = vunpack.c.l.b16 %v520
      %v536 = vunpack.c.l.b16 %v521
      %v537 = vunpack.c.l.b16 %v522
      %v538 = vpack.c.b16 %v535, %v534
      %v539 = vpack.c.b16 %v537, %v536
      %v543 = vsel %vm422, %v518, 0
      %545 = vmatprep.subr.bf16.mxu0 0
      %546 = vmatpush1.bf16.msra.mxu0 %v538
      %547 = vmatprep.subr.bf16.mxu0 0
      %548 = vmatpush1.bf16.msra.mxu0 %v539
      %549 = vmatprep.subr.bf16.mxu0 0
      %550 = vmatpush1.bf16.msra.mxu0 0
      %551 = vmatprep.subr.bf16.mxu0 0
      %552 = vmatpush1.bf16.msra.mxu0 0
      %553 = vmatprep.subr.bf16.mxu0 0
      %554 = vmatpush1.bf16.msra.mxu0 0
      %555 = vmatprep.subr.bf16.mxu0 0
      %556 = vmatpush1.bf16.msra.mxu0 0
      %557 = vmatprep.subr.bf16.mxu0 0
      %558 = vmatpush1.bf16.msra.mxu0 0
      %559 = vmatprep.subr.bf16.mxu0 0
      %560 = vmatpush1.bf16.msra.mxu0 0
      %561 = vmatprep.subr.bf16.mxu0 0
      %562 = vmatpush1.bf16.msra.mxu0 0
      %563 = vmatprep.subr.bf16.mxu0 0
      %564 = vmatpush1.bf16.msra.mxu0 0
      %565 = vmatprep.subr.bf16.mxu0 0
      %566 = vmatpush1.bf16.msra.mxu0 0
      %567 = vmatprep.subr.bf16.mxu0 0
      %568 = vmatpush1.bf16.msra.mxu0 0
      %569 = vmatprep.subr.bf16.mxu0 0
      %570 = vmatpush1.bf16.msra.mxu0 0
      %571 = vmatprep.subr.bf16.mxu0 0
      %572 = vmatpush1.bf16.msra.mxu0 0
      %573 = vmatprep.subr.bf16.mxu0 0
      %574 = vmatpush1.bf16.msra.mxu0 0
      %575 = vmatprep.subr.bf16.mxu0 0
      %576 = vmatpush1.bf16.msra.mxu0 0
      %577 = vmatprep.mubr.bf16.mxu0 0
      %578 = vmatmul.mubr.bf16.gmra.mrb[0].mxu0 %v543
      %v579 = vpop.f32.mrb[0].mxu0
      %v580 = vadd.f32 %v528, %v579
      %v581 = vpop.f32.mrb[0].mxu0
      %v582 = vpop.f32.mrb[0].mxu0
      %v583 = vadd.f32 %v528, %v582
      %v584 = vpop.f32.mrb[0].mxu0
      %585 = vdwg.mxu0
      %v586 = vld [vmem:[%s411] sm:$0x1]
      %v587 = vpack.c.bf16 %v513, %v513
      %v588 = vpack.c.bf16 %v583, %v580
      %v590 = vlaneseq
      %v591 = vshrl.u32 %v590, 7
      %v592 = vsub.s32 0, %v591
      %v593 = vrot.slane %v586, %v592
      %vm595 = vcmask 64512
      %v597 = vsel %vm595, %v587, 0
      %v600 = vsel %vm595, %v588, 0
      %602 = vmatprep.subr.bf16.mxu0 0
      %603 = vmatpush1.bf16.xpose.msra.mxu0 %v600
      %604 = vmatprep.subr.bf16.mxu0 0
      %605 = vmatpush1.bf16.xpose.msra.mxu0 0
      %606 = vmatprep.subr.bf16.mxu0 0
      %607 = vmatpush1.bf16.xpose.msra.mxu0 0
      %608 = vmatprep.subr.bf16.mxu0 0
      %609 = vmatpush1.bf16.xpose.msra.mxu0 0
      %610 = vmatprep.subr.bf16.mxu0 0
      %611 = vmatpush1.bf16.xpose.msra.mxu0 0
      %612 = vmatprep.subr.bf16.mxu0 0
      %613 = vmatpush1.bf16.xpose.msra.mxu0 0
      %614 = vmatprep.subr.bf16.mxu0 0
      %615 = vmatpush1.bf16.xpose.msra.mxu0 0
      %616 = vmatprep.subr.bf16.mxu0 0
      %617 = vmatpush1.bf16.xpose.msra.mxu0 0
      %618 = vmatprep.subr.bf16.mxu0 0
      %619 = vmatpush1.bf16.xpose.msra.mxu0 0
      %620 = vmatprep.subr.bf16.mxu0 0
      %621 = vmatpush1.bf16.xpose.msra.mxu0 0
      %622 = vmatprep.subr.bf16.mxu0 0
      %623 = vmatpush1.bf16.xpose.msra.mxu0 0
      %624 = vmatprep.subr.bf16.mxu0 0
      %625 = vmatpush1.bf16.xpose.msra.mxu0 0
      %626 = vmatprep.subr.bf16.mxu0 0
      %627 = vmatpush1.bf16.xpose.msra.mxu0 0
      %628 = vmatprep.subr.bf16.mxu0 0
      %629 = vmatpush1.bf16.xpose.msra.mxu0 0
      %630 = vmatprep.subr.bf16.mxu0 0
      %631 = vmatpush1.bf16.xpose.msra.mxu0 0
      %632 = vmatprep.subr.bf16.mxu0 0
      %633 = vmatpush1.bf16.xpose.msra.mxu0 0
      %634 = vmatprep.mubr.bf16.mxu0 0
      %635 = vmatmul.mubr.bf16.gmra.mrb[0].mxu0 %v597
      %v636 = vpop.f32.mrb[0].mxu0
      %v637 = vadd.f32 %v593, %v636
      %v638 = vpop.f32.mrb[0].mxu0
      %v639 = vpop.f32.mrb[0].mxu0
      %v640 = vpop.f32.mrb[0].mxu0
      %641 = vdwg.mxu0
      %vm642 = vcmask 97280
      %v643 = vsel %vm642, %v637, -inf
      %644 = vmax.xlane.f32.xlu0 %v643
      %v645 = vpop.xlane.xlu0 %644
      %v646 = vsub.f32 %v637, %v645
      %v647 = vmul.f32 %v646, 1.442695
      %v648 = vpow.pop %v647
      %v649 = vsel %vm642, %v648, 0.0
      %650 = vadd.xlane.f32.xlu0 %v649
      %v651 = vpop.xlane.xlu0 %650
      %v652 = vrcp.pop %v651
      %v653 = vmul.f32 %v648, %v652
      %v654 = vpack.c.bf16 %v653, %v653
      %656 = vrot.lane.b32.xlu0 %v588, 96
      %v657 = vpop.permute.xlu0 %656
      %v659 = vsel %vm642, %v654, 0
      %vm661 = vcmask 1045504
      %v663 = vsel %vm661, %v657, 0
      %665 = vmatprep.subr.bf16.mxu0 0
      %666 = vmatpush1.bf16.msra.mxu0 %v663
      %667 = vmatprep.subr.bf16.mxu0 0
      %668 = vmatpush1.bf16.msra.mxu0 0
      %669 = vmatprep.subr.bf16.mxu0 0
      %670 = vmatpush1.bf16.msra.mxu0 0
      %671 = vmatprep.subr.bf16.mxu0 0
      %672 = vmatpush1.bf16.msra.mxu0 0
      %673 = vmatprep.subr.bf16.mxu0 0
      %674 = vmatpush1.bf16.msra.mxu0 0
      %675 = vmatprep.subr.bf16.mxu0 0
      %676 = vmatpush1.bf16.msra.mxu0 0
      %677 = vmatprep.subr.bf16.mxu0 0
      %678 = vmatpush1.bf16.msra.mxu0 0
      %679 = vmatprep.subr.bf16.mxu0 0
      %680 = vmatpush1.bf16.msra.mxu0 0
      %681 = vmatprep.subr.bf16.mxu0 0
      %682 = vmatpush1.bf16.msra.mxu0 0
      %683 = vmatprep.subr.bf16.mxu0 0
      %684 = vmatpush1.bf16.msra.mxu0 0
      %685 = vmatprep.subr.bf16.mxu0 0
      %686 = vmatpush1.bf16.msra.mxu0 0
      %687 = vmatprep.subr.bf16.mxu0 0
      %688 = vmatpush1.bf16.msra.mxu0 0
      %689 = vmatprep.subr.bf16.mxu0 0
      %690 = vmatpush1.bf16.msra.mxu0 0
      %691 = vmatprep.subr.bf16.mxu0 0
      %692 = vmatpush1.bf16.msra.mxu0 0
      %693 = vmatprep.subr.bf16.mxu0 0
      %694 = vmatpush1.bf16.msra.mxu0 0
      %695 = vmatprep.subr.bf16.mxu0 0
      %696 = vmatpush1.bf16.msra.mxu0 0
      %697 = vmatprep.mubr.bf16.mxu0 0
      %698 = vmatmul.mubr.bf16.gmra.mrb[0].mxu0 %v659
      %v699 = vpop.f32.mrb[0].mxu0
      %v700 = vadd.f32 0.0, %v699
      %v701 = vpop.f32.mrb[0].mxu0
      %v702 = vpop.f32.mrb[0].mxu0
      %v703 = vpop.f32.mrb[0].mxu0
      %704 = vdwg.mxu0
      %706 = vrot.lane.b32.xlu0 %v587, 120
      %v707 = vpop.permute.xlu0 %706
      %708 = vrot.lane.b32.xlu0 %v588, 120
      %v709 = vpop.permute.xlu0 %708
      %v711 = vsel %vm595, %v707, 0
      %v714 = vsel %vm595, %v709, 0
      %716 = vmatprep.subr.bf16.mxu0 0
      %717 = vmatpush1.bf16.xpose.msra.mxu0 %v714
      %718 = vmatprep.subr.bf16.mxu0 0
      %719 = vmatpush1.bf16.xpose.msra.mxu0 0
      %720 = vmatprep.subr.bf16.mxu0 0
      %721 = vmatpush1.bf16.xpose.msra.mxu0 0
      %722 = vmatprep.subr.bf16.mxu0 0
      %723 = vmatpush1.bf16.xpose.msra.mxu0 0
      %724 = vmatprep.subr.bf16.mxu0 0
      %725 = vmatpush1.bf16.xpose.msra.mxu0 0
      %726 = vmatprep.subr.bf16.mxu0 0
      %727 = vmatpush1.bf16.xpose.msra.mxu0 0
      %728 = vmatprep.subr.bf16.mxu0 0
      %729 = vmatpush1.bf16.xpose.msra.mxu0 0
      %730 = vmatprep.subr.bf16.mxu0 0
      %731 = vmatpush1.bf16.xpose.msra.mxu0 0
      %732 = vmatprep.subr.bf16.mxu0 0
      %733 = vmatpush1.bf16.xpose.msra.mxu0 0
      %734 = vmatprep.subr.bf16.mxu0 0
      %735 = vmatpush1.bf16.xpose.msra.mxu0 0
      %736 = vmatprep.subr.bf16.mxu0 0
      %737 = vmatpush1.bf16.xpose.msra.mxu0 0
      %738 = vmatprep.subr.bf16.mxu0 0
      %739 = vmatpush1.bf16.xpose.msra.mxu0 0
      %740 = vmatprep.subr.bf16.mxu0 0
      %741 = vmatpush1.bf16.xpose.msra.mxu0 0
      %742 = vmatprep.subr.bf16.mxu0 0
      %743 = vmatpush1.bf16.xpose.msra.mxu0 0
      %744 = vmatprep.subr.bf16.mxu0 0
      %745 = vmatpush1.bf16.xpose.msra.mxu0 0
      %746 = vmatprep.subr.bf16.mxu0 0
      %747 = vmatpush1.bf16.xpose.msra.mxu0 0
      %748 = vmatprep.mubr.bf16.mxu0 0
      %749 = vmatmul.mubr.bf16.gmra.mrb[0].mxu0 %v711
      %v750 = vpop.f32.mrb[0].mxu0
      %v751 = vadd.f32 %v593, %v750
      %v752 = vpop.f32.mrb[0].mxu0
      %v753 = vpop.f32.mrb[0].mxu0
      %v754 = vpop.f32.mrb[0].mxu0
      %755 = vdwg.mxu0
      %v756 = vsel %vm642, %v751, -inf
      %757 = vmax.xlane.f32.xlu0 %v756
      %v758 = vpop.xlane.xlu0 %757
      %v759 = vsub.f32 %v751, %v758
      %v760 = vmul.f32 %v759, 1.442695
      %v761 = vpow.pop %v760
      %v762 = vsel %vm642, %v761, 0.0
      %763 = vadd.xlane.f32.xlu0 %v762
      %v764 = vpop.xlane.xlu0 %763
      %v765 = vrcp.pop %v764
      %v766 = vmul.f32 %v761, %v765
      %v767 = vpack.c.bf16 %v766, %v766
      %768 = vrot.lane.b32.xlu0 %v588, 88
      %v769 = vpop.permute.xlu0 %768
      %v771 = vsel %vm642, %v767, 0
      %v774 = vsel %vm661, %v769, 0
      %776 = vmatprep.subr.bf16.mxu0 0
      %777 = vmatpush1.bf16.msra.mxu0 %v774
      %778 = vmatprep.subr.bf16.mxu0 0
      %779 = vmatpush1.bf16.msra.mxu0 0
      %780 = vmatprep.subr.bf16.mxu0 0
      %781 = vmatpush1.bf16.msra.mxu0 0
      %782 = vmatprep.subr.bf16.mxu0 0
      %783 = vmatpush1.bf16.msra.mxu0 0
      %784 = vmatprep.subr.bf16.mxu0 0
      %785 = vmatpush1.bf16.msra.mxu0 0
      %786 = vmatprep.subr.bf16.mxu0 0
      %787 = vmatpush1.bf16.msra.mxu0 0
      %788 = vmatprep.subr.bf16.mxu0 0
      %789 = vmatpush1.bf16.msra.mxu0 0
      %790 = vmatprep.subr.bf16.mxu0 0
      %791 = vmatpush1.bf16.msra.mxu0 0
      %792 = vmatprep.subr.bf16.mxu0 0
      %793 = vmatpush1.bf16.msra.mxu0 0
      %794 = vmatprep.subr.bf16.mxu0 0
      %795 = vmatpush1.bf16.msra.mxu0 0
      %796 = vmatprep.subr.bf16.mxu0 0
      %797 = vmatpush1.bf16.msra.mxu0 0
      %798 = vmatprep.subr.bf16.mxu0 0
      %799 = vmatpush1.bf16.msra.mxu0 0
      %800 = vmatprep.subr.bf16.mxu0 0
      %801 = vmatpush1.bf16.msra.mxu0 0
      %802 = vmatprep.subr.bf16.mxu0 0
      %803 = vmatpush1.bf16.msra.mxu0 0
      %804 = vmatprep.subr.bf16.mxu0 0
      %805 = vmatpush1.bf16.msra.mxu0 0
      %806 = vmatprep.subr.bf16.mxu0 0
      %807 = vmatpush1.bf16.msra.mxu0 0
      %808 = vmatprep.mubr.bf16.mxu0 0
      %809 = vmatmul.mubr.bf16.gmra.mrb[0].mxu0 %v771
      %v810 = vpop.f32.mrb[0].mxu0
      %v811 = vadd.f32 0.0, %v810
      %v812 = vpop.f32.mrb[0].mxu0
      %v813 = vpop.f32.mrb[0].mxu0
      %v814 = vpop.f32.mrb[0].mxu0
      %815 = vdwg.mxu0
      %816 = vrot.lane.b32.xlu0 %v587, 112
      %v817 = vpop.permute.xlu0 %816
      %818 = vrot.lane.b32.xlu0 %v588, 112
      %v819 = vpop.permute.xlu0 %818
      %v821 = vsel %vm595, %v817, 0
      %v824 = vsel %vm595, %v819, 0
      %826 = vmatprep.subr.bf16.mxu0 0
      %827 = vmatpush1.bf16.xpose.msra.mxu0 %v824
      %828 = vmatprep.subr.bf16.mxu0 0
      %829 = vmatpush1.bf16.xpose.msra.mxu0 0
      %830 = vmatprep.subr.bf16.mxu0 0
      %831 = vmatpush1.bf16.xpose.msra.mxu0 0
      %832 = vmatprep.subr.bf16.mxu0 0
      %833 = vmatpush1.bf16.xpose.msra.mxu0 0
      %834 = vmatprep.subr.bf16.mxu0 0
      %835 = vmatpush1.bf16.xpose.msra.mxu0 0
      %836 = vmatprep.subr.bf16.mxu0 0
      %837 = vmatpush1.bf16.xpose.msra.mxu0 0
      %838 = vmatprep.subr.bf16.mxu0 0
      %839 = vmatpush1.bf16.xpose.msra.mxu0 0
      %840 = vmatprep.subr.bf16.mxu0 0
      %841 = vmatpush1.bf16.xpose.msra.mxu0 0
      %842 = vmatprep.subr.bf16.mxu0 0
      %843 = vmatpush1.bf16.xpose.msra.mxu0 0
      %844 = vmatprep.subr.bf16.mxu0 0
      %845 = vmatpush1.bf16.xpose.msra.mxu0 0
      %846 = vmatprep.subr.bf16.mxu0 0
      %847 = vmatpush1.bf16.xpose.msra.mxu0 0
      %848 = vmatprep.subr.bf16.mxu0 0
      %849 = vmatpush1.bf16.xpose.msra.mxu0 0
      %850 = vmatprep.subr.bf16.mxu0 0
      %851 = vmatpush1.bf16.xpose.msra.mxu0 0
      %852 = vmatprep.subr.bf16.mxu0 0
      %853 = vmatpush1.bf16.xpose.msra.mxu0 0
      %854 = vmatprep.subr.bf16.mxu0 0
      %855 = vmatpush1.bf16.xpose.msra.mxu0 0
      %856 = vmatprep.subr.bf16.mxu0 0
      %857 = vmatpush1.bf16.xpose.msra.mxu0 0
      %858 = vmatprep.mubr.bf16.mxu0 0
      %859 = vmatmul.mubr.bf16.gmra.mrb[0].mxu0 %v821
      %v860 = vpop.f32.mrb[0].mxu0
      %v861 = vadd.f32 %v593, %v860
      %v862 = vpop.f32.mrb[0].mxu0
      %v863 = vpop.f32.mrb[0].mxu0
      %v864 = vpop.f32.mrb[0].mxu0
      %865 = vdwg.mxu0
      %v866 = vsel %vm642, %v861, -inf
      %867 = vmax.xlane.f32.xlu0 %v866
      %v868 = vpop.xlane.xlu0 %867
      %v869 = vsub.f32 %v861, %v868
      %v870 = vmul.f32 %v869, 1.442695
      %v871 = vpow.pop %v870
      %v872 = vsel %vm642, %v871, 0.0
      %873 = vadd.xlane.f32.xlu0 %v872
      %v874 = vpop.xlane.xlu0 %873
      %v875 = vrcp.pop %v874
      %v876 = vmul.f32 %v871, %v875
      %v877 = vpack.c.bf16 %v876, %v876
      %878 = vrot.lane.b32.xlu0 %v588, 80
      %v879 = vpop.permute.xlu0 %878
      %v881 = vsel %vm642, %v877, 0
      %v884 = vsel %vm661, %v879, 0
      %886 = vmatprep.subr.bf16.mxu0 0
      %887 = vmatpush1.bf16.msra.mxu0 %v884
      %888 = vmatprep.subr.bf16.mxu0 0
      %889 = vmatpush1.bf16.msra.mxu0 0
      %890 = vmatprep.subr.bf16.mxu0 0
      %891 = vmatpush1.bf16.msra.mxu0 0
      %892 = vmatprep.subr.bf16.mxu0 0
      %893 = vmatpush1.bf16.msra.mxu0 0
      %894 = vmatprep.subr.bf16.mxu0 0
      %895 = vmatpush1.bf16.msra.mxu0 0
      %896 = vmatprep.subr.bf16.mxu0 0
      %897 = vmatpush1.bf16.msra.mxu0 0
      %898 = vmatprep.subr.bf16.mxu0 0
      %899 = vmatpush1.bf16.msra.mxu0 0
      %900 = vmatprep.subr.bf16.mxu0 0
      %901 = vmatpush1.bf16.msra.mxu0 0
      %902 = vmatprep.subr.bf16.mxu0 0
      %903 = vmatpush1.bf16.msra.mxu0 0
      %904 = vmatprep.subr.bf16.mxu0 0
      %905 = vmatpush1.bf16.msra.mxu0 0
      %906 = vmatprep.subr.bf16.mxu0 0
      %907 = vmatpush1.bf16.msra.mxu0 0
      %908 = vmatprep.subr.bf16.mxu0 0
      %909 = vmatpush1.bf16.msra.mxu0 0
      %910 = vmatprep.subr.bf16.mxu0 0
      %911 = vmatpush1.bf16.msra.mxu0 0
      %912 = vmatprep.subr.bf16.mxu0 0
      %913 = vmatpush1.bf16.msra.mxu0 0
      %914 = vmatprep.subr.bf16.mxu0 0
      %915 = vmatpush1.bf16.msra.mxu0 0
      %916 = vmatprep.subr.bf16.mxu0 0
      %917 = vmatpush1.bf16.msra.mxu0 0
      %918 = vmatprep.mubr.bf16.mxu0 0
      %919 = vmatmul.mubr.bf16.gmra.mrb[0].mxu0 %v881
      %v920 = vpop.f32.mrb[0].mxu0
      %v921 = vadd.f32 0.0, %v920
      %v922 = vpop.f32.mrb[0].mxu0
      %v923 = vpop.f32.mrb[0].mxu0
      %v924 = vpop.f32.mrb[0].mxu0
      %925 = vdwg.mxu0
      %926 = vrot.lane.b32.xlu0 %v587, 104
      %v927 = vpop.permute.xlu0 %926
      %928 = vrot.lane.b32.xlu0 %v588, 104
      %v929 = vpop.permute.xlu0 %928
      %v931 = vsel %vm595, %v927, 0
      %v934 = vsel %vm595, %v929, 0
      %936 = vmatprep.subr.bf16.mxu0 0
      %937 = vmatpush1.bf16.xpose.msra.mxu0 %v934
      %938 = vmatprep.subr.bf16.mxu0 0
      %939 = vmatpush1.bf16.xpose.msra.mxu0 0
      %940 = vmatprep.subr.bf16.mxu0 0
      %941 = vmatpush1.bf16.xpose.msra.mxu0 0
      %942 = vmatprep.subr.bf16.mxu0 0
      %943 = vmatpush1.bf16.xpose.msra.mxu0 0
      %944 = vmatprep.subr.bf16.mxu0 0
      %945 = vmatpush1.bf16.xpose.msra.mxu0 0
      %946 = vmatprep.subr.bf16.mxu0 0
      %947 = vmatpush1.bf16.xpose.msra.mxu0 0
      %948 = vmatprep.subr.bf16.mxu0 0
      %949 = vmatpush1.bf16.xpose.msra.mxu0 0
      %950 = vmatprep.subr.bf16.mxu0 0
      %951 = vmatpush1.bf16.xpose.msra.mxu0 0
      %952 = vmatprep.subr.bf16.mxu0 0
      %953 = vmatpush1.bf16.xpose.msra.mxu0 0
      %954 = vmatprep.subr.bf16.mxu0 0
      %955 = vmatpush1.bf16.xpose.msra.mxu0 0
      %956 = vmatprep.subr.bf16.mxu0 0
      %957 = vmatpush1.bf16.xpose.msra.mxu0 0
      %958 = vmatprep.subr.bf16.mxu0 0
      %959 = vmatpush1.bf16.xpose.msra.mxu0 0
      %960 = vmatprep.subr.bf16.mxu0 0
      %961 = vmatpush1.bf16.xpose.msra.mxu0 0
      %962 = vmatprep.subr.bf16.mxu0 0
      %963 = vmatpush1.bf16.xpose.msra.mxu0 0
      %964 = vmatprep.subr.bf16.mxu0 0
      %965 = vmatpush1.bf16.xpose.msra.mxu0 0
      %966 = vmatprep.subr.bf16.mxu0 0
      %967 = vmatpush1.bf16.xpose.msra.mxu0 0
      %968 = vmatprep.mubr.bf16.mxu0 0
      %969 = vmatmul.mubr.bf16.gmra.mrb[0].mxu0 %v931
      %v970 = vpop.f32.mrb[0].mxu0
      %v971 = vadd.f32 %v593, %v970
      %v972 = vpop.f32.mrb[0].mxu0
      %v973 = vpop.f32.mrb[0].mxu0
      %v974 = vpop.f32.mrb[0].mxu0
      %975 = vdwg.mxu0
      %v976 = vsel %vm642, %v971, -inf
      %977 = vmax.xlane.f32.xlu0 %v976
      %v978 = vpop.xlane.xlu0 %977
      %v979 = vsub.f32 %v971, %v978
      %v980 = vmul.f32 %v979, 1.442695
      %v981 = vpow.pop %v980
      %v982 = vsel %vm642, %v981, 0.0
      %983 = vadd.xlane.f32.xlu0 %v982
      %v984 = vpop.xlane.xlu0 %983
      %v985 = vrcp.pop %v984
      %v986 = vmul.f32 %v981, %v985
      %v987 = vpack.c.bf16 %v986, %v986
      %988 = vrot.lane.b32.xlu0 %v588, 72
      %v989 = vpop.permute.xlu0 %988
      %v991 = vsel %vm642, %v987, 0
      %v994 = vsel %vm661, %v989, 0
      %996 = vmatprep.subr.bf16.mxu0 0
      %997 = vmatpush1.bf16.msra.mxu0 %v994
      %998 = vmatprep.subr.bf16.mxu0 0
      %999 = vmatpush1.bf16.msra.mxu0 0
      %1000 = vmatprep.subr.bf16.mxu0 0
      %1001 = vmatpush1.bf16.msra.mxu0 0
      %1002 = vmatprep.subr.bf16.mxu0 0
      %1003 = vmatpush1.bf16.msra.mxu0 0
      %1004 = vmatprep.subr.bf16.mxu0 0
      %1005 = vmatpush1.bf16.msra.mxu0 0
      %1006 = vmatprep.subr.bf16.mxu0 0
      %1007 = vmatpush1.bf16.msra.mxu0 0
      %1008 = vmatprep.subr.bf16.mxu0 0
      %1009 = vmatpush1.bf16.msra.mxu0 0
      %1010 = vmatprep.subr.bf16.mxu0 0
      %1011 = vmatpush1.bf16.msra.mxu0 0
      %1012 = vmatprep.subr.bf16.mxu0 0
      %1013 = vmatpush1.bf16.msra.mxu0 0
      %1014 = vmatprep.subr.bf16.mxu0 0
      %1015 = vmatpush1.bf16.msra.mxu0 0
      %1016 = vmatprep.subr.bf16.mxu0 0
      %1017 = vmatpush1.bf16.msra.mxu0 0
      %1018 = vmatprep.subr.bf16.mxu0 0
      %1019 = vmatpush1.bf16.msra.mxu0 0
      %1020 = vmatprep.subr.bf16.mxu0 0
      %1021 = vmatpush1.bf16.msra.mxu0 0
      %1022 = vmatprep.subr.bf16.mxu0 0
      %1023 = vmatpush1.bf16.msra.mxu0 0
      %1024 = vmatprep.subr.bf16.mxu0 0
      %1025 = vmatpush1.bf16.msra.mxu0 0
      %1026 = vmatprep.subr.bf16.mxu0 0
      %1027 = vmatpush1.bf16.msra.mxu0 0
      %1028 = vmatprep.mubr.bf16.mxu0 0
      %1029 = vmatmul.mubr.bf16.gmra.mrb[0].mxu0 %v991
      %v1030 = vpop.f32.mrb[0].mxu0
      %v1031 = vadd.f32 0.0, %v1030
      %v1032 = vpop.f32.mrb[0].mxu0
      %v1033 = vpop.f32.mrb[0].mxu0
      %v1034 = vpop.f32.mrb[0].mxu0
      %1035 = vdwg.mxu0
      %1037 = vrot.lane.b32.xlu0 %v811, 8
      %v1038 = vpop.permute.xlu0 %1037
      %1041 = vrot.lane.b32.xlu0 %v921, 16
      %v1042 = vpop.permute.xlu0 %1041
      %1045 = vrot.lane.b32.xlu0 %v1031, 24
      %v1046 = vpop.permute.xlu0 %1045
      %v1048 = vsel %vm595, %v700, %v1038
      %vm1049 = vcmask 130048
      %v1050 = vsel %vm1049, %v1048, %v1042
      %vm1051 = vcmask 195584
      %v1052 = vsel %vm1051, %v1050, %v1046
      %v1053 = vpack.c.bf16 %v1052, %v1052
      %v1054 = vld [vmem:[%s8] sm:$0xf]
      %v1055 = vld [vmem:[%s8 + $0x4] sm:$0xf]
      %v1056 = vld [vmem:[%s8 + $0x8] sm:$0xf]
      %v1057 = vld [vmem:[%s8 + $0xc] sm:$0xf]
      %v1058 = vld [vmem:[%s9] sm:$0x1]
      %v1060 = vlaneseq
      %v1061 = vshrl.u32 %v1060, 7
      %v1062 = vsub.s32 0, %v1061
      %v1063 = vrot.slane %v1058, %v1062
      %v1069 = vunpack.c.l.b16 %v1054
      %v1070 = vunpack.c.l.b16 %v1055
      %v1071 = vunpack.c.l.b16 %v1056
      %v1072 = vunpack.c.l.b16 %v1057
      %v1073 = vpack.c.b16 %v1070, %v1069
      %v1074 = vpack.c.b16 %v1072, %v1071
      %v1078 = vsel %vm422, %v1053, 0
      %1080 = vmatprep.subr.bf16.mxu0 0
      %1081 = vmatpush1.bf16.msra.mxu0 %v1073
      %1082 = vmatprep.subr.bf16.mxu0 0
      %1083 = vmatpush1.bf16.msra.mxu0 %v1074
      %1084 = vmatprep.subr.bf16.mxu0 0
      %1085 = vmatpush1.bf16.msra.mxu0 0
      %1086 = vmatprep.subr.bf16.mxu0 0
      %1087 = vmatpush1.bf16.msra.mxu0 0
      %1088 = vmatprep.subr.bf16.mxu0 0
      %1089 = vmatpush1.bf16.msra.mxu0 0
      %1090 = vmatprep.subr.bf16.mxu0 0
      %1091 = vmatpush1.bf16.msra.mxu0 0
      %1092 = vmatprep.subr.bf16.mxu0 0
      %1093 = vmatpush1.bf16.msra.mxu0 0
      %1094 = vmatprep.subr.bf16.mxu0 0
      %1095 = vmatpush1.bf16.msra.mxu0 0
      %1096 = vmatprep.subr.bf16.mxu0 0
      %1097 = vmatpush1.bf16.msra.mxu0 0
      %1098 = vmatprep.subr.bf16.mxu0 0
      %1099 = vmatpush1.bf16.msra.mxu0 0
      %1100 = vmatprep.subr.bf16.mxu0 0
      %1101 = vmatpush1.bf16.msra.mxu0 0
      %1102 = vmatprep.subr.bf16.mxu0 0
      %1103 = vmatpush1.bf16.msra.mxu0 0
      %1104 = vmatprep.subr.bf16.mxu0 0
      %1105 = vmatpush1.bf16.msra.mxu0 0
      %1106 = vmatprep.subr.bf16.mxu0 0
      %1107 = vmatpush1.bf16.msra.mxu0 0
      %1108 = vmatprep.subr.bf16.mxu0 0
      %1109 = vmatpush1.bf16.msra.mxu0 0
      %1110 = vmatprep.subr.bf16.mxu0 0
      %1111 = vmatpush1.bf16.msra.mxu0 0
      %1112 = vmatprep.mubr.bf16.mxu0 0
      %1113 = vmatmul.mubr.bf16.gmra.mrb[0].mxu0 %v1078
      %v1114 = vpop.f32.mrb[0].mxu0
      %v1115 = vadd.f32 %v1063, %v1114
      %v1116 = vpop.f32.mrb[0].mxu0
      %v1117 = vpop.f32.mrb[0].mxu0
      %v1118 = vpop.f32.mrb[0].mxu0
      %1119 = vdwg.mxu0
      %v1120 = vadd.f32 %v417, %v1115
      %1121 = vst.msk [vmem:[%s415] sm:$0xff] %vm422, %v1120
      %p1122 = scmp.lt.s32.totalorder %s22, 1
      %s1123 = scalar_select %p1122, %s22, 1
      %s1124 = smul.addr %s1123, 8
      %s1125 = scalar_lea.vmem %s11, %s1124
      // Predicated region
      $region65: #{decoder_forward.9} parent=63 // pred_check
        %p1126 = pneg %p286
      $region66: #{decoder_forward.9} parent=63 // pred_check_branch
        %1128 = sbr.rel (%p1126) target = $region68
      $region67: #{decoder_forward.9} parent=63 // pred_region
        _
      $region68: #{decoder_forward.9} parent=63 // pred_fallthru
        _
    $region64: #{decoder_forward.9} parent=5 // pred_fallthru
      _
    %p1129 = scmp.le.s32.totalorder 2, %s17
    // Predicated region
    $region69: #{decoder_forward.9} parent=5 // pred_check
      %p1130 = pneg %p1129
    $region70: #{decoder_forward.9} parent=5 // pred_check_branch
      %1132 = sbr.rel (%p1130) target = $region72
    $region71: #{decoder_forward.9} parent=5 // pred_region
      %s1133 = ssub.s32 %s17, 2
      // Predicated region
      $region73: #{decoder_forward.9} parent=71 // pred_check
        %p1134 = pneg %p292
      $region74: #{decoder_forward.9} parent=71 // pred_check_branch
        %1136 = sbr.rel (%p1134) target = $region76
      $region75: #{decoder_forward.9} parent=71 // pred_region
        %p1137 = scmp.lt.s32.totalorder %s23, 1
        %s1138 = scalar_select %p1137, %s23, 1
        %s1139 = smul.addr %s1138, 8
        %s1140 = scalar_lea.vmem %s11, %s1139
      $region76: #{decoder_forward.9} parent=71 // pred_fallthru
        _
    $region72: #{decoder_forward.9} parent=5 // pred_fallthru
      _
  $region6: #{decoder_forward.9} parent=0 // loop_footer
    %s21 = sadd.s32 1, %s17
  $region7: #{decoder_forward.9} parent=0 // loop_footer_branch
    %16 = sbr.rel target = $region3
  $region8: #{decoder_forward.9} parent=0 // loop_exit
    _

// kernel: decoder_forward.8
$region0: #{decoder_forward.8}
  #allocation0 [shape = 'u32[]', space=smem, size = 0x4, offset = 0x4, fixed_abs, tag = 'smem constant byte address 0x4 - core index']
  #allocation1 [shape = 'u32[144,128]{1,0:T(1,128)}', space=vmem, size = 0x12000, scoped, tag = 'internal scratch']
  %s0 = inlined_call_operand.vmem [shape: f32[2,8,32], index: 0, kind: input, shape index: {}]
  %s1 = inlined_call_operand.vmem [shape: f32[1,32], index: 1, kind: input, shape index: {}]
  %s2 = inlined_call_operand.vmem [shape: f32[1,32], index: 2, kind: input, shape index: {}]
  %s3 = inlined_call_operand.vmem [shape: bf16[32,96], index: 3, kind: input, shape index: {}]
  %s4 = inlined_call_operand.vmem [shape: f32[1,96], index: 4, kind: input, shape index: {}]
  %s5 = inlined_call_operand.vmem [shape: bf16[32,32], index: 5, kind: input, shape index: {}]
  %s6 = inlined_call_operand.vmem [shape: f32[1,32], index: 6, kind: input, shape index: {}]
  %s7 = inlined_call_operand.vmem [shape: f32[8,8], index: 7, kind: input, shape index: {}]
  %s8 = inlined_call_operand.vmem [shape: f32[2,8,32], index: 8, kind: output, shape index: {}]
  %s9 = sld [smem:[#allocation0]]
  $region65: #{decoder_forward.8} parent=0
    _
  %s11 = ssub.s32 1, %s9
  %s12 = scalar_select 0, %s11, %s9
  loop: start=0, step=1, limit=4
  $region2: #{decoder_forward.8} parent=0 // loop_pre_header
    _
  $region3: #{decoder_forward.8} parent=0 // loop_header
    %s14 = sphi 0, %s18
    %p15 = scmp.ge.s32.totalorder %s14, 4
    %s24 = sphi 0, %s26
    %s27 = sphi 0, %s24
    %s28 = sphi 0, %s27
    %s44 = sphi 0, %s28
    %s48 = sphi 0, %s48
    %s50 = sphi 0, %s48
    %s51 = sphi 0, %s50
    %s65 = sphi 0, %s51
    %s69 = sphi 0, %s69
    %s71 = sphi 0, %s69
    %s72 = sphi 0, %s71
    %s86 = sphi 0, %s72
    %s90 = sphi 0, %s90
    %s92 = sphi 0, %s90
    %s93 = sphi 0, %s92
    %s107 = sphi 0, %s93
    %s111 = sphi 0, %s111
    %s113 = sphi 0, %s111
    %s114 = sphi 0, %s113
    %s128 = sphi 0, %s114
    %s132 = sphi 0, %s132
    %s134 = sphi 0, %s132
    %s135 = sphi 0, %s134
    %s149 = sphi 0, %s135
    %s153 = sphi 0, %s153
    %s155 = sphi 0, %s153
    %s156 = sphi 0, %s155
    %s170 = sphi 0, %s156
    %s174 = sphi 0, %s174
    %s176 = sphi 0, %s174
    %s177 = sphi 0, %s176
    %s191 = sphi 0, %s177
    %s197 = sphi 0, %s199
    %s200 = sphi 0, %s197
    %s201 = sphi 0, %s200
    %s217 = sphi 0, %s201
  $region4: #{decoder_forward.8} parent=0 // loop_header_branch
    %17 = sbr.rel (%p15) target = $region8
  $region5: #{decoder_forward.8} parent=0 // loop_body
    %s19 = ssub.s32 %s14, 1
    %s20 = ssub.s32 %s14, 2
    %s21 = sadd.s32 %s14, 1
    %s22 = ssub.s32 %s14, %s21
    %p23 = scmp.eq.s32.totalorder %s22, 0
    %s25 = sadd.s32 %s24, 1
    %s26 = scalar_select %p23, %s24, %s25
    %p29 = pneg %p23
    %p30 = scmp.eq.s32.totalorder %s14, 1
    %p31 = por %p29, %p30
    %p32 = scmp.ne.s32.totalorder %s24, %s27
    %p33 = scmp.eq.s32.totalorder %s14, 0
    %p34 = por %p32, %p33
    %p35 = scmp.ne.s32.totalorder %s24, %s27
    %p36 = scmp.eq.s32.totalorder %s19, 1
    %p37 = por %p35, %p36
    %p38 = scmp.ne.s32.totalorder %s27, %s28
    %p39 = scmp.eq.s32.totalorder %s19, 0
    %p40 = por %p38, %p39
    %p41 = scmp.ne.s32.totalorder %s27, %s28
    %p42 = scmp.eq.s32.totalorder %s20, 1
    %p43 = por %p41, %p42
    %p45 = scmp.ne.s32.totalorder %s28, %s44
    %p46 = scmp.eq.s32.totalorder %s20, 0
    %p47 = por %p45, %p46
    %s49 = sadd.s32 %s48, 1
    %p52 = scmp.eq.s32.totalorder %s14, 1
    %p53 = scmp.ne.s32.totalorder %s48, %s50
    %p54 = scmp.eq.s32.totalorder %s14, 0
    %p55 = por %p53, %p54
    %p56 = scmp.ne.s32.totalorder %s48, %s50
    %p57 = scmp.eq.s32.totalorder %s19, 1
    %p58 = por %p56, %p57
    %p59 = scmp.ne.s32.totalorder %s50, %s51
    %p60 = scmp.eq.s32.totalorder %s19, 0
    %p61 = por %p59, %p60
    %p62 = scmp.ne.s32.totalorder %s50, %s51
    %p63 = scmp.eq.s32.totalorder %s20, 1
    %p64 = por %p62, %p63
    %p66 = scmp.ne.s32.totalorder %s51, %s65
    %p67 = scmp.eq.s32.totalorder %s20, 0
    %p68 = por %p66, %p67
    %s70 = sadd.s32 %s69, 1
    %p73 = scmp.eq.s32.totalorder %s14, 1
    %p74 = scmp.ne.s32.totalorder %s69, %s71
    %p75 = scmp.eq.s32.totalorder %s14, 0
    %p76 = por %p74, %p75
    %p77 = scmp.ne.s32.totalorder %s69, %s71
    %p78 = scmp.eq.s32.totalorder %s19, 1
    %p79 = por %p77, %p78
    %p80 = scmp.ne.s32.totalorder %s71, %s72
    %p81 = scmp.eq.s32.totalorder %s19, 0
    %p82 = por %p80, %p81
    %p83 = scmp.ne.s32.totalorder %s71, %s72
    %p84 = scmp.eq.s32.totalorder %s20, 1
    %p85 = por %p83, %p84
    %p87 = scmp.ne.s32.totalorder %s72, %s86
    %p88 = scmp.eq.s32.totalorder %s20, 0
    %p89 = por %p87, %p88
    %s91 = sadd.s32 %s90, 1
    %p94 = scmp.eq.s32.totalorder %s14, 1
    %p95 = scmp.ne.s32.totalorder %s90, %s92
    %p96 = scmp.eq.s32.totalorder %s14, 0
    %p97 = por %p95, %p96
    %p98 = scmp.ne.s32.totalorder %s90, %s92
    %p99 = scmp.eq.s32.totalorder %s19, 1
    %p100 = por %p98, %p99
    %p101 = scmp.ne.s32.totalorder %s92, %s93
    %p102 = scmp.eq.s32.totalorder %s19, 0
    %p103 = por %p101, %p102
    %p104 = scmp.ne.s32.totalorder %s92, %s93
    %p105 = scmp.eq.s32.totalorder %s20, 1
    %p106 = por %p104, %p105
    %p108 = scmp.ne.s32.totalorder %s93, %s107
    %p109 = scmp.eq.s32.totalorder %s20, 0
    %p110 = por %p108, %p109
    %s112 = sadd.s32 %s111, 1
    %p115 = scmp.eq.s32.totalorder %s14, 1
    %p116 = scmp.ne.s32.totalorder %s111, %s113
    %p117 = scmp.eq.s32.totalorder %s14, 0
    %p118 = por %p116, %p117
    %p119 = scmp.ne.s32.totalorder %s111, %s113
    %p120 = scmp.eq.s32.totalorder %s19, 1
    %p121 = por %p119, %p120
    %p122 = scmp.ne.s32.totalorder %s113, %s114
    %p123 = scmp.eq.s32.totalorder %s19, 0
    %p124 = por %p122, %p123
    %p125 = scmp.ne.s32.totalorder %s113, %s114
    %p126 = scmp.eq.s32.totalorder %s20, 1
    %p127 = por %p125, %p126
    %p129 = scmp.ne.s32.totalorder %s114, %s128
    %p130 = scmp.eq.s32.totalorder %s20, 0
    %p131 = por %p129, %p130
    %s133 = sadd.s32 %s132, 1
    %p136 = scmp.eq.s32.totalorder %s14, 1
    %p137 = scmp.ne.s32.totalorder %s132, %s134
    %p138 = scmp.eq.s32.totalorder %s14, 0
    %p139 = por %p137, %p138
    %p140 = scmp.ne.s32.totalorder %s132, %s134
    %p141 = scmp.eq.s32.totalorder %s19, 1
    %p142 = por %p140, %p141
    %p143 = scmp.ne.s32.totalorder %s134, %s135
    %p144 = scmp.eq.s32.totalorder %s19, 0
    %p145 = por %p143, %p144
    %p146 = scmp.ne.s32.totalorder %s134, %s135
    %p147 = scmp.eq.s32.totalorder %s20, 1
    %p148 = por %p146, %p147
    %p150 = scmp.ne.s32.totalorder %s135, %s149
    %p151 = scmp.eq.s32.totalorder %s20, 0
    %p152 = por %p150, %p151
    %s154 = sadd.s32 %s153, 1
    %p157 = scmp.eq.s32.totalorder %s14, 1
    %p158 = scmp.ne.s32.totalorder %s153, %s155
    %p159 = scmp.eq.s32.totalorder %s14, 0
    %p160 = por %p158, %p159
    %p161 = scmp.ne.s32.totalorder %s153, %s155
    %p162 = scmp.eq.s32.totalorder %s19, 1
    %p163 = por %p161, %p162
    %p164 = scmp.ne.s32.totalorder %s155, %s156
    %p165 = scmp.eq.s32.totalorder %s19, 0
    %p166 = por %p164, %p165
    %p167 = scmp.ne.s32.totalorder %s155, %s156
    %p168 = scmp.eq.s32.totalorder %s20, 1
    %p169 = por %p167, %p168
    %p171 = scmp.ne.s32.totalorder %s156, %s170
    %p172 = scmp.eq.s32.totalorder %s20, 0
    %p173 = por %p171, %p172
    %s175 = sadd.s32 %s174, 1
    %p178 = scmp.eq.s32.totalorder %s14, 1
    %p179 = scmp.ne.s32.totalorder %s174, %s176
    %p180 = scmp.eq.s32.totalorder %s14, 0
    %p181 = por %p179, %p180
    %p182 = scmp.ne.s32.totalorder %s174, %s176
    %p183 = scmp.eq.s32.totalorder %s19, 1
    %p184 = por %p182, %p183
    %p185 = scmp.ne.s32.totalorder %s176, %s177
    %p186 = scmp.eq.s32.totalorder %s19, 0
    %p187 = por %p185, %p186
    %p188 = scmp.ne.s32.totalorder %s176, %s177
    %p189 = scmp.eq.s32.totalorder %s20, 1
    %p190 = por %p188, %p189
    %p192 = scmp.ne.s32.totalorder %s177, %s191
    %p193 = scmp.eq.s32.totalorder %s20, 0
    %p194 = por %p192, %p193
    %s195 = ssub.s32 %s14, %s21
    %p196 = scmp.eq.s32.totalorder %s195, 0
    %s198 = sadd.s32 %s197, 1
    %s199 = scalar_select %p196, %s197, %s198
    %p202 = pneg %p196
    %p203 = scmp.eq.s32.totalorder %s14, 1
    %p204 = por %p202, %p203
    %p205 = scmp.ne.s32.totalorder %s197, %s200
    %p206 = scmp.eq.s32.totalorder %s14, 0
    %p207 = por %p205, %p206
    %p208 = scmp.ne.s32.totalorder %s197, %s200
    %p209 = scmp.eq.s32.totalorder %s19, 1
    %p210 = por %p208, %p209
    %p211 = scmp.ne.s32.totalorder %s200, %s201
    %p212 = scmp.eq.s32.totalorder %s19, 0
    %p213 = por %p211, %p212
    %p214 = scmp.ne.s32.totalorder %s200, %s201
    %p215 = scmp.eq.s32.totalorder %s20, 1
    %p216 = por %p214, %p215
    %p218 = scmp.ne.s32.totalorder %s201, %s217
    %p219 = scmp.eq.s32.totalorder %s20, 0
    %p220 = por %p218, %p219
    %p221 = scmp.le.s32.totalorder 1, %s14
    %p222 = scmp.lt.s32.totalorder %s14, 3
    %p223 = pnand %p221, %p222
    %p224 = pneg %p223
    // Predicated region
    $region9: #{decoder_forward.8} parent=5 // pred_check
      _
    $region10: #{decoder_forward.8} parent=5 // pred_check_branch
      %226 = sbr.rel (%p223) target = $region12
    $region11: #{decoder_forward.8} parent=5 // pred_region
      %s227 = ssub.s32 %s14, 1
      // Predicated region
      $region13: #{decoder_forward.8} parent=11 // pred_check
        %p228 = pneg %p61
      $region14: #{decoder_forward.8} parent=11 // pred_check_branch
        %230 = sbr.rel (%p228) target = $region16
      $region15: #{decoder_forward.8} parent=11 // pred_region
        _
      $region16: #{decoder_forward.8} parent=11 // pred_fallthru
        _
      // Predicated region
      $region17: #{decoder_forward.8} parent=11 // pred_check
        %p231 = pneg %p82
      $region18: #{decoder_forward.8} parent=11 // pred_check_branch
        %233 = sbr.rel (%p231) target = $region20
      $region19: #{decoder_forward.8} parent=11 // pred_region
        _
      $region20: #{decoder_forward.8} parent=11 // pred_fallthru
        _
      // Predicated region
      $region21: #{decoder_forward.8} parent=11 // pred_check
        %p234 = pneg %p103
      $region22: #{decoder_forward.8} parent=11 // pred_check_branch
        %236 = sbr.rel (%p234) target = $region24
      $region23: #{decoder_forward.8} parent=11 // pred_region
        _
      $region24: #{decoder_forward.8} parent=11 // pred_fallthru
        _
      // Predicated region
      $region25: #{decoder_forward.8} parent=11 // pred_check
        %p237 = pneg %p124
      $region26: #{decoder_forward.8} parent=11 // pred_check_branch
        %239 = sbr.rel (%p237) target = $region28
      $region27: #{decoder_forward.8} parent=11 // pred_region
        _
      $region28: #{decoder_forward.8} parent=11 // pred_fallthru
        _
      // Predicated region
      $region29: #{decoder_forward.8} parent=11 // pred_check
        %p240 = pneg %p145
      $region30: #{decoder_forward.8} parent=11 // pred_check_branch
        %242 = sbr.rel (%p240) target = $region32
      $region31: #{decoder_forward.8} parent=11 // pred_region
        _
      $region32: #{decoder_forward.8} parent=11 // pred_fallthru
        _
      // Predicated region
      $region33: #{decoder_forward.8} parent=11 // pred_check
        %p243 = pneg %p166
      $region34: #{decoder_forward.8} parent=11 // pred_check_branch
        %245 = sbr.rel (%p243) target = $region36
      $region35: #{decoder_forward.8} parent=11 // pred_region
        _
      $region36: #{decoder_forward.8} parent=11 // pred_fallthru
        _
      // Predicated region
      $region37: #{decoder_forward.8} parent=11 // pred_check
        %p246 = pneg %p187
      $region38: #{decoder_forward.8} parent=11 // pred_check_branch
        %248 = sbr.rel (%p246) target = $region40
      $region39: #{decoder_forward.8} parent=11 // pred_region
        _
      $region40: #{decoder_forward.8} parent=11 // pred_fallthru
        _
    $region12: #{decoder_forward.8} parent=5 // pred_fallthru
      _
    %p249 = scmp.lt.s32.totalorder %s14, 2
    // Predicated region
    $region41: #{decoder_forward.8} parent=5 // pred_check
      %p250 = pneg %p249
    $region42: #{decoder_forward.8} parent=5 // pred_check_branch
      %252 = sbr.rel (%p250) target = $region44
    $region43: #{decoder_forward.8} parent=5 // pred_region
      // Predicated region
      $region45: #{decoder_forward.8} parent=43 // pred_check
        %p253 = pneg %p34
      $region46: #{decoder_forward.8} parent=43 // pred_check_branch
        %255 = sbr.rel (%p253) target = $region48
      $region47: #{decoder_forward.8} parent=43 // pred_region
        %p256 = scmp.lt.s32.totalorder %s14, 1
        %s257 = scalar_select %p256, %s14, 1
        %s258 = smul.addr %s257, 8
        %s259 = scalar_lea.vmem %s0, %s258
      $region48: #{decoder_forward.8} parent=43 // pred_fallthru
        _
    $region44: #{decoder_forward.8} parent=5 // pred_fallthru
      _
    %p260 = scmp.le.s32.totalorder 1, %s14
    %p261 = scmp.lt.s32.totalorder %s14, 3
    %p262 = pnand %p260, %p261
    %p263 = pneg %p262
    // Predicated region
    $region49: #{decoder_forward.8} parent=5 // pred_check
      _
    $region50: #{decoder_forward.8} parent=5 // pred_check_branch
      %265 = sbr.rel (%p262) target = $region52
    $region51: #{decoder_forward.8} parent=5 // pred_region
      %s266 = ssub.s32 %s14, 1
      %p267 = scmp.lt.s32.totalorder %s19, 1
      %s268 = scalar_select %p267, %s19, 1
      %s269 = smul.addr %s268, 8
      %s270 = scalar_lea.vmem %s0, %s269
      %p271 = pneg %p40
      %p272 = pneg %p37
      %p273 = pneg %p61
      %p274 = pneg %p58
      %p275 = pneg %p82
      %p276 = pneg %p79
      %p277 = pneg %p103
      %p278 = pneg %p100
      %p279 = pneg %p124
      %p280 = pneg %p121
      %p281 = pneg %p145
      %p282 = pneg %p142
      %p283 = pneg %p166
      %p284 = pneg %p163
      %p285 = pneg %p187
      %p286 = pneg %p184
      %p287 = pneg %p213
      %p288 = pneg %p210
      %p289 = scmp.lt.s32.totalorder %s19, 1
      %s290 = scalar_select %p289, %s19, 1
      %s291 = smul.addr %s290, 8
      %s292 = scalar_lea.vmem %s8, %s291
      %p293 = scmp.lt.s32.totalorder %s19, 1
      %s294 = scalar_select %p293, %s19, 1
      %s295 = smul.addr %s294, 8
      %s296 = scalar_lea.vmem %s0, %s295
      %p297 = scmp.lt.s32.totalorder %s19, 1
      %s298 = scalar_select %p297, %s19, 1
      %s299 = smul.addr %s298, 8
      %s300 = scalar_lea.vmem %s8, %s299
      %v302 = vld [vmem:[%s296] sm:$0xff]
      %v303 = vld [vmem:[%s1] sm:$0x1]
      %v304 = vld [vmem:[%s2] sm:$0x1]
      %vm305 = vcmask 261120
      %v306 = vsel %vm305, %v302, 0.0
      %307 = vadd.xlane.f32.xlu0 %v306
      %v308 = vpop.xlane.xlu0 %307
      %v309 = vrcp.pop 32.0
      %v310 = vmul.f32 %v308, %v309
      %v311 = vsub.f32 %v302, %v310
      %v312 = vmul.f32 %v311, %v311
      %v313 = vsel %vm305, %v312, 0.0
      %314 = vadd.xlane.f32.xlu0 %v313
      %v315 = vpop.xlane.xlu0 %314
      %v316 = vmul.f32 %v315, %v309
      %v317 = vadd.f32 %v316, 1e-05
      %v318 = vrsqrt.pop %v317
      %v319 = vmul.f32 %v311, %v318
      %v321 = vlaneseq
      %v322 = vshrl.u32 %v321, 7
      %v323 = vsub.s32 0, %v322
      %v324 = vrot.slane %v303, %v323
      %v326 = vmul.f32 %v319, %v324
      %v328 = vlaneseq
      %v329 = vshrl.u32 %v328, 7
      %v330 = vsub.s32 0, %v329
      %v331 = vrot.slane %v304, %v330
      %v333 = vadd.f32 %v326, %v331
      %v334 = vpack.c.bf16 %v333, %v333
      %v335 = vld [vmem:[%s3] sm:$0xf]
      %v336 = vld [vmem:[%s3 + $0x4] sm:$0xf]
      %v337 = vld [vmem:[%s3 + $0x8] sm:$0xf]
      %v338 = vld [vmem:[%s3 + $0xc] sm:$0xf]
      %v339 = vld [vmem:[%s4] sm:$0x1]
      %v341 = vlaneseq
      %v342 = vshrl.u32 %v341, 7
      %v343 = vsub.s32 0, %v342
      %v344 = vrot.slane %v339, %v343
      %v350 = vunpack.c.l.b16 %v335
      %v351 = vunpack.c.l.b16 %v336
      %v352 = vunpack.c.l.b16 %v337
      %v353 = vunpack.c.l.b16 %v338
      %v354 = vpack.c.b16 %v351, %v350
      %v355 = vpack.c.b16 %v353, %v352
      %v359 = vsel %vm305, %v334, 0
      %361 = vmatprep.subr.bf16.mxu0 0
      %362 = vmatpush1.bf16.msra.mxu0 %v354
      %363 = vmatprep.subr.bf16.mxu0 0
      %364 = vmatpush1.bf16.msra.mxu0 %v355
      %365 = vmatprep.subr.bf16.mxu0 0
      %366 = vmatpush1.bf16.msra.mxu0 0
      %367 = vmatprep.subr.bf16.mxu0 0
      %368 = vmatpush1.bf16.msra.mxu0 0
      %369 = vmatprep.subr.bf16.mxu0 0
      %370 = vmatpush1.bf16.msra.mxu0 0
      %371 = vmatprep.subr.bf16.mxu0 0
      %372 = vmatpush1.bf16.msra.mxu0 0
      %373 = vmatprep.subr.bf16.mxu0 0
      %374 = vmatpush1.bf16.msra.mxu0 0
      %375 = vmatprep.subr.bf16.mxu0 0
      %376 = vmatpush1.bf16.msra.mxu0 0
      %377 = vmatprep.subr.bf16.mxu0 0
      %378 = vmatpush1.bf16.msra.mxu0 0
      %379 = vmatprep.subr.bf16.mxu0 0
      %380 = vmatpush1.bf16.msra.mxu0 0
      %381 = vmatprep.subr.bf16.mxu0 0
      %382 = vmatpush1.bf16.msra.mxu0 0
      %383 = vmatprep.subr.bf16.mxu0 0
      %384 = vmatpush1.bf16.msra.mxu0 0
      %385 = vmatprep.subr.bf16.mxu0 0
      %386 = vmatpush1.bf16.msra.mxu0 0
      %387 = vmatprep.subr.bf16.mxu0 0
      %388 = vmatpush1.bf16.msra.mxu0 0
      %389 = vmatprep.subr.bf16.mxu0 0
      %390 = vmatpush1.bf16.msra.mxu0 0
      %391 = vmatprep.subr.bf16.mxu0 0
      %392 = vmatpush1.bf16.msra.mxu0 0
      %393 = vmatprep.mubr.bf16.mxu0 0
      %394 = vmatmul.mubr.bf16.gmra.mrb[0].mxu0 %v359
      %v395 = vpop.f32.mrb[0].mxu0
      %v396 = vadd.f32 %v344, %v395
      %v397 = vpop.f32.mrb[0].mxu0
      %v398 = vpop.f32.mrb[0].mxu0
      %v399 = vpop.f32.mrb[0].mxu0
      %400 = vdwg.mxu0
      %v401 = vld [vmem:[%s7] sm:$0xff]
      %v402 = vpack.c.bf16 %v396, %v396
      %404 = vrot.lane.b32.xlu0 %v402, 96
      %v405 = vpop.permute.xlu0 %404
      %vm406 = vcmask 64512
      %v408 = vsel %vm406, %v402, 0
      %v411 = vsel %vm406, %v405, 0
      %413 = vmatprep.subr.bf16.mxu0 0
      %414 = vmatpush1.bf16.xpose.msra.mxu0 %v411
      %415 = vmatprep.subr.bf16.mxu0 0
      %416 = vmatpush1.bf16.xpose.msra.mxu0 0
      %417 = vmatprep.subr.bf16.mxu0 0
      %418 = vmatpush1.bf16.xpose.msra.mxu0 0
      %419 = vmatprep.subr.bf16.mxu0 0
      %420 = vmatpush1.bf16.xpose.msra.mxu0 0
      %421 = vmatprep.subr.bf16.mxu0 0
      %422 = vmatpush1.bf16.xpose.msra.mxu0 0
      %423 = vmatprep.subr.bf16.mxu0 0
      %424 = vmatpush1.bf16.xpose.msra.mxu0 0
      %425 = vmatprep.subr.bf16.mxu0 0
      %426 = vmatpush1.bf16.xpose.msra.mxu0 0
      %427 = vmatprep.subr.bf16.mxu0 0
      %428 = vmatpush1.bf16.xpose.msra.mxu0 0
      %429 = vmatprep.subr.bf16.mxu0 0
      %430 = vmatpush1.bf16.xpose.msra.mxu0 0
      %431 = vmatprep.subr.bf16.mxu0 0
      %432 = vmatpush1.bf16.xpose.msra.mxu0 0
      %433 = vmatprep.subr.bf16.mxu0 0
      %434 = vmatpush1.bf16.xpose.msra.mxu0 0
      %435 = vmatprep.subr.bf16.mxu0 0
      %436 = vmatpush1.bf16.xpose.msra.mxu0 0
      %437 = vmatprep.subr.bf16.mxu0 0
      %438 = vmatpush1.bf16.xpose.msra.mxu0 0
      %439 = vmatprep.subr.bf16.mxu0 0
      %440 = vmatpush1.bf16.xpose.msra.mxu0 0
      %441 = vmatprep.subr.bf16.mxu0 0
      %442 = vmatpush1.bf16.xpose.msra.mxu0 0
      %443 = vmatprep.subr.bf16.mxu0 0
      %444 = vmatpush1.bf16.xpose.msra.mxu0 0
      %445 = vmatprep.mubr.bf16.mxu0 0
      %446 = vmatmul.mubr.bf16.gmra.mrb[0].mxu0 %v408
      %v447 = vpop.f32.mrb[0].mxu0
      %v448 = vadd.f32 %v401, %v447
      %v449 = vpop.f32.mrb[0].mxu0
      %v450 = vpop.f32.mrb[0].mxu0
      %v451 = vpop.f32.mrb[0].mxu0
      %452 = vdwg.mxu0
      %v453 = vsel %vm406, %v448, -inf
      %454 = vmax.xlane.f32.xlu0 %v453
      %v455 = vpop.xlane.xlu0 %454
      %v456 = vsub.f32 %v448, %v455
      %v457 = vmul.f32 %v456, 1.442695
      %v458 = vpow.pop %v457
      %v459 = vsel %vm406, %v458, 0.0
      %460 = vadd.xlane.f32.xlu0 %v459
      %v461 = vpop.xlane.xlu0 %460
      %v462 = vrcp.pop %v461
      %v463 = vmul.f32 %v458, %v462
      %v464 = vpack.c.bf16 %v463, %v463
      %465 = vrot.lane.b32.xlu0 %v402, 64
      %v466 = vpop.permute.xlu0 %465
      %v468 = vsel %vm406, %v464, 0
      %vm470 = vcmask 1043456
      %v472 = vsel %vm470, %v466, 0
      %474 = vmatprep.subr.bf16.mxu0 0
      %475 = vmatpush1.bf16.msra.mxu0 %v472
      %476 = vmatprep.subr.bf16.mxu0 0
      %477 = vmatpush1.bf16.msra.mxu0 0
      %478 = vmatprep.subr.bf16.mxu0 0
      %479 = vmatpush1.bf16.msra.mxu0 0
      %480 = vmatprep.subr.bf16.mxu0 0
      %481 = vmatpush1.bf16.msra.mxu0 0
      %482 = vmatprep.subr.bf16.mxu0 0
      %483 = vmatpush1.bf16.msra.mxu0 0
      %484 = vmatprep.subr.bf16.mxu0 0
      %485 = vmatpush1.bf16.msra.mxu0 0
      %486 = vmatprep.subr.bf16.mxu0 0
      %487 = vmatpush1.bf16.msra.mxu0 0
      %488 = vmatprep.subr.bf16.mxu0 0
      %489 = vmatpush1.bf16.msra.mxu0 0
      %490 = vmatprep.subr.bf16.mxu0 0
      %491 = vmatpush1.bf16.msra.mxu0 0
      %492 = vmatprep.subr.bf16.mxu0 0
      %493 = vmatpush1.bf16.msra.mxu0 0
      %494 = vmatprep.subr.bf16.mxu0 0
      %495 = vmatpush1.bf16.msra.mxu0 0
      %496 = vmatprep.subr.bf16.mxu0 0
      %497 = vmatpush1.bf16.msra.mxu0 0
      %498 = vmatprep.subr.bf16.mxu0 0
      %499 = vmatpush1.bf16.msra.mxu0 0
      %500 = vmatprep.subr.bf16.mxu0 0
      %501 = vmatpush1.bf16.msra.mxu0 0
      %502 = vmatprep.subr.bf16.mxu0 0
      %503 = vmatpush1.bf16.msra.mxu0 0
      %504 = vmatprep.subr.bf16.mxu0 0
      %505 = vmatpush1.bf16.msra.mxu0 0
      %506 = vmatprep.mubr.bf16.mxu0 0
      %507 = vmatmul.mubr.bf16.gmra.mrb[0].mxu0 %v468
      %v508 = vpop.f32.mrb[0].mxu0
      %v509 = vadd.f32 0.0, %v508
      %v510 = vpop.f32.mrb[0].mxu0
      %v511 = vpop.f32.mrb[0].mxu0
      %v512 = vpop.f32.mrb[0].mxu0
      %513 = vdwg.mxu0
      %514 = vrot.lane.b32.xlu0 %v402, 120
      %v515 = vpop.permute.xlu0 %514
      %516 = vrot.lane.b32.xlu0 %v402, 88
      %v517 = vpop.permute.xlu0 %516
      %v519 = vsel %vm406, %v515, 0
      %v522 = vsel %vm406, %v517, 0
      %524 = vmatprep.subr.bf16.mxu0 0
      %525 = vmatpush1.bf16.xpose.msra.mxu0 %v522
      %526 = vmatprep.subr.bf16.mxu0 0
      %527 = vmatpush1.bf16.xpose.msra.mxu0 0
      %528 = vmatprep.subr.bf16.mxu0 0
      %529 = vmatpush1.bf16.xpose.msra.mxu0 0
      %530 = vmatprep.subr.bf16.mxu0 0
      %531 = vmatpush1.bf16.xpose.msra.mxu0 0
      %532 = vmatprep.subr.bf16.mxu0 0
      %533 = vmatpush1.bf16.xpose.msra.mxu0 0
      %534 = vmatprep.subr.bf16.mxu0 0
      %535 = vmatpush1.bf16.xpose.msra.mxu0 0
      %536 = vmatprep.subr.bf16.mxu0 0
      %537 = vmatpush1.bf16.xpose.msra.mxu0 0
      %538 = vmatprep.subr.bf16.mxu0 0
      %539 = vmatpush1.bf16.xpose.msra.mxu0 0
      %540 = vmatprep.subr.bf16.mxu0 0
      %541 = vmatpush1.bf16.xpose.msra.mxu0 0
      %542 = vmatprep.subr.bf16.mxu0 0
      %543 = vmatpush1.bf16.xpose.msra.mxu0 0
      %544 = vmatprep.subr.bf16.mxu0 0
      %545 = vmatpush1.bf16.xpose.msra.mxu0 0
      %546 = vmatprep.subr.bf16.mxu0 0
      %547 = vmatpush1.bf16.xpose.msra.mxu0 0
      %548 = vmatprep.subr.bf16.mxu0 0
      %549 = vmatpush1.bf16.xpose.msra.mxu0 0
      %550 = vmatprep.subr.bf16.mxu0 0
      %551 = vmatpush1.bf16.xpose.msra.mxu0 0
      %552 = vmatprep.subr.bf16.mxu0 0
      %553 = vmatpush1.bf16.xpose.msra.mxu0 0
      %554 = vmatprep.subr.bf16.mxu0 0
      %555 = vmatpush1.bf16.xpose.msra.mxu0 0
      %556 = vmatprep.mubr.bf16.mxu0 0
      %557 = vmatmul.mubr.bf16.gmra.mrb[0].mxu0 %v519
      %v558 = vpop.f32.mrb[0].mxu0
      %v559 = vadd.f32 %v401, %v558
      %v560 = vpop.f32.mrb[0].mxu0
      %v561 = vpop.f32.mrb[0].mxu0
      %v562 = vpop.f32.mrb[0].mxu0
      %563 = vdwg.mxu0
      %v564 = vsel %vm406, %v559, -inf
      %565 = vmax.xlane.f32.xlu0 %v564
      %v566 = vpop.xlane.xlu0 %565
      %v567 = vsub.f32 %v559, %v566
      %v568 = vmul.f32 %v567, 1.442695
      %v569 = vpow.pop %v568
      %v570 = vsel %vm406, %v569, 0.0
      %571 = vadd.xlane.f32.xlu0 %v570
      %v572 = vpop.xlane.xlu0 %571
      %v573 = vrcp.pop %v572
      %v574 = vmul.f32 %v569, %v573
      %v575 = vpack.c.bf16 %v574, %v574
      %576 = vrot.lane.b32.xlu0 %v402, 56
      %v577 = vpop.permute.xlu0 %576
      %v579 = vsel %vm406, %v575, 0
      %v582 = vsel %vm470, %v577, 0
      %584 = vmatprep.subr.bf16.mxu0 0
      %585 = vmatpush1.bf16.msra.mxu0 %v582
      %586 = vmatprep.subr.bf16.mxu0 0
      %587 = vmatpush1.bf16.msra.mxu0 0
      %588 = vmatprep.subr.bf16.mxu0 0
      %589 = vmatpush1.bf16.msra.mxu0 0
      %590 = vmatprep.subr.bf16.mxu0 0
      %591 = vmatpush1.bf16.msra.mxu0 0
      %592 = vmatprep.subr.bf16.mxu0 0
      %593 = vmatpush1.bf16.msra.mxu0 0
      %594 = vmatprep.subr.bf16.mxu0 0
      %595 = vmatpush1.bf16.msra.mxu0 0
      %596 = vmatprep.subr.bf16.mxu0 0
      %597 = vmatpush1.bf16.msra.mxu0 0
      %598 = vmatprep.subr.bf16.mxu0 0
      %599 = vmatpush1.bf16.msra.mxu0 0
      %600 = vmatprep.subr.bf16.mxu0 0
      %601 = vmatpush1.bf16.msra.mxu0 0
      %602 = vmatprep.subr.bf16.mxu0 0
      %603 = vmatpush1.bf16.msra.mxu0 0
      %604 = vmatprep.subr.bf16.mxu0 0
      %605 = vmatpush1.bf16.msra.mxu0 0
      %606 = vmatprep.subr.bf16.mxu0 0
      %607 = vmatpush1.bf16.msra.mxu0 0
      %608 = vmatprep.subr.bf16.mxu0 0
      %609 = vmatpush1.bf16.msra.mxu0 0
      %610 = vmatprep.subr.bf16.mxu0 0
      %611 = vmatpush1.bf16.msra.mxu0 0
      %612 = vmatprep.subr.bf16.mxu0 0
      %613 = vmatpush1.bf16.msra.mxu0 0
      %614 = vmatprep.subr.bf16.mxu0 0
      %615 = vmatpush1.bf16.msra.mxu0 0
      %616 = vmatprep.mubr.bf16.mxu0 0
      %617 = vmatmul.mubr.bf16.gmra.mrb[0].mxu0 %v579
      %v618 = vpop.f32.mrb[0].mxu0
      %v619 = vadd.f32 0.0, %v618
      %v620 = vpop.f32.mrb[0].mxu0
      %v621 = vpop.f32.mrb[0].mxu0
      %v622 = vpop.f32.mrb[0].mxu0
      %623 = vdwg.mxu0
      %624 = vrot.lane.b32.xlu0 %v402, 112
      %v625 = vpop.permute.xlu0 %624
      %626 = vrot.lane.b32.xlu0 %v402, 80
      %v627 = vpop.permute.xlu0 %626
      %v629 = vsel %vm406, %v625, 0
      %v632 = vsel %vm406, %v627, 0
      %634 = vmatprep.subr.bf16.mxu0 0
      %635 = vmatpush1.bf16.xpose.msra.mxu0 %v632
      %636 = vmatprep.subr.bf16.mxu0 0
      %637 = vmatpush1.bf16.xpose.msra.mxu0 0
      %638 = vmatprep.subr.bf16.mxu0 0
      %639 = vmatpush1.bf16.xpose.msra.mxu0 0
      %640 = vmatprep.subr.bf16.mxu0 0
      %641 = vmatpush1.bf16.xpose.msra.mxu0 0
      %642 = vmatprep.subr.bf16.mxu0 0
      %643 = vmatpush1.bf16.xpose.msra.mxu0 0
      %644 = vmatprep.subr.bf16.mxu0 0
      %645 = vmatpush1.bf16.xpose.msra.mxu0 0
      %646 = vmatprep.subr.bf16.mxu0 0
      %647 = vmatpush1.bf16.xpose.msra.mxu0 0
      %648 = vmatprep.subr.bf16.mxu0 0
      %649 = vmatpush1.bf16.xpose.msra.mxu0 0
      %650 = vmatprep.subr.bf16.mxu0 0
      %651 = vmatpush1.bf16.xpose.msra.mxu0 0
      %652 = vmatprep.subr.bf16.mxu0 0
      %653 = vmatpush1.bf16.xpose.msra.mxu0 0
      %654 = vmatprep.subr.bf16.mxu0 0
      %655 = vmatpush1.bf16.xpose.msra.mxu0 0
      %656 = vmatprep.subr.bf16.mxu0 0
      %657 = vmatpush1.bf16.xpose.msra.mxu0 0
      %658 = vmatprep.subr.bf16.mxu0 0
      %659 = vmatpush1.bf16.xpose.msra.mxu0 0
      %660 = vmatprep.subr.bf16.mxu0 0
      %661 = vmatpush1.bf16.xpose.msra.mxu0 0
      %662 = vmatprep.subr.bf16.mxu0 0
      %663 = vmatpush1.bf16.xpose.msra.mxu0 0
      %664 = vmatprep.subr.bf16.mxu0 0
      %665 = vmatpush1.bf16.xpose.msra.mxu0 0
      %666 = vmatprep.mubr.bf16.mxu0 0
      %667 = vmatmul.mubr.bf16.gmra.mrb[0].mxu0 %v629
      %v668 = vpop.f32.mrb[0].mxu0
      %v669 = vadd.f32 %v401, %v668
      %v670 = vpop.f32.mrb[0].mxu0
      %v671 = vpop.f32.mrb[0].mxu0
      %v672 = vpop.f32.mrb[0].mxu0
      %673 = vdwg.mxu0
      %v674 = vsel %vm406, %v669, -inf
      %675 = vmax.xlane.f32.xlu0 %v674
      %v676 = vpop.xlane.xlu0 %675
      %v677 = vsub.f32 %v669, %v676
      %v678 = vmul.f32 %v677, 1.442695
      %v679 = vpow.pop %v678
      %v680 = vsel %vm406, %v679, 0.0
      %681 = vadd.xlane.f32.xlu0 %v680
      %v682 = vpop.xlane.xlu0 %681
      %v683 = vrcp.pop %v682
      %v684 = vmul.f32 %v679, %v683
      %v685 = vpack.c.bf16 %v684, %v684
      %686 = vrot.lane.b32.xlu0 %v402, 48
      %v687 = vpop.permute.xlu0 %686
      %v689 = vsel %vm406, %v685, 0
      %v692 = vsel %vm470, %v687, 0
      %694 = vmatprep.subr.bf16.mxu0 0
      %695 = vmatpush1.bf16.msra.mxu0 %v692
      %696 = vmatprep.subr.bf16.mxu0 0
      %697 = vmatpush1.bf16.msra.mxu0 0
      %698 = vmatprep.subr.bf16.mxu0 0
      %699 = vmatpush1.bf16.msra.mxu0 0
      %700 = vmatprep.subr.bf16.mxu0 0
      %701 = vmatpush1.bf16.msra.mxu0 0
      %702 = vmatprep.subr.bf16.mxu0 0
      %703 = vmatpush1.bf16.msra.mxu0 0
      %704 = vmatprep.subr.bf16.mxu0 0
      %705 = vmatpush1.bf16.msra.mxu0 0
      %706 = vmatprep.subr.bf16.mxu0 0
      %707 = vmatpush1.bf16.msra.mxu0 0
      %708 = vmatprep.subr.bf16.mxu0 0
      %709 = vmatpush1.bf16.msra.mxu0 0
      %710 = vmatprep.subr.bf16.mxu0 0
      %711 = vmatpush1.bf16.msra.mxu0 0
      %712 = vmatprep.subr.bf16.mxu0 0
      %713 = vmatpush1.bf16.msra.mxu0 0
      %714 = vmatprep.subr.bf16.mxu0 0
      %715 = vmatpush1.bf16.msra.mxu0 0
      %716 = vmatprep.subr.bf16.mxu0 0
      %717 = vmatpush1.bf16.msra.mxu0 0
      %718 = vmatprep.subr.bf16.mxu0 0
      %719 = vmatpush1.bf16.msra.mxu0 0
      %720 = vmatprep.subr.bf16.mxu0 0
      %721 = vmatpush1.bf16.msra.mxu0 0
      %722 = vmatprep.subr.bf16.mxu0 0
      %723 = vmatpush1.bf16.msra.mxu0 0
      %724 = vmatprep.subr.bf16.mxu0 0
      %725 = vmatpush1.bf16.msra.mxu0 0
      %726 = vmatprep.mubr.bf16.mxu0 0
      %727 = vmatmul.mubr.bf16.gmra.mrb[0].mxu0 %v689
      %v728 = vpop.f32.mrb[0].mxu0
      %v729 = vadd.f32 0.0, %v728
      %v730 = vpop.f32.mrb[0].mxu0
      %v731 = vpop.f32.mrb[0].mxu0
      %v732 = vpop.f32.mrb[0].mxu0
      %733 = vdwg.mxu0
      %734 = vrot.lane.b32.xlu0 %v402, 104
      %v735 = vpop.permute.xlu0 %734
      %736 = vrot.lane.b32.xlu0 %v402, 72
      %v737 = vpop.permute.xlu0 %736
      %v739 = vsel %vm406, %v735, 0
      %v742 = vsel %vm406, %v737, 0
      %744 = vmatprep.subr.bf16.mxu0 0
      %745 = vmatpush1.bf16.xpose.msra.mxu0 %v742
      %746 = vmatprep.subr.bf16.mxu0 0
      %747 = vmatpush1.bf16.xpose.msra.mxu0 0
      %748 = vmatprep.subr.bf16.mxu0 0
      %749 = vmatpush1.bf16.xpose.msra.mxu0 0
      %750 = vmatprep.subr.bf16.mxu0 0
      %751 = vmatpush1.bf16.xpose.msra.mxu0 0
      %752 = vmatprep.subr.bf16.mxu0 0
      %753 = vmatpush1.bf16.xpose.msra.mxu0 0
      %754 = vmatprep.subr.bf16.mxu0 0
      %755 = vmatpush1.bf16.xpose.msra.mxu0 0
      %756 = vmatprep.subr.bf16.mxu0 0
      %757 = vmatpush1.bf16.xpose.msra.mxu0 0
      %758 = vmatprep.subr.bf16.mxu0 0
      %759 = vmatpush1.bf16.xpose.msra.mxu0 0
      %760 = vmatprep.subr.bf16.mxu0 0
      %761 = vmatpush1.bf16.xpose.msra.mxu0 0
      %762 = vmatprep.subr.bf16.mxu0 0
      %763 = vmatpush1.bf16.xpose.msra.mxu0 0
      %764 = vmatprep.subr.bf16.mxu0 0
      %765 = vmatpush1.bf16.xpose.msra.mxu0 0
      %766 = vmatprep.subr.bf16.mxu0 0
      %767 = vmatpush1.bf16.xpose.msra.mxu0 0
      %768 = vmatprep.subr.bf16.mxu0 0
      %769 = vmatpush1.bf16.xpose.msra.mxu0 0
      %770 = vmatprep.subr.bf16.mxu0 0
      %771 = vmatpush1.bf16.xpose.msra.mxu0 0
      %772 = vmatprep.subr.bf16.mxu0 0
      %773 = vmatpush1.bf16.xpose.msra.mxu0 0
      %774 = vmatprep.subr.bf16.mxu0 0
      %775 = vmatpush1.bf16.xpose.msra.mxu0 0
      %776 = vmatprep.mubr.bf16.mxu0 0
      %777 = vmatmul.mubr.bf16.gmra.mrb[0].mxu0 %v739
      %v778 = vpop.f32.mrb[0].mxu0
      %v779 = vadd.f32 %v401, %v778
      %v780 = vpop.f32.mrb[0].mxu0
      %v781 = vpop.f32.mrb[0].mxu0
      %v782 = vpop.f32.mrb[0].mxu0
      %783 = vdwg.mxu0
      %v784 = vsel %vm406, %v779, -inf
      %785 = vmax.xlane.f32.xlu0 %v784
      %v786 = vpop.xlane.xlu0 %785
      %v787 = vsub.f32 %v779, %v786
      %v788 = vmul.f32 %v787, 1.442695
      %v789 = vpow.pop %v788
      %v790 = vsel %vm406, %v789, 0.0
      %791 = vadd.xlane.f32.xlu0 %v790
      %v792 = vpop.xlane.xlu0 %791
      %v793 = vrcp.pop %v792
      %v794 = vmul.f32 %v789, %v793
      %v795 = vpack.c.bf16 %v794, %v794
      %796 = vrot.lane.b32.xlu0 %v402, 40
      %v797 = vpop.permute.xlu0 %796
      %v799 = vsel %vm406, %v795, 0
      %v802 = vsel %vm470, %v797, 0
      %804 = vmatprep.subr.bf16.mxu0 0
      %805 = vmatpush1.bf16.msra.mxu0 %v802
      %806 = vmatprep.subr.bf16.mxu0 0
      %807 = vmatpush1.bf16.msra.mxu0 0
      %808 = vmatprep.subr.bf16.mxu0 0
      %809 = vmatpush1.bf16.msra.mxu0 0
      %810 = vmatprep.subr.bf16.mxu0 0
      %811 = vmatpush1.bf16.msra.mxu0 0
      %812 = vmatprep.subr.bf16.mxu0 0
      %813 = vmatpush1.bf16.msra.mxu0 0
      %814 = vmatprep.subr.bf16.mxu0 0
      %815 = vmatpush1.bf16.msra.mxu0 0
      %816 = vmatprep.subr.bf16.mxu0 0
      %817 = vmatpush1.bf16.msra.mxu0 0
      %818 = vmatprep.subr.bf16.mxu0 0
      %819 = vmatpush1.bf16.msra.mxu0 0
      %820 = vmatprep.subr.bf16.mxu0 0
      %821 = vmatpush1.bf16.msra.mxu0 0
      %822 = vmatprep.subr.bf16.mxu0 0
      %823 = vmatpush1.bf16.msra.mxu0 0
      %824 = vmatprep.subr.bf16.mxu0 0
      %825 = vmatpush1.bf16.msra.mxu0 0
      %826 = vmatprep.subr.bf16.mxu0 0
      %827 = vmatpush1.bf16.msra.mxu0 0
      %828 = vmatprep.subr.bf16.mxu0 0
      %829 = vmatpush1.bf16.msra.mxu0 0
      %830 = vmatprep.subr.bf16.mxu0 0
      %831 = vmatpush1.bf16.msra.mxu0 0
      %832 = vmatprep.subr.bf16.mxu0 0
      %833 = vmatpush1.bf16.msra.mxu0 0
      %834 = vmatprep.subr.bf16.mxu0 0
      %835 = vmatpush1.bf16.msra.mxu0 0
      %836 = vmatprep.mubr.bf16.mxu0 0
      %837 = vmatmul.mubr.bf16.gmra.mrb[0].mxu0 %v799
      %v838 = vpop.f32.mrb[0].mxu0
      %v839 = vadd.f32 0.0, %v838
      %v840 = vpop.f32.mrb[0].mxu0
      %v841 = vpop.f32.mrb[0].mxu0
      %v842 = vpop.f32.mrb[0].mxu0
      %843 = vdwg.mxu0
      %845 = vrot.lane.b32.xlu0 %v619, 8
      %v846 = vpop.permute.xlu0 %845
      %849 = vrot.lane.b32.xlu0 %v729, 16
      %v850 = vpop.permute.xlu0 %849
      %853 = vrot.lane.b32.xlu0 %v839, 24
      %v854 = vpop.permute.xlu0 %853
      %v856 = vsel %vm406, %v509, %v846
      %vm857 = vcmask 130048
      %v858 = vsel %vm857, %v856, %v850
      %vm859 = vcmask 195584
      %v860 = vsel %vm859, %v858, %v854
      %v861 = vpack.c.bf16 %v860, %v860
      %v862 = vld [vmem:[%s5] sm:$0xf]
      %v863 = vld [vmem:[%s5 + $0x4] sm:$0xf]
      %v864 = vld [vmem:[%s5 + $0x8] sm:$0xf]
      %v865 = vld [vmem:[%s5 + $0xc] sm:$0xf]
      %v866 = vld [vmem:[%s6] sm:$0x1]
      %v868 = vlaneseq
      %v869 = vshrl.u32 %v868, 7
      %v870 = vsub.s32 0, %v869
      %v871 = vrot.slane %v866, %v870
      %v877 = vunpack.c.l.b16 %v862
      %v878 = vunpack.c.l.b16 %v863
      %v879 = vunpack.c.l.b16 %v864
      %v880 = vunpack.c.l.b16 %v865
      %v881 = vpack.c.b16 %v878, %v877
      %v882 = vpack.c.b16 %v880, %v879
      %v886 = vsel %vm305, %v861, 0
      %888 = vmatprep.subr.bf16.mxu0 0
      %889 = vmatpush1.bf16.msra.mxu0 %v881
      %890 = vmatprep.subr.bf16.mxu0 0
      %891 = vmatpush1.bf16.msra.mxu0 %v882
      %892 = vmatprep.subr.bf16.mxu0 0
      %893 = vmatpush1.bf16.msra.mxu0 0
      %894 = vmatprep.subr.bf16.mxu0 0
      %895 = vmatpush1.bf16.msra.mxu0 0
      %896 = vmatprep.subr.bf16.mxu0 0
      %897 = vmatpush1.bf16.msra.mxu0 0
      %898 = vmatprep.subr.bf16.mxu0 0
      %899 = vmatpush1.bf16.msra.mxu0 0
      %900 = vmatprep.subr.bf16.mxu0 0
      %901 = vmatpush1.bf16.msra.mxu0 0
      %902 = vmatprep.subr.bf16.mxu0 0
      %903 = vmatpush1.bf16.msra.mxu0 0
      %904 = vmatprep.subr.bf16.mxu0 0
      %905 = vmatpush1.bf16.msra.mxu0 0
      %906 = vmatprep.subr.bf16.mxu0 0
      %907 = vmatpush1.bf16.msra.mxu0 0
      %908 = vmatprep.subr.bf16.mxu0 0
      %909 = vmatpush1.bf16.msra.mxu0 0
      %910 = vmatprep.subr.bf16.mxu0 0
      %911 = vmatpush1.bf16.msra.mxu0 0
      %912 = vmatprep.subr.bf16.mxu0 0
      %913 = vmatpush1.bf16.msra.mxu0 0
      %914 = vmatprep.subr.bf16.mxu0 0
      %915 = vmatpush1.bf16.msra.mxu0 0
      %916 = vmatprep.subr.bf16.mxu0 0
      %917 = vmatpush1.bf16.msra.mxu0 0
      %918 = vmatprep.subr.bf16.mxu0 0
      %919 = vmatpush1.bf16.msra.mxu0 0
      %920 = vmatprep.mubr.bf16.mxu0 0
      %921 = vmatmul.mubr.bf16.gmra.mrb[0].mxu0 %v886
      %v922 = vpop.f32.mrb[0].mxu0
      %v923 = vadd.f32 %v871, %v922
      %v924 = vpop.f32.mrb[0].mxu0
      %v925 = vpop.f32.mrb[0].mxu0
      %v926 = vpop.f32.mrb[0].mxu0
      %927 = vdwg.mxu0
      %v928 = vadd.f32 %v302, %v923
      %929 = vst.msk [vmem:[%s300] sm:$0xff] %vm305, %v928
      %p930 = scmp.lt.s32.totalorder %s19, 1
      %s931 = scalar_select %p930, %s19, 1
      %s932 = smul.addr %s931, 8
      %s933 = scalar_lea.vmem %s8, %s932
      // Predicated region
      $region53: #{decoder_forward.8} parent=51 // pred_check
        %p934 = pneg %p210
      $region54: #{decoder_forward.8} parent=51 // pred_check_branch
        %936 = sbr.rel (%p934) target = $region56
      $region55: #{decoder_forward.8} parent=51 // pred_region
        _
      $region56: #{decoder_forward.8} parent=51 // pred_fallthru
        _
    $region52: #{decoder_forward.8} parent=5 // pred_fallthru
      _
    %p937 = scmp.le.s32.totalorder 2, %s14
    // Predicated region
    $region57: #{decoder_forward.8} parent=5 // pred_check
      %p938 = pneg %p937
    $region58: #{decoder_forward.8} parent=5 // pred_check_branch
      %940 = sbr.rel (%p938) target = $region60
    $region59: #{decoder_forward.8} parent=5 // pred_region
      %s941 = ssub.s32 %s14, 2
      // Predicated region
      $region61: #{decoder_forward.8} parent=59 // pred_check
        %p942 = pneg %p216
      $region62: #{decoder_forward.8} parent=59 // pred_check_branch
        %944 = sbr.rel (%p942) target = $region64
      $region63: #{decoder_forward.8} parent=59 // pred_region
        %p945 = scmp.lt.s32.totalorder %s20, 1
        %s946 = scalar_select %p945, %s20, 1
        %s947 = smul.addr %s946, 8
        %s948 = scalar_lea.vmem %s8, %s947
      $region64: #{decoder_forward.8} parent=59 // pred_fallthru
        _
    $region60: #{decoder_forward.8} parent=5 // pred_fallthru
      _
  $region6: #{decoder_forward.8} parent=0 // loop_footer
    %s18 = sadd.s32 1, %s14
  $region7: #{decoder_forward.8} parent=0 // loop_footer_branch
    %13 = sbr.rel target = $region3
  $region8: #{decoder_forward.8} parent=0 // loop_exit
    _

// kernel: decoder_forward.10
$region0: #{decoder_forward.10}
  #allocation0 [shape = 'u32[]', space=smem, size = 0x4, offset = 0x4, fixed_abs, tag = 'smem constant byte address 0x4 - core index']
  #allocation1 [shape = 'u32[144,128]{1,0:T(1,128)}', space=vmem, size = 0x12000, scoped, tag = 'internal scratch']
  %s0 = inlined_call_operand.vmem [shape: f32[16,32], index: 0, kind: input, shape index: {}]
  %s1 = inlined_call_operand.vmem [shape: f32[1,32], index: 1, kind: input, shape index: {}]
  %s2 = inlined_call_operand.vmem [shape: f32[1,32], index: 2, kind: input, shape index: {}]
  %s3 = inlined_call_operand.vmem [shape: bf16[32,64], index: 3, kind: input, shape index: {}]
  %s4 = inlined_call_operand.vmem [shape: f32[1,64], index: 4, kind: input, shape index: {}]
  %s5 = inlined_call_operand.vmem [shape: bf16[64,32], index: 5, kind: input, shape index: {}]
  %s6 = inlined_call_operand.vmem [shape: f32[1,32], index: 6, kind: input, shape index: {}]
  %s7 = inlined_call_operand.vmem [shape: f32[16,32], index: 7, kind: output, shape index: {}]
  %s8 = sld [smem:[#allocation0]]
  $region38: #{decoder_forward.10} parent=0
    _
  %s10 = ssub.s32 1, %s8
  %s11 = scalar_select 0, %s10, %s8
  // Predicated region
  $region2: #{decoder_forward.10} parent=0 // pred_check
    _
  $region3: #{decoder_forward.10} parent=0 // pred_check_branch
    %13 = sbr.rel (0) target = $region5
  $region4: #{decoder_forward.10} parent=0 // pred_region
    _
  $region5: #{decoder_forward.10} parent=0 // pred_fallthru
    _
  // Predicated region
  $region6: #{decoder_forward.10} parent=0 // pred_check
    _
  $region7: #{decoder_forward.10} parent=0 // pred_check_branch
    %15 = sbr.rel (0) target = $region9
  $region8: #{decoder_forward.10} parent=0 // pred_region
    _
  $region9: #{decoder_forward.10} parent=0 // pred_fallthru
    _
  // Predicated region
  $region10: #{decoder_forward.10} parent=0 // pred_check
    _
  $region11: #{decoder_forward.10} parent=0 // pred_check_branch
    %17 = sbr.rel (0) target = $region13
  $region12: #{decoder_forward.10} parent=0 // pred_region
    _
  $region13: #{decoder_forward.10} parent=0 // pred_fallthru
    _
  // Predicated region
  $region14: #{decoder_forward.10} parent=0 // pred_check
    _
  $region15: #{decoder_forward.10} parent=0 // pred_check_branch
    %19 = sbr.rel (0) target = $region17
  $region16: #{decoder_forward.10} parent=0 // pred_region
    _
  $region17: #{decoder_forward.10} parent=0 // pred_fallthru
    _
  // Predicated region
  $region18: #{decoder_forward.10} parent=0 // pred_check
    _
  $region19: #{decoder_forward.10} parent=0 // pred_check_branch
    %21 = sbr.rel (0) target = $region21
  $region20: #{decoder_forward.10} parent=0 // pred_region
    _
  $region21: #{decoder_forward.10} parent=0 // pred_fallthru
    _
  // Predicated region
  $region22: #{decoder_forward.10} parent=0 // pred_check
    _
  $region23: #{decoder_forward.10} parent=0 // pred_check_branch
    %23 = sbr.rel (0) target = $region25
  $region24: #{decoder_forward.10} parent=0 // pred_region
    _
  $region25: #{decoder_forward.10} parent=0 // pred_fallthru
    _
  // Predicated region
  $region26: #{decoder_forward.10} parent=0 // pred_check
    _
  $region27: #{decoder_forward.10} parent=0 // pred_check_branch
    %25 = sbr.rel (0) target = $region29
  $region28: #{decoder_forward.10} parent=0 // pred_region
    _
  $region29: #{decoder_forward.10} parent=0 // pred_fallthru
    _
  %v27 = vld [vmem:[%s0] sm:$0xff]
  %v28 = vld [vmem:[%s0 + $0x8] sm:$0xff]
  %v29 = vld [vmem:[%s1] sm:$0x1]
  %v30 = vld [vmem:[%s2] sm:$0x1]
  %vm31 = vcmask 261120
  %v32 = vsel %vm31, %v27, 0.0
  %33 = vadd.xlane.f32.xlu0 %v32
  %v34 = vpop.xlane.xlu0 %33
  %v35 = vsel %vm31, %v28, 0.0
  %36 = vadd.xlane.f32.xlu0 %v35
  %v37 = vpop.xlane.xlu0 %36
  %v38 = vrcp.pop 32.0
  %v39 = vmul.f32 %v34, %v38
  %v40 = vmul.f32 %v37, %v38
  %v41 = vsub.f32 %v27, %v39
  %v42 = vsub.f32 %v28, %v40
  %v43 = vmul.f32 %v41, %v41
  %v44 = vmul.f32 %v42, %v42
  %v45 = vsel %vm31, %v43, 0.0
  %46 = vadd.xlane.f32.xlu0 %v45
  %v47 = vpop.xlane.xlu0 %46
  %v48 = vsel %vm31, %v44, 0.0
  %49 = vadd.xlane.f32.xlu0 %v48
  %v50 = vpop.xlane.xlu0 %49
  %v51 = vmul.f32 %v47, %v38
  %v52 = vmul.f32 %v50, %v38
  %v53 = vadd.f32 %v51, 1e-05
  %v54 = vadd.f32 %v52, 1e-05
  %v55 = vrsqrt.pop %v53
  %v56 = vrsqrt.pop %v54
  %v57 = vmul.f32 %v41, %v55
  %v58 = vmul.f32 %v42, %v56
  %v60 = vlaneseq
  %v61 = vshrl.u32 %v60, 7
  %v62 = vsub.s32 0, %v61
  %v63 = vrot.slane %v29, %v62
  %v65 = vmul.f32 %v57, %v63
  %v66 = vmul.f32 %v58, %v63
  %v68 = vlaneseq
  %v69 = vshrl.u32 %v68, 7
  %v70 = vsub.s32 0, %v69
  %v71 = vrot.slane %v30, %v70
  %v73 = vadd.f32 %v65, %v71
  %v74 = vadd.f32 %v66, %v71
  %v75 = vpack.c.bf16 %v74, %v73
  %v76 = vld [vmem:[%s3] sm:$0xf]
  %v77 = vld [vmem:[%s3 + $0x4] sm:$0xf]
  %v78 = vld [vmem:[%s3 + $0x8] sm:$0xf]
  %v79 = vld [vmem:[%s3 + $0xc] sm:$0xf]
  %v80 = vld [vmem:[%s4] sm:$0x1]
  %v82 = vlaneseq
  %v83 = vshrl.u32 %v82, 7
  %v84 = vsub.s32 0, %v83
  %v85 = vrot.slane %v80, %v84
  %v91 = vunpack.c.l.b16 %v76
  %v92 = vunpack.c.l.b16 %v77
  %v93 = vunpack.c.l.b16 %v78
  %v94 = vunpack.c.l.b16 %v79
  %v95 = vpack.c.b16 %v92, %v91
  %v96 = vpack.c.b16 %v94, %v93
  %v100 = vsel %vm31, %v75, 0
  %102 = vmatprep.subr.bf16.mxu0 0
  %103 = vmatpush1.bf16.msra.mxu0 %v95
  %104 = vmatprep.subr.bf16.mxu0 0
  %105 = vmatpush1.bf16.msra.mxu0 %v96
  %106 = vmatprep.subr.bf16.mxu0 0
  %107 = vmatpush1.bf16.msra.mxu0 0
  %108 = vmatprep.subr.bf16.mxu0 0
  %109 = vmatpush1.bf16.msra.mxu0 0
  %110 = vmatprep.subr.bf16.mxu0 0
  %111 = vmatpush1.bf16.msra.mxu0 0
  %112 = vmatprep.subr.bf16.mxu0 0
  %113 = vmatpush1.bf16.msra.mxu0 0
  %114 = vmatprep.subr.bf16.mxu0 0
  %115 = vmatpush1.bf16.msra.mxu0 0
  %116 = vmatprep.subr.bf16.mxu0 0
  %117 = vmatpush1.bf16.msra.mxu0 0
  %118 = vmatprep.subr.bf16.mxu0 0
  %119 = vmatpush1.bf16.msra.mxu0 0
  %120 = vmatprep.subr.bf16.mxu0 0
  %121 = vmatpush1.bf16.msra.mxu0 0
  %122 = vmatprep.subr.bf16.mxu0 0
  %123 = vmatpush1.bf16.msra.mxu0 0
  %124 = vmatprep.subr.bf16.mxu0 0
  %125 = vmatpush1.bf16.msra.mxu0 0
  %126 = vmatprep.subr.bf16.mxu0 0
  %127 = vmatpush1.bf16.msra.mxu0 0
  %128 = vmatprep.subr.bf16.mxu0 0
  %129 = vmatpush1.bf16.msra.mxu0 0
  %130 = vmatprep.subr.bf16.mxu0 0
  %131 = vmatpush1.bf16.msra.mxu0 0
  %132 = vmatprep.subr.bf16.mxu0 0
  %133 = vmatpush1.bf16.msra.mxu0 0
  %134 = vmatprep.mubr.bf16.mxu0 0
  %135 = vmatmul.mubr.bf16.gmra.mrb[0].mxu0 %v100
  %v136 = vpop.f32.mrb[0].mxu0
  %v137 = vadd.f32 %v85, %v136
  %v138 = vpop.f32.mrb[0].mxu0
  %v139 = vpop.f32.mrb[0].mxu0
  %v140 = vadd.f32 %v85, %v139
  %v141 = vpop.f32.mrb[0].mxu0
  %142 = vdwg.mxu0
  %v143 = vmul.f32 %v137, 0.5
  %v144 = vmul.f32 %v140, 0.5
  %v145 = vmul.f32 %v137, 0.70710677
  %v146 = vmul.f32 %v140, 0.70710677
  %vm147 = vcmp.ge.f32.partialorder %v145, 0.0
  %vm148 = vcmp.ge.f32.partialorder %v146, 0.0
  %v149 = vsel %vm147, 1.0, -1.0
  %v150 = vsel %vm148, 1.0, -1.0
  %v151 = vand.u32 2147483647, %v145
  %v152 = vand.u32 2147483647, %v146
  %v153 = vmul.f32 %v151, 0.3275911
  %v154 = vmul.f32 %v152, 0.3275911
  %v155 = vadd.f32 %v153, 1.0
  %v156 = vadd.f32 %v154, 1.0
  %v157 = vrcp.pop %v155
  %v158 = vrcp.pop %v156
  %v159 = vmul.f32 %v157, 1.0614054
  %v160 = vmul.f32 %v158, 1.0614054
  %v161 = vadd.f32 %v159, -1.4531521
  %v162 = vadd.f32 %v160, -1.4531521
  %v163 = vmul.f32 %v161, %v157
  %v164 = vmul.f32 %v162, %v158
  %v165 = vadd.f32 %v163, 1.4214138
  %v166 = vadd.f32 %v164, 1.4214138
  %v167 = vmul.f32 %v165, %v157
  %v168 = vmul.f32 %v166, %v158
  %v169 = vadd.f32 %v167, -0.28449672
  %v170 = vadd.f32 %v168, -0.28449672
  %v171 = vmul.f32 %v169, %v157
  %v172 = vmul.f32 %v170, %v158
  %v173 = vadd.f32 %v171, 0.2548296
  %v174 = vadd.f32 %v172, 0.2548296
  %v175 = vmul.f32 %v173, %v157
  %v176 = vmul.f32 %v174, %v158
  %v177 = vsub.f32 0.0, %v151
  %v178 = vsub.f32 0.0, %v152
  %v179 = vmul.f32 %v177, %v151
  %v180 = vmul.f32 %v178, %v152
  %v181 = vmul.f32 %v179, 1.442695
  %v182 = vpow.pop %v181
  %v183 = vmul.f32 %v180, 1.442695
  %v184 = vpow.pop %v183
  %v185 = vmul.f32 %v175, %v182
  %v186 = vmul.f32 %v176, %v184
  %v187 = vsub.f32 1.0, %v185
  %v188 = vsub.f32 1.0, %v186
  %v189 = vmul.f32 %v149, %v187
  %v190 = vmul.f32 %v150, %v188
  %v191 = vadd.f32 %v189, 1.0
  %v192 = vadd.f32 %v190, 1.0
  %v193 = vmul.f32 %v143, %v191
  %v194 = vmul.f32 %v144, %v192
  %v195 = vpack.c.bf16 %v194, %v193
  %v196 = vld [vmem:[%s5] sm:$0xf]
  %v197 = vld [vmem:[%s5 + $0x4] sm:$0xf]
  %v198 = vld [vmem:[%s5 + $0x8] sm:$0xf]
  %v199 = vld [vmem:[%s5 + $0xc] sm:$0xf]
  %v200 = vld [vmem:[%s5 + $0x10] sm:$0xf]
  %v201 = vld [vmem:[%s5 + $0x14] sm:$0xf]
  %v202 = vld [vmem:[%s5 + $0x18] sm:$0xf]
  %v203 = vld [vmem:[%s5 + $0x1c] sm:$0xf]
  %v204 = vld [vmem:[%s6] sm:$0x1]
  %v206 = vlaneseq
  %v207 = vshrl.u32 %v206, 7
  %v208 = vsub.s32 0, %v207
  %v209 = vrot.slane %v204, %v208
  %v219 = vunpack.c.l.b16 %v196
  %v220 = vunpack.c.l.b16 %v197
  %v221 = vunpack.c.l.b16 %v198
  %v222 = vunpack.c.l.b16 %v199
  %v223 = vunpack.c.l.b16 %v200
  %v224 = vunpack.c.l.b16 %v201
  %v225 = vunpack.c.l.b16 %v202
  %v226 = vunpack.c.l.b16 %v203
  %v227 = vpack.c.b16 %v220, %v219
  %v228 = vpack.c.b16 %v222, %v221
  %v229 = vpack.c.b16 %v224, %v223
  %v230 = vpack.c.b16 %v226, %v225
  %vm235 = vcmask 523264
  %v237 = vsel %vm235, %v195, 0
  %239 = vmatprep.subr.bf16.mxu0 0
  %240 = vmatpush1.bf16.msra.mxu0 %v227
  %241 = vmatprep.subr.bf16.mxu0 0
  %242 = vmatpush1.bf16.msra.mxu0 %v228
  %243 = vmatprep.subr.bf16.mxu0 0
  %244 = vmatpush1.bf16.msra.mxu0 %v229
  %245 = vmatprep.subr.bf16.mxu0 0
  %246 = vmatpush1.bf16.msra.mxu0 %v230
  %247 = vmatprep.subr.bf16.mxu0 0
  %248 = vmatpush1.bf16.msra.mxu0 0
  %249 = vmatprep.subr.bf16.mxu0 0
  %250 = vmatpush1.bf16.msra.mxu0 0
  %251 = vmatprep.subr.bf16.mxu0 0
  %252 = vmatpush1.bf16.msra.mxu0 0
  %253 = vmatprep.subr.bf16.mxu0 0
  %254 = vmatpush1.bf16.msra.mxu0 0
  %255 = vmatprep.subr.bf16.mxu0 0
  %256 = vmatpush1.bf16.msra.mxu0 0
  %257 = vmatprep.subr.bf16.mxu0 0
  %258 = vmatpush1.bf16.msra.mxu0 0
  %259 = vmatprep.subr.bf16.mxu0 0
  %260 = vmatpush1.bf16.msra.mxu0 0
  %261 = vmatprep.subr.bf16.mxu0 0
  %262 = vmatpush1.bf16.msra.mxu0 0
  %263 = vmatprep.subr.bf16.mxu0 0
  %264 = vmatpush1.bf16.msra.mxu0 0
  %265 = vmatprep.subr.bf16.mxu0 0
  %266 = vmatpush1.bf16.msra.mxu0 0
  %267 = vmatprep.subr.bf16.mxu0 0
  %268 = vmatpush1.bf16.msra.mxu0 0
  %269 = vmatprep.subr.bf16.mxu0 0
  %270 = vmatpush1.bf16.msra.mxu0 0
  %271 = vmatprep.mubr.bf16.mxu0 0
  %272 = vmatmul.mubr.bf16.gmra.mrb[0].mxu0 %v237
  %v273 = vpop.f32.mrb[0].mxu0
  %v274 = vadd.f32 %v209, %v273
  %v275 = vpop.f32.mrb[0].mxu0
  %v276 = vpop.f32.mrb[0].mxu0
  %v277 = vadd.f32 %v209, %v276
  %v278 = vpop.f32.mrb[0].mxu0
  %279 = vdwg.mxu0
  %v280 = vadd.f32 %v27, %v274
  %v281 = vadd.f32 %v28, %v277
  %282 = vst.msk [vmem:[%s7] sm:$0xff] %vm31, %v280
  %283 = vst.msk [vmem:[%s7 + $0x8] sm:$0xff] %vm31, %v281
  // Predicated region
  $region30: #{decoder_forward.10} parent=0 // pred_check
    _
  $region31: #{decoder_forward.10} parent=0 // pred_check_branch
    %285 = sbr.rel (0) target = $region33
  $region32: #{decoder_forward.10} parent=0 // pred_region
    _
  $region33: #{decoder_forward.10} parent=0 // pred_fallthru
    _
  // Predicated region
  $region34: #{decoder_forward.10} parent=0 // pred_check
    _
  $region35: #{decoder_forward.10} parent=0 // pred_check_branch
    %287 = sbr.rel (0) target = $region37
  $region36: #{decoder_forward.10} parent=0 // pred_region
    _
  $region37: #{decoder_forward.10} parent=0 // pred_fallthru
    _

// kernel: decoder_forward.13
$region0: #{decoder_forward.13}
  #allocation0 [shape = 'u32[]', space=smem, size = 0x4, offset = 0x4, fixed_abs, tag = 'smem constant byte address 0x4 - core index']
  #allocation1 [shape = 'u32[144,128]{1,0:T(1,128)}', space=vmem, size = 0x12000, scoped, tag = 'internal scratch']
  %s0 = inlined_call_operand.vmem [shape: f32[16,32], index: 0, kind: input, shape index: {}]
  %s1 = inlined_call_operand.vmem [shape: f32[1,32], index: 1, kind: input, shape index: {}]
  %s2 = inlined_call_operand.vmem [shape: f32[1,32], index: 2, kind: input, shape index: {}]
  %s3 = inlined_call_operand.vmem [shape: bf16[32,64], index: 3, kind: input, shape index: {}]
  %s4 = inlined_call_operand.vmem [shape: f32[1,64], index: 4, kind: input, shape index: {}]
  %s5 = inlined_call_operand.vmem [shape: bf16[64,32], index: 5, kind: input, shape index: {}]
  %s6 = inlined_call_operand.vmem [shape: f32[1,32], index: 6, kind: input, shape index: {}]
  %s7 = inlined_call_operand.hbm [shape: f32[16,32], index: 7, kind: output, shape index: {}]
  %s8 = sld [smem:[#allocation0]]
  $region38: #{decoder_forward.13} parent=0
    _
  %s10 = ssub.s32 1, %s8
  %s11 = scalar_select 0, %s10, %s8
  $region1: #{decoder_forward.13} parent=0
    #allocation2 [shape = 'u8[8192]{0}', space=vmem, size = 0x2000, scoped, tag = 'output window, operand 0, single buffered']
    #allocation3 [shape = 's32[1]{0}', space=sflag, size = 0x4, scoped, tag = 'scoped memory for decoder_forward.13']
    %12 = vsyncpa [#allocation3], 0
    // Predicated region
    $region2: #{decoder_forward.13} parent=1 // pred_check
      _
    $region3: #{decoder_forward.13} parent=1 // pred_check_branch
      %14 = sbr.rel (0) target = $region5
    $region4: #{decoder_forward.13} parent=1 // pred_region
      _
    $region5: #{decoder_forward.13} parent=1 // pred_fallthru
      _
    // Predicated region
    $region6: #{decoder_forward.13} parent=1 // pred_check
      _
    $region7: #{decoder_forward.13} parent=1 // pred_check_branch
      %16 = sbr.rel (0) target = $region9
    $region8: #{decoder_forward.13} parent=1 // pred_region
      _
    $region9: #{decoder_forward.13} parent=1 // pred_fallthru
      _
    // Predicated region
    $region10: #{decoder_forward.13} parent=1 // pred_check
      _
    $region11: #{decoder_forward.13} parent=1 // pred_check_branch
      %18 = sbr.rel (0) target = $region13
    $region12: #{decoder_forward.13} parent=1 // pred_region
      _
    $region13: #{decoder_forward.13} parent=1 // pred_fallthru
      _
    // Predicated region
    $region14: #{decoder_forward.13} parent=1 // pred_check
      _
    $region15: #{decoder_forward.13} parent=1 // pred_check_branch
      %20 = sbr.rel (0) target = $region17
    $region16: #{decoder_forward.13} parent=1 // pred_region
      _
    $region17: #{decoder_forward.13} parent=1 // pred_fallthru
      _
    // Predicated region
    $region18: #{decoder_forward.13} parent=1 // pred_check
      _
    $region19: #{decoder_forward.13} parent=1 // pred_check_branch
      %22 = sbr.rel (0) target = $region21
    $region20: #{decoder_forward.13} parent=1 // pred_region
      _
    $region21: #{decoder_forward.13} parent=1 // pred_fallthru
      _
    // Predicated region
    $region22: #{decoder_forward.13} parent=1 // pred_check
      _
    $region23: #{decoder_forward.13} parent=1 // pred_check_branch
      %24 = sbr.rel (0) target = $region25
    $region24: #{decoder_forward.13} parent=1 // pred_region
      _
    $region25: #{decoder_forward.13} parent=1 // pred_fallthru
      _
    // Predicated region
    $region26: #{decoder_forward.13} parent=1 // pred_check
      _
    $region27: #{decoder_forward.13} parent=1 // pred_check_branch
      %26 = sbr.rel (0) target = $region29
    $region28: #{decoder_forward.13} parent=1 // pred_region
      _
    $region29: #{decoder_forward.13} parent=1 // pred_fallthru
      _
    %v28 = vld [vmem:[%s0] sm:$0xff]
    %v29 = vld [vmem:[%s0 + $0x8] sm:$0xff]
    %v30 = vld [vmem:[%s1] sm:$0x1]
    %v31 = vld [vmem:[%s2] sm:$0x1]
    %vm32 = vcmask 261120
    %v33 = vsel %vm32, %v28, 0.0
    %34 = vadd.xlane.f32.xlu0 %v33
    %v35 = vpop.xlane.xlu0 %34
    %v36 = vsel %vm32, %v29, 0.0
    %37 = vadd.xlane.f32.xlu0 %v36
    %v38 = vpop.xlane.xlu0 %37
    %v39 = vrcp.pop 32.0
    %v40 = vmul.f32 %v35, %v39
    %v41 = vmul.f32 %v38, %v39
    %v42 = vsub.f32 %v28, %v40
    %v43 = vsub.f32 %v29, %v41
    %v44 = vmul.f32 %v42, %v42
    %v45 = vmul.f32 %v43, %v43
    %v46 = vsel %vm32, %v44, 0.0
    %47 = vadd.xlane.f32.xlu0 %v46
    %v48 = vpop.xlane.xlu0 %47
    %v49 = vsel %vm32, %v45, 0.0
    %50 = vadd.xlane.f32.xlu0 %v49
    %v51 = vpop.xlane.xlu0 %50
    %v52 = vmul.f32 %v48, %v39
    %v53 = vmul.f32 %v51, %v39
    %v54 = vadd.f32 %v52, 1e-05
    %v55 = vadd.f32 %v53, 1e-05
    %v56 = vrsqrt.pop %v54
    %v57 = vrsqrt.pop %v55
    %v58 = vmul.f32 %v42, %v56
    %v59 = vmul.f32 %v43, %v57
    %v61 = vlaneseq
    %v62 = vshrl.u32 %v61, 7
    %v63 = vsub.s32 0, %v62
    %v64 = vrot.slane %v30, %v63
    %v66 = vmul.f32 %v58, %v64
    %v67 = vmul.f32 %v59, %v64
    %v69 = vlaneseq
    %v70 = vshrl.u32 %v69, 7
    %v71 = vsub.s32 0, %v70
    %v72 = vrot.slane %v31, %v71
    %v74 = vadd.f32 %v66, %v72
    %v75 = vadd.f32 %v67, %v72
    %v76 = vpack.c.bf16 %v75, %v74
    %v77 = vld [vmem:[%s3] sm:$0xf]
    %v78 = vld [vmem:[%s3 + $0x4] sm:$0xf]
    %v79 = vld [vmem:[%s3 + $0x8] sm:$0xf]
    %v80 = vld [vmem:[%s3 + $0xc] sm:$0xf]
    %v81 = vld [vmem:[%s4] sm:$0x1]
    %v83 = vlaneseq
    %v84 = vshrl.u32 %v83, 7
    %v85 = vsub.s32 0, %v84
    %v86 = vrot.slane %v81, %v85
    %v92 = vunpack.c.l.b16 %v77
    %v93 = vunpack.c.l.b16 %v78
    %v94 = vunpack.c.l.b16 %v79
    %v95 = vunpack.c.l.b16 %v80
    %v96 = vpack.c.b16 %v93, %v92
    %v97 = vpack.c.b16 %v95, %v94
    %v101 = vsel %vm32, %v76, 0
    %103 = vmatprep.subr.bf16.mxu0 0
    %104 = vmatpush1.bf16.msra.mxu0 %v96
    %105 = vmatprep.subr.bf16.mxu0 0
    %106 = vmatpush1.bf16.msra.mxu0 %v97
    %107 = vmatprep.subr.bf16.mxu0 0
    %108 = vmatpush1.bf16.msra.mxu0 0
    %109 = vmatprep.subr.bf16.mxu0 0
    %110 = vmatpush1.bf16.msra.mxu0 0
    %111 = vmatprep.subr.bf16.mxu0 0
    %112 = vmatpush1.bf16.msra.mxu0 0
    %113 = vmatprep.subr.bf16.mxu0 0
    %114 = vmatpush1.bf16.msra.mxu0 0
    %115 = vmatprep.subr.bf16.mxu0 0
    %116 = vmatpush1.bf16.msra.mxu0 0
    %117 = vmatprep.subr.bf16.mxu0 0
    %118 = vmatpush1.bf16.msra.mxu0 0
    %119 = vmatprep.subr.bf16.mxu0 0
    %120 = vmatpush1.bf16.msra.mxu0 0
    %121 = vmatprep.subr.bf16.mxu0 0
    %122 = vmatpush1.bf16.msra.mxu0 0
    %123 = vmatprep.subr.bf16.mxu0 0
    %124 = vmatpush1.bf16.msra.mxu0 0
    %125 = vmatprep.subr.bf16.mxu0 0
    %126 = vmatpush1.bf16.msra.mxu0 0
    %127 = vmatprep.subr.bf16.mxu0 0
    %128 = vmatpush1.bf16.msra.mxu0 0
    %129 = vmatprep.subr.bf16.mxu0 0
    %130 = vmatpush1.bf16.msra.mxu0 0
    %131 = vmatprep.subr.bf16.mxu0 0
    %132 = vmatpush1.bf16.msra.mxu0 0
    %133 = vmatprep.subr.bf16.mxu0 0
    %134 = vmatpush1.bf16.msra.mxu0 0
    %135 = vmatprep.mubr.bf16.mxu0 0
    %136 = vmatmul.mubr.bf16.gmra.mrb[0].mxu0 %v101
    %v137 = vpop.f32.mrb[0].mxu0
    %v138 = vadd.f32 %v86, %v137
    %v139 = vpop.f32.mrb[0].mxu0
    %v140 = vpop.f32.mrb[0].mxu0
    %v141 = vadd.f32 %v86, %v140
    %v142 = vpop.f32.mrb[0].mxu0
    %143 = vdwg.mxu0
    %v144 = vmul.f32 %v138, 0.5
    %v145 = vmul.f32 %v141, 0.5
    %v146 = vmul.f32 %v138, 0.70710677
    %v147 = vmul.f32 %v141, 0.70710677
    %vm148 = vcmp.ge.f32.partialorder %v146, 0.0
    %vm149 = vcmp.ge.f32.partialorder %v147, 0.0
    %v150 = vsel %vm148, 1.0, -1.0
    %v151 = vsel %vm149, 1.0, -1.0
    %v152 = vand.u32 2147483647, %v146
    %v153 = vand.u32 2147483647, %v147
    %v154 = vmul.f32 %v152, 0.3275911
    %v155 = vmul.f32 %v153, 0.3275911
    %v156 = vadd.f32 %v154, 1.0
    %v157 = vadd.f32 %v155, 1.0
    %v158 = vrcp.pop %v156
    %v159 = vrcp.pop %v157
    %v160 = vmul.f32 %v158, 1.0614054
    %v161 = vmul.f32 %v159, 1.0614054
    %v162 = vadd.f32 %v160, -1.4531521
    %v163 = vadd.f32 %v161, -1.4531521
    %v164 = vmul.f32 %v162, %v158
    %v165 = vmul.f32 %v163, %v159
    %v166 = vadd.f32 %v164, 1.4214138
    %v167 = vadd.f32 %v165, 1.4214138
    %v168 = vmul.f32 %v166, %v158
    %v169 = vmul.f32 %v167, %v159
    %v170 = vadd.f32 %v168, -0.28449672
    %v171 = vadd.f32 %v169, -0.28449672
    %v172 = vmul.f32 %v170, %v158
    %v173 = vmul.f32 %v171, %v159
    %v174 = vadd.f32 %v172, 0.2548296
    %v175 = vadd.f32 %v173, 0.2548296
    %v176 = vmul.f32 %v174, %v158
    %v177 = vmul.f32 %v175, %v159
    %v178 = vsub.f32 0.0, %v152
    %v179 = vsub.f32 0.0, %v153
    %v180 = vmul.f32 %v178, %v152
    %v181 = vmul.f32 %v179, %v153
    %v182 = vmul.f32 %v180, 1.442695
    %v183 = vpow.pop %v182
    %v184 = vmul.f32 %v181, 1.442695
    %v185 = vpow.pop %v184
    %v186 = vmul.f32 %v176, %v183
    %v187 = vmul.f32 %v177, %v185
    %v188 = vsub.f32 1.0, %v186
    %v189 = vsub.f32 1.0, %v187
    %v190 = vmul.f32 %v150, %v188
    %v191 = vmul.f32 %v151, %v189
    %v192 = vadd.f32 %v190, 1.0
    %v193 = vadd.f32 %v191, 1.0
    %v194 = vmul.f32 %v144, %v192
    %v195 = vmul.f32 %v145, %v193
    %v196 = vpack.c.bf16 %v195, %v194
    %v197 = vld [vmem:[%s5] sm:$0xf]
    %v198 = vld [vmem:[%s5 + $0x4] sm:$0xf]
    %v199 = vld [vmem:[%s5 + $0x8] sm:$0xf]
    %v200 = vld [vmem:[%s5 + $0xc] sm:$0xf]
    %v201 = vld [vmem:[%s5 + $0x10] sm:$0xf]
    %v202 = vld [vmem:[%s5 + $0x14] sm:$0xf]
    %v203 = vld [vmem:[%s5 + $0x18] sm:$0xf]
    %v204 = vld [vmem:[%s5 + $0x1c] sm:$0xf]
    %v205 = vld [vmem:[%s6] sm:$0x1]
    %v207 = vlaneseq
    %v208 = vshrl.u32 %v207, 7
    %v209 = vsub.s32 0, %v208
    %v210 = vrot.slane %v205, %v209
    %v220 = vunpack.c.l.b16 %v197
    %v221 = vunpack.c.l.b16 %v198
    %v222 = vunpack.c.l.b16 %v199
    %v223 = vunpack.c.l.b16 %v200
    %v224 = vunpack.c.l.b16 %v201
    %v225 = vunpack.c.l.b16 %v202
    %v226 = vunpack.c.l.b16 %v203
    %v227 = vunpack.c.l.b16 %v204
    %v228 = vpack.c.b16 %v221, %v220
    %v229 = vpack.c.b16 %v223, %v222
    %v230 = vpack.c.b16 %v225, %v224
    %v231 = vpack.c.b16 %v227, %v226
    %vm236 = vcmask 523264
    %v238 = vsel %vm236, %v196, 0
    %240 = vmatprep.subr.bf16.mxu0 0
    %241 = vmatpush1.bf16.msra.mxu0 %v228
    %242 = vmatprep.subr.bf16.mxu0 0
    %243 = vmatpush1.bf16.msra.mxu0 %v229
    %244 = vmatprep.subr.bf16.mxu0 0
    %245 = vmatpush1.bf16.msra.mxu0 %v230
    %246 = vmatprep.subr.bf16.mxu0 0
    %247 = vmatpush1.bf16.msra.mxu0 %v231
    %248 = vmatprep.subr.bf16.mxu0 0
    %249 = vmatpush1.bf16.msra.mxu0 0
    %250 = vmatprep.subr.bf16.mxu0 0
    %251 = vmatpush1.bf16.msra.mxu0 0
    %252 = vmatprep.subr.bf16.mxu0 0
    %253 = vmatpush1.bf16.msra.mxu0 0
    %254 = vmatprep.subr.bf16.mxu0 0
    %255 = vmatpush1.bf16.msra.mxu0 0
    %256 = vmatprep.subr.bf16.mxu0 0
    %257 = vmatpush1.bf16.msra.mxu0 0
    %258 = vmatprep.subr.bf16.mxu0 0
    %259 = vmatpush1.bf16.msra.mxu0 0
    %260 = vmatprep.subr.bf16.mxu0 0
    %261 = vmatpush1.bf16.msra.mxu0 0
    %262 = vmatprep.subr.bf16.mxu0 0
    %263 = vmatpush1.bf16.msra.mxu0 0
    %264 = vmatprep.subr.bf16.mxu0 0
    %265 = vmatpush1.bf16.msra.mxu0 0
    %266 = vmatprep.subr.bf16.mxu0 0
    %267 = vmatpush1.bf16.msra.mxu0 0
    %268 = vmatprep.subr.bf16.mxu0 0
    %269 = vmatpush1.bf16.msra.mxu0 0
    %270 = vmatprep.subr.bf16.mxu0 0
    %271 = vmatpush1.bf16.msra.mxu0 0
    %272 = vmatprep.mubr.bf16.mxu0 0
    %273 = vmatmul.mubr.bf16.gmra.mrb[0].mxu0 %v238
    %v274 = vpop.f32.mrb[0].mxu0
    %v275 = vadd.f32 %v210, %v274
    %v276 = vpop.f32.mrb[0].mxu0
    %v277 = vpop.f32.mrb[0].mxu0
    %v278 = vadd.f32 %v210, %v277
    %v279 = vpop.f32.mrb[0].mxu0
    %280 = vdwg.mxu0
    %v281 = vadd.f32 %v28, %v275
    %v282 = vadd.f32 %v29, %v278
    %283 = vst.msk [vmem:[#allocation2] sm:$0xff] %vm32, %v281
    %284 = vst.msk [vmem:[#allocation2 + $0x8] sm:$0xff] %vm32, %v282
    // Predicated region
    $region30: #{decoder_forward.13} parent=1 // pred_check
      _
    $region31: #{decoder_forward.13} parent=1 // pred_check_branch
      %286 = sbr.rel (0) target = $region33
    $region32: #{decoder_forward.13} parent=1 // pred_region
      %s288 = ssub.s32 256, 256
      %289 = vsyncadd [#allocation3], %s288
      %s290 = sshll.u32 [#allocation2], 4
      %s291 = int_to_ptr.vmem [resolvable:$true] %s290
      %296 = dma.vmem_to_hbm [thread:$0]  %s291, 256, %s7, [#allocation3], 128, 128, 8
    $region33: #{decoder_forward.13} parent=1 // pred_fallthru
      _
    // Predicated region
    $region34: #{decoder_forward.13} parent=1 // pred_check
      _
    $region35: #{decoder_forward.13} parent=1 // pred_check_branch
      %298 = sbr.rel (0) target = $region37
    $region36: #{decoder_forward.13} parent=1 // pred_region
      %299 = dma.done [#allocation3], 256
    $region37: #{decoder_forward.13} parent=1 // pred_fallthru
      _
    %300 = vsyncpa [#allocation3], 1

</llo_original>
